<compile_context>
chip_gen: v5e
topology: v5e:2x2
jax: 0.10.0
libtpu: 0.0.40
codegen_flags: <defaults>
</compile_context>

<pallas_src>
import functools

import numpy as np
import jax
import jax.numpy as jnp
from jax.experimental import pallas as pl
from jax.experimental.pallas import tpu as pltpu  # noqa: F401  (TPU backend)


# --------------------------------------------------------------------------- #
# The single fused Pallas kernel                                               #
# --------------------------------------------------------------------------- #
def _ppo_fused_kernel(cols_v_ref, cols_a_ref,
                      wv1_ref, bv1_ref, wv2_ref, bv2_ref,
                      wa1_ref, ba1_ref, wa2_ref, ba2_ref,
                      s2v_ref, s2a_ref, tv_ref, ta_ref,
                      w1_ref, b1_ref, w2_ref, b2_ref,
                      out_ref,
                      *, n_off_v, n_off_a, n_blk_v, n_blk_a):
    f32, bf16 = jnp.float32, jnp.bfloat16

    # ---- vision conv1: relu(cols @ W + b); stays channels-last in VMEM ------
    v1 = jnp.dot(cols_v_ref[...], wv1_ref[...], preferred_element_type=f32)
    v1 = jnp.maximum(v1 + bv1_ref[...], 0.0).astype(bf16)        # (N*H1*W1, C1)

    # ---- vision conv2: im2col done in-kernel via gather-as-matmul -----------
    z2v = jnp.zeros((s2v_ref.shape[1], wv2_ref.shape[2]), f32)
    for off in range(n_off_v):
        g = jnp.dot(s2v_ref[off], v1, preferred_element_type=f32).astype(bf16)
        z2v = z2v + jnp.dot(g, wv2_ref[off], preferred_element_type=f32)
    y2v = jnp.maximum(z2v + bv2_ref[...], 0.0).astype(bf16)      # (P_v*N, C2)

    # ---- audio conv1 ---------------------------------------------------------
    a1 = jnp.dot(cols_a_ref[...], wa1_ref[...], preferred_element_type=f32)
    a1 = jnp.maximum(a1 + ba1_ref[...], 0.0).astype(bf16)        # (N*L1, C1)

    # ---- audio conv2 ---------------------------------------------------------
    z2a = jnp.zeros((s2a_ref.shape[1], wa2_ref.shape[2]), f32)
    for off in range(n_off_a):
        g = jnp.dot(s2a_ref[off], a1, preferred_element_type=f32).astype(bf16)
        z2a = z2a + jnp.dot(g, wa2_ref[off], preferred_element_type=f32)
    y2a = jnp.maximum(z2a + ba2_ref[...], 0.0).astype(bf16)      # (P_a*N, C2)

    # ---- fc1: PyTorch flatten order is folded (on host) into the permuted
    #      fc1 weight blocks; per-spatial-position rows are extracted with tiny
    #      selection matmuls and accumulated in f32 ----------------------------
    h = jnp.zeros((tv_ref.shape[1], w1_ref.shape[2]), f32)       # (8, 256)
    for p in range(n_blk_v):
        blk = jnp.dot(tv_ref[p], y2v, preferred_element_type=f32).astype(bf16)
        h = h + jnp.dot(blk, w1_ref[p], preferred_element_type=f32)
    for q in range(n_blk_a):
        blk = jnp.dot(ta_ref[q], y2a, preferred_element_type=f32).astype(bf16)
        h = h + jnp.dot(blk, w1_ref[n_blk_v + q], preferred_element_type=f32)
    h = jnp.maximum(h + b1_ref[...], 0.0).astype(bf16)           # (8, 256)

    # ---- fc2, stored as one lane-dense (8, 128) slab --------------------------
    logits = jnp.dot(h, w2_ref[...], preferred_element_type=f32) + b2_ref[...]
    out_ref[...] = logits


# --------------------------------------------------------------------------- #
# Host-side glue: layer-1 im2col (raw inputs only) and constant builders       #
# --------------------------------------------------------------------------- #
def _im2col_2d(x_nhwc, kh, kw, stride, pad):
    N, H, W, C = x_nhwc.shape
    xp = jnp.pad(x_nhwc, ((0, 0), (pad, pad), (pad, pad), (0, 0)))
    Ho = (H + 2 * pad - kh) // stride + 1
    Wo = (W + 2 * pad - kw) // stride + 1
    patches = []
    for i in range(kh):
        for j in range(kw):
            patches.append(xp[:, i:i + (Ho - 1) * stride + 1:stride,
                               j:j + (Wo - 1) * stride + 1:stride, :])
    cols = jnp.stack(patches, axis=-2)               # (N, Ho, Wo, kh*kw, C)
    return cols.reshape(N * Ho * Wo, kh * kw * C), Ho, Wo


def _im2col_1d(x_nlc, k, stride, pad):
    N, L, C = x_nlc.shape
    xp = jnp.pad(x_nlc, ((0, 0), (pad, pad), (0, 0)))
    Lo = (L + 2 * pad - k) // stride + 1
    patches = []
    for i in range(k):
        patches.append(xp[:, i:i + (Lo - 1) * stride + 1:stride, :])
    cols = jnp.stack(patches, axis=-2)               # (N, Lo, k, C)
    return cols.reshape(N * Lo, k * C), Lo


def _conv2d_gather_mats(n, H, W, k, stride, pad):
    """0/1 matrices: S[off] @ act_rows gathers the conv2 im2col patches (zero rows = padding)."""
    Ho = (H + 2 * pad - k) // stride + 1
    Wo = (W + 2 * pad - k) // stride + 1
    S = np.zeros((k * k, Ho * Wo * n, n * H * W), np.float32)
    for i in range(k):
        for j in range(k):
            off = i * k + j
            for ho in range(Ho):
                for wo in range(Wo):
                    h = stride * ho + i - pad
                    w = stride * wo + j - pad
                    if 0 <= h < H and 0 <= w < W:
                        for b in range(n):
                            S[off, (ho * Wo + wo) * n + b, b * H * W + h * W + w] = 1.0
    return S, Ho, Wo


def _conv1d_gather_mats(n, L, k, stride, pad):
    Lo = (L + 2 * pad - k) // stride + 1
    S = np.zeros((k, Lo * n, n * L), np.float32)
    for i in range(k):
        for lo in range(Lo):
            l1 = stride * lo + i - pad
            if 0 <= l1 < L:
                for b in range(n):
                    S[i, lo * n + b, b * L + l1] = 1.0
    return S, Lo


def _block_gather_mats(n_batch, n_blocks, n_rows):
    """T[p] extracts the n_batch rows of spatial block p, padded to n_rows rows."""
    T = np.zeros((n_blocks, n_rows, n_blocks * n_batch), np.float32)
    for p in range(n_blocks):
        for b in range(n_batch):
            T[p, b, p * n_batch + b] = 1.0
    return T


# --------------------------------------------------------------------------- #
# Parameters (deterministic, synthetic) - PyTorch-layout master copy           #
# --------------------------------------------------------------------------- #
def init_params(key, obs_shape_v, obs_shape_a, output_dim):
    cv, hv, wv = obs_shape_v
    ca, la = obs_shape_a
    ks = jax.random.split(key, 12)

    def w(k, shape, fan_in):
        return jax.random.normal(k, shape, jnp.float32) / jnp.sqrt(float(fan_in))

    p = {}
    # vision conv: Conv2d(cv,8,3,s2,p1)+ReLU -> Conv2d(8,16,3,s2,p1)+ReLU
    p["vc1_w"] = w(ks[0], (8, cv, 3, 3), cv * 9)
    p["vc1_b"] = w(ks[1], (8,), 8)
    p["vc2_w"] = w(ks[2], (16, 8, 3, 3), 8 * 9)
    p["vc2_b"] = w(ks[3], (16,), 16)
    # audio conv: Conv1d(ca,8,5,s2,p2)+ReLU -> Conv1d(8,16,5,s2,p2)+ReLU
    p["ac1_w"] = w(ks[4], (8, ca, 5), ca * 5)
    p["ac1_b"] = w(ks[5], (8,), 8)
    p["ac2_w"] = w(ks[6], (16, 8, 5), 8 * 5)
    p["ac2_b"] = w(ks[7], (16,), 16)
    v_feat = 16 * (hv // 4) * (wv // 4)
    a_feat = 16 * (la // 4)
    # fc head: Linear(v_feat+a_feat, 256) + ReLU + Linear(256, output_dim)
    p["fc1_w"] = w(ks[8], (v_feat + a_feat, 256), v_feat + a_feat)   # (K, N) layout
    p["fc1_b"] = w(ks[9], (256,), 256)
    p["fc2_w"] = w(ks[10], (256, output_dim), 256)
    p["fc2_b"] = w(ks[11], (output_dim,), output_dim)
    return p


# --------------------------------------------------------------------------- #
# Kernel-side constants (permuted / padded / bf16) - built once on the host    #
# --------------------------------------------------------------------------- #
def make_kernel_params(params, obs_shape_v, obs_shape_a, batch, output_dim):
    cv, hv, wv = obs_shape_v
    ca, la = obs_shape_a
    c1v, c2v = params["vc1_w"].shape[0], params["vc2_w"].shape[0]
    c1a, c2a = params["ac1_w"].shape[0], params["ac2_w"].shape[0]
    assert c2v == c2a, "fc1 block stacking assumes equal conv2 channel counts"
    bf16 = jnp.bfloat16

    # conv1 output geometry (vision k3 s2 p1, audio k5 s2 p2)
    h1 = (hv + 2 * 1 - 3) // 2 + 1
    w1sp = (wv + 2 * 1 - 3) // 2 + 1
    l1 = (la + 2 * 2 - 5) // 2 + 1

    # in-kernel gather (im2col) selection matrices for the second conv layers
    s2v, h2, w2sp = _conv2d_gather_mats(batch, h1, w1sp, 3, 2, 1)
    s2a, l2 = _conv1d_gather_mats(batch, l1, 5, 2, 2)
    p_v, p_a = h2 * w2sp, l2

    # FC-head row extraction (batch rows padded to a multiple of 8 for the MXU)
    m_rows = ((batch + 7) // 8) * 8
    tv = _block_gather_mats(batch, p_v, m_rows)
    ta = _block_gather_mats(batch, p_a, m_rows)

    # conv weights in im2col layout; layer-2 weights pre-split per kernel offset
    wv1 = jnp.transpose(params["vc1_w"], (2, 3, 1, 0)).reshape(3 * 3 * cv, c1v)
    wv2 = jnp.transpose(params["vc2_w"], (2, 3, 1, 0)).reshape(3 * 3, c1v, c2v)
    wa1 = jnp.transpose(params["ac1_w"], (2, 1, 0)).reshape(5 * ca, c1a)
    wa2 = jnp.transpose(params["ac2_w"], (2, 1, 0)).reshape(5, c1a, c2a)

    # fc1 rows permuted from the PyTorch NCHW/NCL flatten order into the kernel's
    # (spatial position, channel) block order, stacked per block.
    kv_rows = c2v * p_v
    assert kv_rows + c2a * p_a == params["fc1_w"].shape[0]
    blocks = []
    for p in range(p_v):
        blocks.append(params["fc1_w"][np.arange(c2v) * p_v + p])              # (C2, 256)
    for q in range(p_a):
        blocks.append(params["fc1_w"][kv_rows + np.arange(c2a) * p_a + q])    # (C2, 256)
    w1_blocks = jnp.stack(blocks, axis=0)                                     # (p_v+p_a, C2, 256)

    # fc2 padded to a lane-dense (>=128) output slab
    n_pad = max(128, ((output_dim + 127) // 128) * 128)
    w2_pad = jnp.zeros((params["fc2_w"].shape[0], n_pad), jnp.float32)
    w2_pad = w2_pad.at[:, :output_dim].set(params["fc2_w"])
    b2_pad = jnp.zeros((1, n_pad), jnp.float32)
    b2_pad = b2_pad.at[:, :output_dim].set(params["fc2_b"][None, :])

    f32 = jnp.float32
    return {
        "wv1": wv1.astype(bf16), "bv1": params["vc1_b"].reshape(1, -1).astype(f32),
        "wv2": wv2.astype(bf16), "bv2": params["vc2_b"].reshape(1, -1).astype(f32),
        "wa1": wa1.astype(bf16), "ba1": params["ac1_b"].reshape(1, -1).astype(f32),
        "wa2": wa2.astype(bf16), "ba2": params["ac2_b"].reshape(1, -1).astype(f32),
        "s2v": jnp.asarray(s2v, bf16), "s2a": jnp.asarray(s2a, bf16),
        "tv": jnp.asarray(tv, bf16), "ta": jnp.asarray(ta, bf16),
        "w1": w1_blocks.astype(bf16), "b1": params["fc1_b"].reshape(1, -1).astype(f32),
        "w2": w2_pad.astype(bf16), "b2": b2_pad.astype(f32),
    }


# --------------------------------------------------------------------------- #
# Forward pass: ONE pallas_call for the whole network                          #
# --------------------------------------------------------------------------- #
@functools.partial(jax.jit, static_argnames=("output_dim",))
def ppo_multimodal_forward(kparams, vision_input, audio_input, output_dim):
    # channels-last; only the raw-input (layer-1) im2col runs outside the kernel.
    # NOTE: kparams is specialized to the batch size it was built with.
    v_nhwc = jnp.transpose(vision_input, (0, 2, 3, 1))          # NCHW -> NHWC
    a_nlc = jnp.transpose(audio_input, (0, 2, 1))               # NCL  -> NLC
    cols_v, _, _ = _im2col_2d(v_nhwc, 3, 3, 2, 1)
    cols_a, _ = _im2col_1d(a_nlc, 5, 2, 2)

    n = vision_input.shape[0]
    m_rows = kparams["tv"].shape[1]
    n_pad_out = kparams["w2"].shape[1]
    kernel = functools.partial(
        _ppo_fused_kernel,
        n_off_v=kparams["s2v"].shape[0], n_off_a=kparams["s2a"].shape[0],
        n_blk_v=kparams["tv"].shape[0], n_blk_a=kparams["ta"].shape[0])

    out_pad = pl.pallas_call(
        kernel,
        out_shape=jax.ShapeDtypeStruct((m_rows, n_pad_out), jnp.float32),
    )(cols_v.astype(jnp.bfloat16), cols_a.astype(jnp.bfloat16),
      kparams["wv1"], kparams["bv1"], kparams["wv2"], kparams["bv2"],
      kparams["wa1"], kparams["ba1"], kparams["wa2"], kparams["ba2"],
      kparams["s2v"], kparams["s2a"], kparams["tv"], kparams["ta"],
      kparams["w1"], kparams["b1"], kparams["w2"], kparams["b2"])

    return out_pad[:n, :output_dim]


# --------------------------------------------------------------------------- #
# Pure-JAX reference (PyTorch semantics, f32, HIGHEST precision)               #
# --------------------------------------------------------------------------- #
def _ref_forward(params, vision_input, audio_input):
    hp = jax.lax.Precision.HIGHEST

    def c2(x, w, b, s, p):
        y = jax.lax.conv_general_dilated(
            x, w, (s, s), [(p, p), (p, p)],
            dimension_numbers=("NCHW", "OIHW", "NCHW"), precision=hp)
        return jnp.maximum(y + b.reshape(1, -1, 1, 1), 0.0)

    def c1(x, w, b, s, p):
        y = jax.lax.conv_general_dilated(
            x, w, (s,), [(p, p)],
            dimension_numbers=("NCH", "OIH", "NCH"), precision=hp)
        return jnp.maximum(y + b.reshape(1, -1, 1), 0.0)

    v = c2(vision_input, params["vc1_w"], params["vc1_b"], 2, 1)
    v = c2(v, params["vc2_w"], params["vc2_b"], 2, 1)
    v = v.reshape(v.shape[0], -1)
    a = c1(audio_input, params["ac1_w"], params["ac1_b"], 2, 2)
    a = c1(a, params["ac2_w"], params["ac2_b"], 2, 2)
    a = a.reshape(a.shape[0], -1)
    comb = jnp.concatenate([v, a], axis=1)
    h = jnp.maximum(jnp.dot(comb, params["fc1_w"], precision=hp) + params["fc1_b"], 0.0)
    return jnp.dot(h, params["fc2_w"], precision=hp) + params["fc2_b"]


# --------------------------------------------------------------------------- #
if __name__ == "__main__":
    obs_shape_v = (4, 16, 16)   # (C, H, W)
    obs_shape_a = (2, 32)       # (C, L)
    output_dim = 6
    batch = 2

    key = jax.random.PRNGKey(0)
    k_param, k_v, k_a = jax.random.split(key, 3)
    params = init_params(k_param, obs_shape_v, obs_shape_a, output_dim)
    kparams = make_kernel_params(params, obs_shape_v, obs_shape_a, batch, output_dim)

    vision_input = jax.random.normal(k_v, (batch, *obs_shape_v), jnp.float32)
    audio_input = jax.random.normal(k_a, (batch, *obs_shape_a), jnp.float32)

    logits = ppo_multimodal_forward(kparams, vision_input, audio_input, output_dim)
    logits = jax.block_until_ready(logits)
    assert logits.shape == (batch, output_dim), logits.shape

    ref = jax.block_until_ready(_ref_forward(params, vision_input, audio_input))
    max_err = float(jnp.max(jnp.abs(logits - ref)))
    assert jnp.allclose(logits, ref, atol=5e-2, rtol=5e-2), ("mismatch vs. reference", max_err)

    print("KERNEL_OK")
</pallas_src>

<mosaic_0001>
module attributes {stable_mosaic.version = 11 : i64} {
  func.func @_ppo_fused_kernel(%arg0: memref<128x36xbf16, #tpu.memory_space<vmem>>, %arg1: memref<32x10xbf16, #tpu.memory_space<vmem>>, %arg2: memref<36x8xbf16, #tpu.memory_space<vmem>>, %arg3: memref<1x8xf32, #tpu.memory_space<vmem>>, %arg4: memref<9x8x16xbf16, #tpu.memory_space<vmem>>, %arg5: memref<1x16xf32, #tpu.memory_space<vmem>>, %arg6: memref<10x8xbf16, #tpu.memory_space<vmem>>, %arg7: memref<1x8xf32, #tpu.memory_space<vmem>>, %arg8: memref<5x8x16xbf16, #tpu.memory_space<vmem>>, %arg9: memref<1x16xf32, #tpu.memory_space<vmem>>, %arg10: memref<9x32x128xbf16, #tpu.memory_space<vmem>>, %arg11: memref<5x16x32xbf16, #tpu.memory_space<vmem>>, %arg12: memref<16x8x32xbf16, #tpu.memory_space<vmem>>, %arg13: memref<8x8x16xbf16, #tpu.memory_space<vmem>>, %arg14: memref<24x16x256xbf16, #tpu.memory_space<vmem>>, %arg15: memref<1x256xf32, #tpu.memory_space<vmem>>, %arg16: memref<256x128xbf16, #tpu.memory_space<vmem>>, %arg17: memref<1x128xf32, #tpu.memory_space<vmem>>, %arg18: memref<8x128xf32, #tpu.memory_space<vmem>>) attributes {dimension_semantics = [], scalar_prefetch = 0 : i64, scratch_operands = 0 : i64, tpu.core_type = #tpu.core_type<tc>} {
    %c0 = arith.constant 0 : index
    %c0_0 = arith.constant 0 : index
    %0 = vector.load %arg0[%c0, %c0_0] : memref<128x36xbf16, #tpu.memory_space<vmem>>, vector<128x36xbf16>
    %c0_1 = arith.constant 0 : index
    %c0_2 = arith.constant 0 : index
    %1 = vector.load %arg2[%c0_1, %c0_2] : memref<36x8xbf16, #tpu.memory_space<vmem>>, vector<36x8xbf16>
    %cst = arith.constant dense<0.000000e+00> : vector<128x8xf32>
    %2 = tpu.matmul %0, %1, %cst {dimension_numbers = #tpu.dot_dimension_numbers<[1], [0], [0], [1], [0, 0, 1, 1], [], []>} : vector<128x36xbf16>, vector<36x8xbf16>, vector<128x8xf32> -> vector<128x8xf32>
    %c0_3 = arith.constant 0 : index
    %c0_4 = arith.constant 0 : index
    %3 = vector.load %arg3[%c0_3, %c0_4] : memref<1x8xf32, #tpu.memory_space<vmem>>, vector<1x8xf32>
    %4 = vector.broadcast %3 : vector<1x8xf32> to vector<128x8xf32>
    %5 = arith.addf %2, %4 : vector<128x8xf32>
    %cst_5 = arith.constant 0.000000e+00 : f32
    %6 = vector.broadcast %cst_5 : f32 to vector<128x8xf32>
    %7 = arith.maximumf %5, %6 : vector<128x8xf32>
    %8 = arith.truncf %7 : vector<128x8xf32> to vector<128x8xbf16>
    %cst_6 = arith.constant 0.000000e+00 : f32
    %9 = vector.broadcast %cst_6 : f32 to vector<32x16xf32>
    %c0_7 = arith.constant 0 : index
    %c0_8 = arith.constant 0 : index
    %c0_9 = arith.constant 0 : index
    %10 = vector.load %arg10[%c0_7, %c0_8, %c0_9] : memref<9x32x128xbf16, #tpu.memory_space<vmem>>, vector<1x32x128xbf16>
    %11 = vector.shape_cast %10 : vector<1x32x128xbf16> to vector<32x128xbf16>
    %cst_10 = arith.constant dense<0.000000e+00> : vector<32x8xf32>
    %12 = tpu.matmul %11, %8, %cst_10 {dimension_numbers = #tpu.dot_dimension_numbers<[1], [0], [0], [1], [0, 0, 1, 1], [], []>} : vector<32x128xbf16>, vector<128x8xbf16>, vector<32x8xf32> -> vector<32x8xf32>
    %13 = arith.truncf %12 : vector<32x8xf32> to vector<32x8xbf16>
    %c0_11 = arith.constant 0 : index
    %c0_12 = arith.constant 0 : index
    %c0_13 = arith.constant 0 : index
    %14 = vector.load %arg4[%c0_11, %c0_12, %c0_13] : memref<9x8x16xbf16, #tpu.memory_space<vmem>>, vector<1x8x16xbf16>
    %15 = vector.shape_cast %14 : vector<1x8x16xbf16> to vector<8x16xbf16>
    %cst_14 = arith.constant dense<0.000000e+00> : vector<32x16xf32>
    %16 = tpu.matmul %13, %15, %cst_14 {dimension_numbers = #tpu.dot_dimension_numbers<[1], [0], [0], [1], [0, 0, 1, 1], [], []>} : vector<32x8xbf16>, vector<8x16xbf16>, vector<32x16xf32> -> vector<32x16xf32>
    %17 = arith.addf %9, %16 : vector<32x16xf32>
    %c1 = arith.constant 1 : index
    %c0_15 = arith.constant 0 : index
    %c0_16 = arith.constant 0 : index
    %18 = vector.load %arg10[%c1, %c0_15, %c0_16] : memref<9x32x128xbf16, #tpu.memory_space<vmem>>, vector<1x32x128xbf16>
    %19 = vector.shape_cast %18 : vector<1x32x128xbf16> to vector<32x128xbf16>
    %cst_17 = arith.constant dense<0.000000e+00> : vector<32x8xf32>
    %20 = tpu.matmul %19, %8, %cst_17 {dimension_numbers = #tpu.dot_dimension_numbers<[1], [0], [0], [1], [0, 0, 1, 1], [], []>} : vector<32x128xbf16>, vector<128x8xbf16>, vector<32x8xf32> -> vector<32x8xf32>
    %21 = arith.truncf %20 : vector<32x8xf32> to vector<32x8xbf16>
    %c1_18 = arith.constant 1 : index
    %c0_19 = arith.constant 0 : index
    %c0_20 = arith.constant 0 : index
    %22 = vector.load %arg4[%c1_18, %c0_19, %c0_20] : memref<9x8x16xbf16, #tpu.memory_space<vmem>>, vector<1x8x16xbf16>
    %23 = vector.shape_cast %22 : vector<1x8x16xbf16> to vector<8x16xbf16>
    %cst_21 = arith.constant dense<0.000000e+00> : vector<32x16xf32>
    %24 = tpu.matmul %21, %23, %cst_21 {dimension_numbers = #tpu.dot_dimension_numbers<[1], [0], [0], [1], [0, 0, 1, 1], [], []>} : vector<32x8xbf16>, vector<8x16xbf16>, vector<32x16xf32> -> vector<32x16xf32>
    %25 = arith.addf %17, %24 : vector<32x16xf32>
    %c2 = arith.constant 2 : index
    %c0_22 = arith.constant 0 : index
    %c0_23 = arith.constant 0 : index
    %26 = vector.load %arg10[%c2, %c0_22, %c0_23] : memref<9x32x128xbf16, #tpu.memory_space<vmem>>, vector<1x32x128xbf16>
    %27 = vector.shape_cast %26 : vector<1x32x128xbf16> to vector<32x128xbf16>
    %cst_24 = arith.constant dense<0.000000e+00> : vector<32x8xf32>
    %28 = tpu.matmul %27, %8, %cst_24 {dimension_numbers = #tpu.dot_dimension_numbers<[1], [0], [0], [1], [0, 0, 1, 1], [], []>} : vector<32x128xbf16>, vector<128x8xbf16>, vector<32x8xf32> -> vector<32x8xf32>
    %29 = arith.truncf %28 : vector<32x8xf32> to vector<32x8xbf16>
    %c2_25 = arith.constant 2 : index
    %c0_26 = arith.constant 0 : index
    %c0_27 = arith.constant 0 : index
    %30 = vector.load %arg4[%c2_25, %c0_26, %c0_27] : memref<9x8x16xbf16, #tpu.memory_space<vmem>>, vector<1x8x16xbf16>
    %31 = vector.shape_cast %30 : vector<1x8x16xbf16> to vector<8x16xbf16>
    %cst_28 = arith.constant dense<0.000000e+00> : vector<32x16xf32>
    %32 = tpu.matmul %29, %31, %cst_28 {dimension_numbers = #tpu.dot_dimension_numbers<[1], [0], [0], [1], [0, 0, 1, 1], [], []>} : vector<32x8xbf16>, vector<8x16xbf16>, vector<32x16xf32> -> vector<32x16xf32>
    %33 = arith.addf %25, %32 : vector<32x16xf32>
    %c3 = arith.constant 3 : index
    %c0_29 = arith.constant 0 : index
    %c0_30 = arith.constant 0 : index
    %34 = vector.load %arg10[%c3, %c0_29, %c0_30] : memref<9x32x128xbf16, #tpu.memory_space<vmem>>, vector<1x32x128xbf16>
    %35 = vector.shape_cast %34 : vector<1x32x128xbf16> to vector<32x128xbf16>
    %cst_31 = arith.constant dense<0.000000e+00> : vector<32x8xf32>
    %36 = tpu.matmul %35, %8, %cst_31 {dimension_numbers = #tpu.dot_dimension_numbers<[1], [0], [0], [1], [0, 0, 1, 1], [], []>} : vector<32x128xbf16>, vector<128x8xbf16>, vector<32x8xf32> -> vector<32x8xf32>
    %37 = arith.truncf %36 : vector<32x8xf32> to vector<32x8xbf16>
    %c3_32 = arith.constant 3 : index
    %c0_33 = arith.constant 0 : index
    %c0_34 = arith.constant 0 : index
    %38 = vector.load %arg4[%c3_32, %c0_33, %c0_34] : memref<9x8x16xbf16, #tpu.memory_space<vmem>>, vector<1x8x16xbf16>
    %39 = vector.shape_cast %38 : vector<1x8x16xbf16> to vector<8x16xbf16>
    %cst_35 = arith.constant dense<0.000000e+00> : vector<32x16xf32>
    %40 = tpu.matmul %37, %39, %cst_35 {dimension_numbers = #tpu.dot_dimension_numbers<[1], [0], [0], [1], [0, 0, 1, 1], [], []>} : vector<32x8xbf16>, vector<8x16xbf16>, vector<32x16xf32> -> vector<32x16xf32>
    %41 = arith.addf %33, %40 : vector<32x16xf32>
    %c4 = arith.constant 4 : index
    %c0_36 = arith.constant 0 : index
    %c0_37 = arith.constant 0 : index
    %42 = vector.load %arg10[%c4, %c0_36, %c0_37] : memref<9x32x128xbf16, #tpu.memory_space<vmem>>, vector<1x32x128xbf16>
    %43 = vector.shape_cast %42 : vector<1x32x128xbf16> to vector<32x128xbf16>
    %cst_38 = arith.constant dense<0.000000e+00> : vector<32x8xf32>
    %44 = tpu.matmul %43, %8, %cst_38 {dimension_numbers = #tpu.dot_dimension_numbers<[1], [0], [0], [1], [0, 0, 1, 1], [], []>} : vector<32x128xbf16>, vector<128x8xbf16>, vector<32x8xf32> -> vector<32x8xf32>
    %45 = arith.truncf %44 : vector<32x8xf32> to vector<32x8xbf16>
    %c4_39 = arith.constant 4 : index
    %c0_40 = arith.constant 0 : index
    %c0_41 = arith.constant 0 : index
    %46 = vector.load %arg4[%c4_39, %c0_40, %c0_41] : memref<9x8x16xbf16, #tpu.memory_space<vmem>>, vector<1x8x16xbf16>
    %47 = vector.shape_cast %46 : vector<1x8x16xbf16> to vector<8x16xbf16>
    %cst_42 = arith.constant dense<0.000000e+00> : vector<32x16xf32>
    %48 = tpu.matmul %45, %47, %cst_42 {dimension_numbers = #tpu.dot_dimension_numbers<[1], [0], [0], [1], [0, 0, 1, 1], [], []>} : vector<32x8xbf16>, vector<8x16xbf16>, vector<32x16xf32> -> vector<32x16xf32>
    %49 = arith.addf %41, %48 : vector<32x16xf32>
    %c5 = arith.constant 5 : index
    %c0_43 = arith.constant 0 : index
    %c0_44 = arith.constant 0 : index
    %50 = vector.load %arg10[%c5, %c0_43, %c0_44] : memref<9x32x128xbf16, #tpu.memory_space<vmem>>, vector<1x32x128xbf16>
    %51 = vector.shape_cast %50 : vector<1x32x128xbf16> to vector<32x128xbf16>
    %cst_45 = arith.constant dense<0.000000e+00> : vector<32x8xf32>
    %52 = tpu.matmul %51, %8, %cst_45 {dimension_numbers = #tpu.dot_dimension_numbers<[1], [0], [0], [1], [0, 0, 1, 1], [], []>} : vector<32x128xbf16>, vector<128x8xbf16>, vector<32x8xf32> -> vector<32x8xf32>
    %53 = arith.truncf %52 : vector<32x8xf32> to vector<32x8xbf16>
    %c5_46 = arith.constant 5 : index
    %c0_47 = arith.constant 0 : index
    %c0_48 = arith.constant 0 : index
    %54 = vector.load %arg4[%c5_46, %c0_47, %c0_48] : memref<9x8x16xbf16, #tpu.memory_space<vmem>>, vector<1x8x16xbf16>
    %55 = vector.shape_cast %54 : vector<1x8x16xbf16> to vector<8x16xbf16>
    %cst_49 = arith.constant dense<0.000000e+00> : vector<32x16xf32>
    %56 = tpu.matmul %53, %55, %cst_49 {dimension_numbers = #tpu.dot_dimension_numbers<[1], [0], [0], [1], [0, 0, 1, 1], [], []>} : vector<32x8xbf16>, vector<8x16xbf16>, vector<32x16xf32> -> vector<32x16xf32>
    %57 = arith.addf %49, %56 : vector<32x16xf32>
    %c6 = arith.constant 6 : index
    %c0_50 = arith.constant 0 : index
    %c0_51 = arith.constant 0 : index
    %58 = vector.load %arg10[%c6, %c0_50, %c0_51] : memref<9x32x128xbf16, #tpu.memory_space<vmem>>, vector<1x32x128xbf16>
    %59 = vector.shape_cast %58 : vector<1x32x128xbf16> to vector<32x128xbf16>
    %cst_52 = arith.constant dense<0.000000e+00> : vector<32x8xf32>
    %60 = tpu.matmul %59, %8, %cst_52 {dimension_numbers = #tpu.dot_dimension_numbers<[1], [0], [0], [1], [0, 0, 1, 1], [], []>} : vector<32x128xbf16>, vector<128x8xbf16>, vector<32x8xf32> -> vector<32x8xf32>
    %61 = arith.truncf %60 : vector<32x8xf32> to vector<32x8xbf16>
    %c6_53 = arith.constant 6 : index
    %c0_54 = arith.constant 0 : index
    %c0_55 = arith.constant 0 : index
    %62 = vector.load %arg4[%c6_53, %c0_54, %c0_55] : memref<9x8x16xbf16, #tpu.memory_space<vmem>>, vector<1x8x16xbf16>
    %63 = vector.shape_cast %62 : vector<1x8x16xbf16> to vector<8x16xbf16>
    %cst_56 = arith.constant dense<0.000000e+00> : vector<32x16xf32>
    %64 = tpu.matmul %61, %63, %cst_56 {dimension_numbers = #tpu.dot_dimension_numbers<[1], [0], [0], [1], [0, 0, 1, 1], [], []>} : vector<32x8xbf16>, vector<8x16xbf16>, vector<32x16xf32> -> vector<32x16xf32>
    %65 = arith.addf %57, %64 : vector<32x16xf32>
    %c7 = arith.constant 7 : index
    %c0_57 = arith.constant 0 : index
    %c0_58 = arith.constant 0 : index
    %66 = vector.load %arg10[%c7, %c0_57, %c0_58] : memref<9x32x128xbf16, #tpu.memory_space<vmem>>, vector<1x32x128xbf16>
    %67 = vector.shape_cast %66 : vector<1x32x128xbf16> to vector<32x128xbf16>
    %cst_59 = arith.constant dense<0.000000e+00> : vector<32x8xf32>
    %68 = tpu.matmul %67, %8, %cst_59 {dimension_numbers = #tpu.dot_dimension_numbers<[1], [0], [0], [1], [0, 0, 1, 1], [], []>} : vector<32x128xbf16>, vector<128x8xbf16>, vector<32x8xf32> -> vector<32x8xf32>
    %69 = arith.truncf %68 : vector<32x8xf32> to vector<32x8xbf16>
    %c7_60 = arith.constant 7 : index
    %c0_61 = arith.constant 0 : index
    %c0_62 = arith.constant 0 : index
    %70 = vector.load %arg4[%c7_60, %c0_61, %c0_62] : memref<9x8x16xbf16, #tpu.memory_space<vmem>>, vector<1x8x16xbf16>
    %71 = vector.shape_cast %70 : vector<1x8x16xbf16> to vector<8x16xbf16>
    %cst_63 = arith.constant dense<0.000000e+00> : vector<32x16xf32>
    %72 = tpu.matmul %69, %71, %cst_63 {dimension_numbers = #tpu.dot_dimension_numbers<[1], [0], [0], [1], [0, 0, 1, 1], [], []>} : vector<32x8xbf16>, vector<8x16xbf16>, vector<32x16xf32> -> vector<32x16xf32>
    %73 = arith.addf %65, %72 : vector<32x16xf32>
    %c8 = arith.constant 8 : index
    %c0_64 = arith.constant 0 : index
    %c0_65 = arith.constant 0 : index
    %74 = vector.load %arg10[%c8, %c0_64, %c0_65] : memref<9x32x128xbf16, #tpu.memory_space<vmem>>, vector<1x32x128xbf16>
    %75 = vector.shape_cast %74 : vector<1x32x128xbf16> to vector<32x128xbf16>
    %cst_66 = arith.constant dense<0.000000e+00> : vector<32x8xf32>
    %76 = tpu.matmul %75, %8, %cst_66 {dimension_numbers = #tpu.dot_dimension_numbers<[1], [0], [0], [1], [0, 0, 1, 1], [], []>} : vector<32x128xbf16>, vector<128x8xbf16>, vector<32x8xf32> -> vector<32x8xf32>
    %77 = arith.truncf %76 : vector<32x8xf32> to vector<32x8xbf16>
    %c8_67 = arith.constant 8 : index
    %c0_68 = arith.constant 0 : index
    %c0_69 = arith.constant 0 : index
    %78 = vector.load %arg4[%c8_67, %c0_68, %c0_69] : memref<9x8x16xbf16, #tpu.memory_space<vmem>>, vector<1x8x16xbf16>
    %79 = vector.shape_cast %78 : vector<1x8x16xbf16> to vector<8x16xbf16>
    %cst_70 = arith.constant dense<0.000000e+00> : vector<32x16xf32>
    %80 = tpu.matmul %77, %79, %cst_70 {dimension_numbers = #tpu.dot_dimension_numbers<[1], [0], [0], [1], [0, 0, 1, 1], [], []>} : vector<32x8xbf16>, vector<8x16xbf16>, vector<32x16xf32> -> vector<32x16xf32>
    %81 = arith.addf %73, %80 : vector<32x16xf32>
    %c0_71 = arith.constant 0 : index
    %c0_72 = arith.constant 0 : index
    %82 = vector.load %arg5[%c0_71, %c0_72] : memref<1x16xf32, #tpu.memory_space<vmem>>, vector<1x16xf32>
    %83 = vector.broadcast %82 : vector<1x16xf32> to vector<32x16xf32>
    %84 = arith.addf %81, %83 : vector<32x16xf32>
    %cst_73 = arith.constant 0.000000e+00 : f32
    %85 = vector.broadcast %cst_73 : f32 to vector<32x16xf32>
    %86 = arith.maximumf %84, %85 : vector<32x16xf32>
    %87 = arith.truncf %86 : vector<32x16xf32> to vector<32x16xbf16>
    %c0_74 = arith.constant 0 : index
    %c0_75 = arith.constant 0 : index
    %88 = vector.load %arg1[%c0_74, %c0_75] : memref<32x10xbf16, #tpu.memory_space<vmem>>, vector<32x10xbf16>
    %c0_76 = arith.constant 0 : index
    %c0_77 = arith.constant 0 : index
    %89 = vector.load %arg6[%c0_76, %c0_77] : memref<10x8xbf16, #tpu.memory_space<vmem>>, vector<10x8xbf16>
    %cst_78 = arith.constant dense<0.000000e+00> : vector<32x8xf32>
    %90 = tpu.matmul %88, %89, %cst_78 {dimension_numbers = #tpu.dot_dimension_numbers<[1], [0], [0], [1], [0, 0, 1, 1], [], []>} : vector<32x10xbf16>, vector<10x8xbf16>, vector<32x8xf32> -> vector<32x8xf32>
    %c0_79 = arith.constant 0 : index
    %c0_80 = arith.constant 0 : index
    %91 = vector.load %arg7[%c0_79, %c0_80] : memref<1x8xf32, #tpu.memory_space<vmem>>, vector<1x8xf32>
    %92 = vector.broadcast %91 : vector<1x8xf32> to vector<32x8xf32>
    %93 = arith.addf %90, %92 : vector<32x8xf32>
    %cst_81 = arith.constant 0.000000e+00 : f32
    %94 = vector.broadcast %cst_81 : f32 to vector<32x8xf32>
    %95 = arith.maximumf %93, %94 : vector<32x8xf32>
    %96 = arith.truncf %95 : vector<32x8xf32> to vector<32x8xbf16>
    %cst_82 = arith.constant 0.000000e+00 : f32
    %97 = vector.broadcast %cst_82 : f32 to vector<16x16xf32>
    %c0_83 = arith.constant 0 : index
    %c0_84 = arith.constant 0 : index
    %c0_85 = arith.constant 0 : index
    %98 = vector.load %arg11[%c0_83, %c0_84, %c0_85] : memref<5x16x32xbf16, #tpu.memory_space<vmem>>, vector<1x16x32xbf16>
    %99 = vector.shape_cast %98 : vector<1x16x32xbf16> to vector<16x32xbf16>
    %cst_86 = arith.constant dense<0.000000e+00> : vector<16x8xf32>
    %100 = tpu.matmul %99, %96, %cst_86 {dimension_numbers = #tpu.dot_dimension_numbers<[1], [0], [0], [1], [0, 0, 1, 1], [], []>} : vector<16x32xbf16>, vector<32x8xbf16>, vector<16x8xf32> -> vector<16x8xf32>
    %101 = arith.truncf %100 : vector<16x8xf32> to vector<16x8xbf16>
    %c0_87 = arith.constant 0 : index
    %c0_88 = arith.constant 0 : index
    %c0_89 = arith.constant 0 : index
    %102 = vector.load %arg8[%c0_87, %c0_88, %c0_89] : memref<5x8x16xbf16, #tpu.memory_space<vmem>>, vector<1x8x16xbf16>
    %103 = vector.shape_cast %102 : vector<1x8x16xbf16> to vector<8x16xbf16>
    %cst_90 = arith.constant dense<0.000000e+00> : vector<16x16xf32>
    %104 = tpu.matmul %101, %103, %cst_90 {dimension_numbers = #tpu.dot_dimension_numbers<[1], [0], [0], [1], [0, 0, 1, 1], [], []>} : vector<16x8xbf16>, vector<8x16xbf16>, vector<16x16xf32> -> vector<16x16xf32>
    %105 = arith.addf %97, %104 : vector<16x16xf32>
    %c1_91 = arith.constant 1 : index
    %c0_92 = arith.constant 0 : index
    %c0_93 = arith.constant 0 : index
    %106 = vector.load %arg11[%c1_91, %c0_92, %c0_93] : memref<5x16x32xbf16, #tpu.memory_space<vmem>>, vector<1x16x32xbf16>
    %107 = vector.shape_cast %106 : vector<1x16x32xbf16> to vector<16x32xbf16>
    %cst_94 = arith.constant dense<0.000000e+00> : vector<16x8xf32>
    %108 = tpu.matmul %107, %96, %cst_94 {dimension_numbers = #tpu.dot_dimension_numbers<[1], [0], [0], [1], [0, 0, 1, 1], [], []>} : vector<16x32xbf16>, vector<32x8xbf16>, vector<16x8xf32> -> vector<16x8xf32>
    %109 = arith.truncf %108 : vector<16x8xf32> to vector<16x8xbf16>
    %c1_95 = arith.constant 1 : index
    %c0_96 = arith.constant 0 : index
    %c0_97 = arith.constant 0 : index
    %110 = vector.load %arg8[%c1_95, %c0_96, %c0_97] : memref<5x8x16xbf16, #tpu.memory_space<vmem>>, vector<1x8x16xbf16>
    %111 = vector.shape_cast %110 : vector<1x8x16xbf16> to vector<8x16xbf16>
    %cst_98 = arith.constant dense<0.000000e+00> : vector<16x16xf32>
    %112 = tpu.matmul %109, %111, %cst_98 {dimension_numbers = #tpu.dot_dimension_numbers<[1], [0], [0], [1], [0, 0, 1, 1], [], []>} : vector<16x8xbf16>, vector<8x16xbf16>, vector<16x16xf32> -> vector<16x16xf32>
    %113 = arith.addf %105, %112 : vector<16x16xf32>
    %c2_99 = arith.constant 2 : index
    %c0_100 = arith.constant 0 : index
    %c0_101 = arith.constant 0 : index
    %114 = vector.load %arg11[%c2_99, %c0_100, %c0_101] : memref<5x16x32xbf16, #tpu.memory_space<vmem>>, vector<1x16x32xbf16>
    %115 = vector.shape_cast %114 : vector<1x16x32xbf16> to vector<16x32xbf16>
    %cst_102 = arith.constant dense<0.000000e+00> : vector<16x8xf32>
    %116 = tpu.matmul %115, %96, %cst_102 {dimension_numbers = #tpu.dot_dimension_numbers<[1], [0], [0], [1], [0, 0, 1, 1], [], []>} : vector<16x32xbf16>, vector<32x8xbf16>, vector<16x8xf32> -> vector<16x8xf32>
    %117 = arith.truncf %116 : vector<16x8xf32> to vector<16x8xbf16>
    %c2_103 = arith.constant 2 : index
    %c0_104 = arith.constant 0 : index
    %c0_105 = arith.constant 0 : index
    %118 = vector.load %arg8[%c2_103, %c0_104, %c0_105] : memref<5x8x16xbf16, #tpu.memory_space<vmem>>, vector<1x8x16xbf16>
    %119 = vector.shape_cast %118 : vector<1x8x16xbf16> to vector<8x16xbf16>
    %cst_106 = arith.constant dense<0.000000e+00> : vector<16x16xf32>
    %120 = tpu.matmul %117, %119, %cst_106 {dimension_numbers = #tpu.dot_dimension_numbers<[1], [0], [0], [1], [0, 0, 1, 1], [], []>} : vector<16x8xbf16>, vector<8x16xbf16>, vector<16x16xf32> -> vector<16x16xf32>
    %121 = arith.addf %113, %120 : vector<16x16xf32>
    %c3_107 = arith.constant 3 : index
    %c0_108 = arith.constant 0 : index
    %c0_109 = arith.constant 0 : index
    %122 = vector.load %arg11[%c3_107, %c0_108, %c0_109] : memref<5x16x32xbf16, #tpu.memory_space<vmem>>, vector<1x16x32xbf16>
    %123 = vector.shape_cast %122 : vector<1x16x32xbf16> to vector<16x32xbf16>
    %cst_110 = arith.constant dense<0.000000e+00> : vector<16x8xf32>
    %124 = tpu.matmul %123, %96, %cst_110 {dimension_numbers = #tpu.dot_dimension_numbers<[1], [0], [0], [1], [0, 0, 1, 1], [], []>} : vector<16x32xbf16>, vector<32x8xbf16>, vector<16x8xf32> -> vector<16x8xf32>
    %125 = arith.truncf %124 : vector<16x8xf32> to vector<16x8xbf16>
    %c3_111 = arith.constant 3 : index
    %c0_112 = arith.constant 0 : index
    %c0_113 = arith.constant 0 : index
    %126 = vector.load %arg8[%c3_111, %c0_112, %c0_113] : memref<5x8x16xbf16, #tpu.memory_space<vmem>>, vector<1x8x16xbf16>
    %127 = vector.shape_cast %126 : vector<1x8x16xbf16> to vector<8x16xbf16>
    %cst_114 = arith.constant dense<0.000000e+00> : vector<16x16xf32>
    %128 = tpu.matmul %125, %127, %cst_114 {dimension_numbers = #tpu.dot_dimension_numbers<[1], [0], [0], [1], [0, 0, 1, 1], [], []>} : vector<16x8xbf16>, vector<8x16xbf16>, vector<16x16xf32> -> vector<16x16xf32>
    %129 = arith.addf %121, %128 : vector<16x16xf32>
    %c4_115 = arith.constant 4 : index
    %c0_116 = arith.constant 0 : index
    %c0_117 = arith.constant 0 : index
    %130 = vector.load %arg11[%c4_115, %c0_116, %c0_117] : memref<5x16x32xbf16, #tpu.memory_space<vmem>>, vector<1x16x32xbf16>
    %131 = vector.shape_cast %130 : vector<1x16x32xbf16> to vector<16x32xbf16>
    %cst_118 = arith.constant dense<0.000000e+00> : vector<16x8xf32>
    %132 = tpu.matmul %131, %96, %cst_118 {dimension_numbers = #tpu.dot_dimension_numbers<[1], [0], [0], [1], [0, 0, 1, 1], [], []>} : vector<16x32xbf16>, vector<32x8xbf16>, vector<16x8xf32> -> vector<16x8xf32>
    %133 = arith.truncf %132 : vector<16x8xf32> to vector<16x8xbf16>
    %c4_119 = arith.constant 4 : index
    %c0_120 = arith.constant 0 : index
    %c0_121 = arith.constant 0 : index
    %134 = vector.load %arg8[%c4_119, %c0_120, %c0_121] : memref<5x8x16xbf16, #tpu.memory_space<vmem>>, vector<1x8x16xbf16>
    %135 = vector.shape_cast %134 : vector<1x8x16xbf16> to vector<8x16xbf16>
    %cst_122 = arith.constant dense<0.000000e+00> : vector<16x16xf32>
    %136 = tpu.matmul %133, %135, %cst_122 {dimension_numbers = #tpu.dot_dimension_numbers<[1], [0], [0], [1], [0, 0, 1, 1], [], []>} : vector<16x8xbf16>, vector<8x16xbf16>, vector<16x16xf32> -> vector<16x16xf32>
    %137 = arith.addf %129, %136 : vector<16x16xf32>
    %c0_123 = arith.constant 0 : index
    %c0_124 = arith.constant 0 : index
    %138 = vector.load %arg9[%c0_123, %c0_124] : memref<1x16xf32, #tpu.memory_space<vmem>>, vector<1x16xf32>
    %139 = vector.broadcast %138 : vector<1x16xf32> to vector<16x16xf32>
    %140 = arith.addf %137, %139 : vector<16x16xf32>
    %cst_125 = arith.constant 0.000000e+00 : f32
    %141 = vector.broadcast %cst_125 : f32 to vector<16x16xf32>
    %142 = arith.maximumf %140, %141 : vector<16x16xf32>
    %143 = arith.truncf %142 : vector<16x16xf32> to vector<16x16xbf16>
    %cst_126 = arith.constant 0.000000e+00 : f32
    %144 = vector.broadcast %cst_126 : f32 to vector<8x256xf32>
    %c0_127 = arith.constant 0 : index
    %c0_128 = arith.constant 0 : index
    %c0_129 = arith.constant 0 : index
    %145 = vector.load %arg12[%c0_127, %c0_128, %c0_129] : memref<16x8x32xbf16, #tpu.memory_space<vmem>>, vector<1x8x32xbf16>
    %146 = vector.shape_cast %145 : vector<1x8x32xbf16> to vector<8x32xbf16>
    %cst_130 = arith.constant dense<0.000000e+00> : vector<8x16xf32>
    %147 = tpu.matmul %146, %87, %cst_130 {dimension_numbers = #tpu.dot_dimension_numbers<[1], [0], [0], [1], [0, 0, 1, 1], [], []>} : vector<8x32xbf16>, vector<32x16xbf16>, vector<8x16xf32> -> vector<8x16xf32>
    %148 = arith.truncf %147 : vector<8x16xf32> to vector<8x16xbf16>
    %c0_131 = arith.constant 0 : index
    %c0_132 = arith.constant 0 : index
    %c0_133 = arith.constant 0 : index
    %149 = vector.load %arg14[%c0_131, %c0_132, %c0_133] : memref<24x16x256xbf16, #tpu.memory_space<vmem>>, vector<1x16x256xbf16>
    %150 = vector.shape_cast %149 : vector<1x16x256xbf16> to vector<16x256xbf16>
    %cst_134 = arith.constant dense<0.000000e+00> : vector<8x256xf32>
    %151 = tpu.matmul %148, %150, %cst_134 {dimension_numbers = #tpu.dot_dimension_numbers<[1], [0], [0], [1], [0, 0, 1, 1], [], []>} : vector<8x16xbf16>, vector<16x256xbf16>, vector<8x256xf32> -> vector<8x256xf32>
    %152 = arith.addf %144, %151 : vector<8x256xf32>
    %c1_135 = arith.constant 1 : index
    %c0_136 = arith.constant 0 : index
    %c0_137 = arith.constant 0 : index
    %153 = vector.load %arg12[%c1_135, %c0_136, %c0_137] : memref<16x8x32xbf16, #tpu.memory_space<vmem>>, vector<1x8x32xbf16>
    %154 = vector.shape_cast %153 : vector<1x8x32xbf16> to vector<8x32xbf16>
    %cst_138 = arith.constant dense<0.000000e+00> : vector<8x16xf32>
    %155 = tpu.matmul %154, %87, %cst_138 {dimension_numbers = #tpu.dot_dimension_numbers<[1], [0], [0], [1], [0, 0, 1, 1], [], []>} : vector<8x32xbf16>, vector<32x16xbf16>, vector<8x16xf32> -> vector<8x16xf32>
    %156 = arith.truncf %155 : vector<8x16xf32> to vector<8x16xbf16>
    %c1_139 = arith.constant 1 : index
    %c0_140 = arith.constant 0 : index
    %c0_141 = arith.constant 0 : index
    %157 = vector.load %arg14[%c1_139, %c0_140, %c0_141] : memref<24x16x256xbf16, #tpu.memory_space<vmem>>, vector<1x16x256xbf16>
    %158 = vector.shape_cast %157 : vector<1x16x256xbf16> to vector<16x256xbf16>
    %cst_142 = arith.constant dense<0.000000e+00> : vector<8x256xf32>
    %159 = tpu.matmul %156, %158, %cst_142 {dimension_numbers = #tpu.dot_dimension_numbers<[1], [0], [0], [1], [0, 0, 1, 1], [], []>} : vector<8x16xbf16>, vector<16x256xbf16>, vector<8x256xf32> -> vector<8x256xf32>
    %160 = arith.addf %152, %159 : vector<8x256xf32>
    %c2_143 = arith.constant 2 : index
    %c0_144 = arith.constant 0 : index
    %c0_145 = arith.constant 0 : index
    %161 = vector.load %arg12[%c2_143, %c0_144, %c0_145] : memref<16x8x32xbf16, #tpu.memory_space<vmem>>, vector<1x8x32xbf16>
    %162 = vector.shape_cast %161 : vector<1x8x32xbf16> to vector<8x32xbf16>
    %cst_146 = arith.constant dense<0.000000e+00> : vector<8x16xf32>
    %163 = tpu.matmul %162, %87, %cst_146 {dimension_numbers = #tpu.dot_dimension_numbers<[1], [0], [0], [1], [0, 0, 1, 1], [], []>} : vector<8x32xbf16>, vector<32x16xbf16>, vector<8x16xf32> -> vector<8x16xf32>
    %164 = arith.truncf %163 : vector<8x16xf32> to vector<8x16xbf16>
    %c2_147 = arith.constant 2 : index
    %c0_148 = arith.constant 0 : index
    %c0_149 = arith.constant 0 : index
    %165 = vector.load %arg14[%c2_147, %c0_148, %c0_149] : memref<24x16x256xbf16, #tpu.memory_space<vmem>>, vector<1x16x256xbf16>
    %166 = vector.shape_cast %165 : vector<1x16x256xbf16> to vector<16x256xbf16>
    %cst_150 = arith.constant dense<0.000000e+00> : vector<8x256xf32>
    %167 = tpu.matmul %164, %166, %cst_150 {dimension_numbers = #tpu.dot_dimension_numbers<[1], [0], [0], [1], [0, 0, 1, 1], [], []>} : vector<8x16xbf16>, vector<16x256xbf16>, vector<8x256xf32> -> vector<8x256xf32>
    %168 = arith.addf %160, %167 : vector<8x256xf32>
    %c3_151 = arith.constant 3 : index
    %c0_152 = arith.constant 0 : index
    %c0_153 = arith.constant 0 : index
    %169 = vector.load %arg12[%c3_151, %c0_152, %c0_153] : memref<16x8x32xbf16, #tpu.memory_space<vmem>>, vector<1x8x32xbf16>
    %170 = vector.shape_cast %169 : vector<1x8x32xbf16> to vector<8x32xbf16>
    %cst_154 = arith.constant dense<0.000000e+00> : vector<8x16xf32>
    %171 = tpu.matmul %170, %87, %cst_154 {dimension_numbers = #tpu.dot_dimension_numbers<[1], [0], [0], [1], [0, 0, 1, 1], [], []>} : vector<8x32xbf16>, vector<32x16xbf16>, vector<8x16xf32> -> vector<8x16xf32>
    %172 = arith.truncf %171 : vector<8x16xf32> to vector<8x16xbf16>
    %c3_155 = arith.constant 3 : index
    %c0_156 = arith.constant 0 : index
    %c0_157 = arith.constant 0 : index
    %173 = vector.load %arg14[%c3_155, %c0_156, %c0_157] : memref<24x16x256xbf16, #tpu.memory_space<vmem>>, vector<1x16x256xbf16>
    %174 = vector.shape_cast %173 : vector<1x16x256xbf16> to vector<16x256xbf16>
    %cst_158 = arith.constant dense<0.000000e+00> : vector<8x256xf32>
    %175 = tpu.matmul %172, %174, %cst_158 {dimension_numbers = #tpu.dot_dimension_numbers<[1], [0], [0], [1], [0, 0, 1, 1], [], []>} : vector<8x16xbf16>, vector<16x256xbf16>, vector<8x256xf32> -> vector<8x256xf32>
    %176 = arith.addf %168, %175 : vector<8x256xf32>
    %c4_159 = arith.constant 4 : index
    %c0_160 = arith.constant 0 : index
    %c0_161 = arith.constant 0 : index
    %177 = vector.load %arg12[%c4_159, %c0_160, %c0_161] : memref<16x8x32xbf16, #tpu.memory_space<vmem>>, vector<1x8x32xbf16>
    %178 = vector.shape_cast %177 : vector<1x8x32xbf16> to vector<8x32xbf16>
    %cst_162 = arith.constant dense<0.000000e+00> : vector<8x16xf32>
    %179 = tpu.matmul %178, %87, %cst_162 {dimension_numbers = #tpu.dot_dimension_numbers<[1], [0], [0], [1], [0, 0, 1, 1], [], []>} : vector<8x32xbf16>, vector<32x16xbf16>, vector<8x16xf32> -> vector<8x16xf32>
    %180 = arith.truncf %179 : vector<8x16xf32> to vector<8x16xbf16>
    %c4_163 = arith.constant 4 : index
    %c0_164 = arith.constant 0 : index
    %c0_165 = arith.constant 0 : index
    %181 = vector.load %arg14[%c4_163, %c0_164, %c0_165] : memref<24x16x256xbf16, #tpu.memory_space<vmem>>, vector<1x16x256xbf16>
    %182 = vector.shape_cast %181 : vector<1x16x256xbf16> to vector<16x256xbf16>
    %cst_166 = arith.constant dense<0.000000e+00> : vector<8x256xf32>
    %183 = tpu.matmul %180, %182, %cst_166 {dimension_numbers = #tpu.dot_dimension_numbers<[1], [0], [0], [1], [0, 0, 1, 1], [], []>} : vector<8x16xbf16>, vector<16x256xbf16>, vector<8x256xf32> -> vector<8x256xf32>
    %184 = arith.addf %176, %183 : vector<8x256xf32>
    %c5_167 = arith.constant 5 : index
    %c0_168 = arith.constant 0 : index
    %c0_169 = arith.constant 0 : index
    %185 = vector.load %arg12[%c5_167, %c0_168, %c0_169] : memref<16x8x32xbf16, #tpu.memory_space<vmem>>, vector<1x8x32xbf16>
    %186 = vector.shape_cast %185 : vector<1x8x32xbf16> to vector<8x32xbf16>
    %cst_170 = arith.constant dense<0.000000e+00> : vector<8x16xf32>
    %187 = tpu.matmul %186, %87, %cst_170 {dimension_numbers = #tpu.dot_dimension_numbers<[1], [0], [0], [1], [0, 0, 1, 1], [], []>} : vector<8x32xbf16>, vector<32x16xbf16>, vector<8x16xf32> -> vector<8x16xf32>
    %188 = arith.truncf %187 : vector<8x16xf32> to vector<8x16xbf16>
    %c5_171 = arith.constant 5 : index
    %c0_172 = arith.constant 0 : index
    %c0_173 = arith.constant 0 : index
    %189 = vector.load %arg14[%c5_171, %c0_172, %c0_173] : memref<24x16x256xbf16, #tpu.memory_space<vmem>>, vector<1x16x256xbf16>
    %190 = vector.shape_cast %189 : vector<1x16x256xbf16> to vector<16x256xbf16>
    %cst_174 = arith.constant dense<0.000000e+00> : vector<8x256xf32>
    %191 = tpu.matmul %188, %190, %cst_174 {dimension_numbers = #tpu.dot_dimension_numbers<[1], [0], [0], [1], [0, 0, 1, 1], [], []>} : vector<8x16xbf16>, vector<16x256xbf16>, vector<8x256xf32> -> vector<8x256xf32>
    %192 = arith.addf %184, %191 : vector<8x256xf32>
    %c6_175 = arith.constant 6 : index
    %c0_176 = arith.constant 0 : index
    %c0_177 = arith.constant 0 : index
    %193 = vector.load %arg12[%c6_175, %c0_176, %c0_177] : memref<16x8x32xbf16, #tpu.memory_space<vmem>>, vector<1x8x32xbf16>
    %194 = vector.shape_cast %193 : vector<1x8x32xbf16> to vector<8x32xbf16>
    %cst_178 = arith.constant dense<0.000000e+00> : vector<8x16xf32>
    %195 = tpu.matmul %194, %87, %cst_178 {dimension_numbers = #tpu.dot_dimension_numbers<[1], [0], [0], [1], [0, 0, 1, 1], [], []>} : vector<8x32xbf16>, vector<32x16xbf16>, vector<8x16xf32> -> vector<8x16xf32>
    %196 = arith.truncf %195 : vector<8x16xf32> to vector<8x16xbf16>
    %c6_179 = arith.constant 6 : index
    %c0_180 = arith.constant 0 : index
    %c0_181 = arith.constant 0 : index
    %197 = vector.load %arg14[%c6_179, %c0_180, %c0_181] : memref<24x16x256xbf16, #tpu.memory_space<vmem>>, vector<1x16x256xbf16>
    %198 = vector.shape_cast %197 : vector<1x16x256xbf16> to vector<16x256xbf16>
    %cst_182 = arith.constant dense<0.000000e+00> : vector<8x256xf32>
    %199 = tpu.matmul %196, %198, %cst_182 {dimension_numbers = #tpu.dot_dimension_numbers<[1], [0], [0], [1], [0, 0, 1, 1], [], []>} : vector<8x16xbf16>, vector<16x256xbf16>, vector<8x256xf32> -> vector<8x256xf32>
    %200 = arith.addf %192, %199 : vector<8x256xf32>
    %c7_183 = arith.constant 7 : index
    %c0_184 = arith.constant 0 : index
    %c0_185 = arith.constant 0 : index
    %201 = vector.load %arg12[%c7_183, %c0_184, %c0_185] : memref<16x8x32xbf16, #tpu.memory_space<vmem>>, vector<1x8x32xbf16>
    %202 = vector.shape_cast %201 : vector<1x8x32xbf16> to vector<8x32xbf16>
    %cst_186 = arith.constant dense<0.000000e+00> : vector<8x16xf32>
    %203 = tpu.matmul %202, %87, %cst_186 {dimension_numbers = #tpu.dot_dimension_numbers<[1], [0], [0], [1], [0, 0, 1, 1], [], []>} : vector<8x32xbf16>, vector<32x16xbf16>, vector<8x16xf32> -> vector<8x16xf32>
    %204 = arith.truncf %203 : vector<8x16xf32> to vector<8x16xbf16>
    %c7_187 = arith.constant 7 : index
    %c0_188 = arith.constant 0 : index
    %c0_189 = arith.constant 0 : index
    %205 = vector.load %arg14[%c7_187, %c0_188, %c0_189] : memref<24x16x256xbf16, #tpu.memory_space<vmem>>, vector<1x16x256xbf16>
    %206 = vector.shape_cast %205 : vector<1x16x256xbf16> to vector<16x256xbf16>
    %cst_190 = arith.constant dense<0.000000e+00> : vector<8x256xf32>
    %207 = tpu.matmul %204, %206, %cst_190 {dimension_numbers = #tpu.dot_dimension_numbers<[1], [0], [0], [1], [0, 0, 1, 1], [], []>} : vector<8x16xbf16>, vector<16x256xbf16>, vector<8x256xf32> -> vector<8x256xf32>
    %208 = arith.addf %200, %207 : vector<8x256xf32>
    %c8_191 = arith.constant 8 : index
    %c0_192 = arith.constant 0 : index
    %c0_193 = arith.constant 0 : index
    %209 = vector.load %arg12[%c8_191, %c0_192, %c0_193] : memref<16x8x32xbf16, #tpu.memory_space<vmem>>, vector<1x8x32xbf16>
    %210 = vector.shape_cast %209 : vector<1x8x32xbf16> to vector<8x32xbf16>
    %cst_194 = arith.constant dense<0.000000e+00> : vector<8x16xf32>
    %211 = tpu.matmul %210, %87, %cst_194 {dimension_numbers = #tpu.dot_dimension_numbers<[1], [0], [0], [1], [0, 0, 1, 1], [], []>} : vector<8x32xbf16>, vector<32x16xbf16>, vector<8x16xf32> -> vector<8x16xf32>
    %212 = arith.truncf %211 : vector<8x16xf32> to vector<8x16xbf16>
    %c8_195 = arith.constant 8 : index
    %c0_196 = arith.constant 0 : index
    %c0_197 = arith.constant 0 : index
    %213 = vector.load %arg14[%c8_195, %c0_196, %c0_197] : memref<24x16x256xbf16, #tpu.memory_space<vmem>>, vector<1x16x256xbf16>
    %214 = vector.shape_cast %213 : vector<1x16x256xbf16> to vector<16x256xbf16>
    %cst_198 = arith.constant dense<0.000000e+00> : vector<8x256xf32>
    %215 = tpu.matmul %212, %214, %cst_198 {dimension_numbers = #tpu.dot_dimension_numbers<[1], [0], [0], [1], [0, 0, 1, 1], [], []>} : vector<8x16xbf16>, vector<16x256xbf16>, vector<8x256xf32> -> vector<8x256xf32>
    %216 = arith.addf %208, %215 : vector<8x256xf32>
    %c9 = arith.constant 9 : index
    %c0_199 = arith.constant 0 : index
    %c0_200 = arith.constant 0 : index
    %217 = vector.load %arg12[%c9, %c0_199, %c0_200] : memref<16x8x32xbf16, #tpu.memory_space<vmem>>, vector<1x8x32xbf16>
    %218 = vector.shape_cast %217 : vector<1x8x32xbf16> to vector<8x32xbf16>
    %cst_201 = arith.constant dense<0.000000e+00> : vector<8x16xf32>
    %219 = tpu.matmul %218, %87, %cst_201 {dimension_numbers = #tpu.dot_dimension_numbers<[1], [0], [0], [1], [0, 0, 1, 1], [], []>} : vector<8x32xbf16>, vector<32x16xbf16>, vector<8x16xf32> -> vector<8x16xf32>
    %220 = arith.truncf %219 : vector<8x16xf32> to vector<8x16xbf16>
    %c9_202 = arith.constant 9 : index
    %c0_203 = arith.constant 0 : index
    %c0_204 = arith.constant 0 : index
    %221 = vector.load %arg14[%c9_202, %c0_203, %c0_204] : memref<24x16x256xbf16, #tpu.memory_space<vmem>>, vector<1x16x256xbf16>
    %222 = vector.shape_cast %221 : vector<1x16x256xbf16> to vector<16x256xbf16>
    %cst_205 = arith.constant dense<0.000000e+00> : vector<8x256xf32>
    %223 = tpu.matmul %220, %222, %cst_205 {dimension_numbers = #tpu.dot_dimension_numbers<[1], [0], [0], [1], [0, 0, 1, 1], [], []>} : vector<8x16xbf16>, vector<16x256xbf16>, vector<8x256xf32> -> vector<8x256xf32>
    %224 = arith.addf %216, %223 : vector<8x256xf32>
    %c10 = arith.constant 10 : index
    %c0_206 = arith.constant 0 : index
    %c0_207 = arith.constant 0 : index
    %225 = vector.load %arg12[%c10, %c0_206, %c0_207] : memref<16x8x32xbf16, #tpu.memory_space<vmem>>, vector<1x8x32xbf16>
    %226 = vector.shape_cast %225 : vector<1x8x32xbf16> to vector<8x32xbf16>
    %cst_208 = arith.constant dense<0.000000e+00> : vector<8x16xf32>
    %227 = tpu.matmul %226, %87, %cst_208 {dimension_numbers = #tpu.dot_dimension_numbers<[1], [0], [0], [1], [0, 0, 1, 1], [], []>} : vector<8x32xbf16>, vector<32x16xbf16>, vector<8x16xf32> -> vector<8x16xf32>
    %228 = arith.truncf %227 : vector<8x16xf32> to vector<8x16xbf16>
    %c10_209 = arith.constant 10 : index
    %c0_210 = arith.constant 0 : index
    %c0_211 = arith.constant 0 : index
    %229 = vector.load %arg14[%c10_209, %c0_210, %c0_211] : memref<24x16x256xbf16, #tpu.memory_space<vmem>>, vector<1x16x256xbf16>
    %230 = vector.shape_cast %229 : vector<1x16x256xbf16> to vector<16x256xbf16>
    %cst_212 = arith.constant dense<0.000000e+00> : vector<8x256xf32>
    %231 = tpu.matmul %228, %230, %cst_212 {dimension_numbers = #tpu.dot_dimension_numbers<[1], [0], [0], [1], [0, 0, 1, 1], [], []>} : vector<8x16xbf16>, vector<16x256xbf16>, vector<8x256xf32> -> vector<8x256xf32>
    %232 = arith.addf %224, %231 : vector<8x256xf32>
    %c11 = arith.constant 11 : index
    %c0_213 = arith.constant 0 : index
    %c0_214 = arith.constant 0 : index
    %233 = vector.load %arg12[%c11, %c0_213, %c0_214] : memref<16x8x32xbf16, #tpu.memory_space<vmem>>, vector<1x8x32xbf16>
    %234 = vector.shape_cast %233 : vector<1x8x32xbf16> to vector<8x32xbf16>
    %cst_215 = arith.constant dense<0.000000e+00> : vector<8x16xf32>
    %235 = tpu.matmul %234, %87, %cst_215 {dimension_numbers = #tpu.dot_dimension_numbers<[1], [0], [0], [1], [0, 0, 1, 1], [], []>} : vector<8x32xbf16>, vector<32x16xbf16>, vector<8x16xf32> -> vector<8x16xf32>
    %236 = arith.truncf %235 : vector<8x16xf32> to vector<8x16xbf16>
    %c11_216 = arith.constant 11 : index
    %c0_217 = arith.constant 0 : index
    %c0_218 = arith.constant 0 : index
    %237 = vector.load %arg14[%c11_216, %c0_217, %c0_218] : memref<24x16x256xbf16, #tpu.memory_space<vmem>>, vector<1x16x256xbf16>
    %238 = vector.shape_cast %237 : vector<1x16x256xbf16> to vector<16x256xbf16>
    %cst_219 = arith.constant dense<0.000000e+00> : vector<8x256xf32>
    %239 = tpu.matmul %236, %238, %cst_219 {dimension_numbers = #tpu.dot_dimension_numbers<[1], [0], [0], [1], [0, 0, 1, 1], [], []>} : vector<8x16xbf16>, vector<16x256xbf16>, vector<8x256xf32> -> vector<8x256xf32>
    %240 = arith.addf %232, %239 : vector<8x256xf32>
    %c12 = arith.constant 12 : index
    %c0_220 = arith.constant 0 : index
    %c0_221 = arith.constant 0 : index
    %241 = vector.load %arg12[%c12, %c0_220, %c0_221] : memref<16x8x32xbf16, #tpu.memory_space<vmem>>, vector<1x8x32xbf16>
    %242 = vector.shape_cast %241 : vector<1x8x32xbf16> to vector<8x32xbf16>
    %cst_222 = arith.constant dense<0.000000e+00> : vector<8x16xf32>
    %243 = tpu.matmul %242, %87, %cst_222 {dimension_numbers = #tpu.dot_dimension_numbers<[1], [0], [0], [1], [0, 0, 1, 1], [], []>} : vector<8x32xbf16>, vector<32x16xbf16>, vector<8x16xf32> -> vector<8x16xf32>
    %244 = arith.truncf %243 : vector<8x16xf32> to vector<8x16xbf16>
    %c12_223 = arith.constant 12 : index
    %c0_224 = arith.constant 0 : index
    %c0_225 = arith.constant 0 : index
    %245 = vector.load %arg14[%c12_223, %c0_224, %c0_225] : memref<24x16x256xbf16, #tpu.memory_space<vmem>>, vector<1x16x256xbf16>
    %246 = vector.shape_cast %245 : vector<1x16x256xbf16> to vector<16x256xbf16>
    %cst_226 = arith.constant dense<0.000000e+00> : vector<8x256xf32>
    %247 = tpu.matmul %244, %246, %cst_226 {dimension_numbers = #tpu.dot_dimension_numbers<[1], [0], [0], [1], [0, 0, 1, 1], [], []>} : vector<8x16xbf16>, vector<16x256xbf16>, vector<8x256xf32> -> vector<8x256xf32>
    %248 = arith.addf %240, %247 : vector<8x256xf32>
    %c13 = arith.constant 13 : index
    %c0_227 = arith.constant 0 : index
    %c0_228 = arith.constant 0 : index
    %249 = vector.load %arg12[%c13, %c0_227, %c0_228] : memref<16x8x32xbf16, #tpu.memory_space<vmem>>, vector<1x8x32xbf16>
    %250 = vector.shape_cast %249 : vector<1x8x32xbf16> to vector<8x32xbf16>
    %cst_229 = arith.constant dense<0.000000e+00> : vector<8x16xf32>
    %251 = tpu.matmul %250, %87, %cst_229 {dimension_numbers = #tpu.dot_dimension_numbers<[1], [0], [0], [1], [0, 0, 1, 1], [], []>} : vector<8x32xbf16>, vector<32x16xbf16>, vector<8x16xf32> -> vector<8x16xf32>
    %252 = arith.truncf %251 : vector<8x16xf32> to vector<8x16xbf16>
    %c13_230 = arith.constant 13 : index
    %c0_231 = arith.constant 0 : index
    %c0_232 = arith.constant 0 : index
    %253 = vector.load %arg14[%c13_230, %c0_231, %c0_232] : memref<24x16x256xbf16, #tpu.memory_space<vmem>>, vector<1x16x256xbf16>
    %254 = vector.shape_cast %253 : vector<1x16x256xbf16> to vector<16x256xbf16>
    %cst_233 = arith.constant dense<0.000000e+00> : vector<8x256xf32>
    %255 = tpu.matmul %252, %254, %cst_233 {dimension_numbers = #tpu.dot_dimension_numbers<[1], [0], [0], [1], [0, 0, 1, 1], [], []>} : vector<8x16xbf16>, vector<16x256xbf16>, vector<8x256xf32> -> vector<8x256xf32>
    %256 = arith.addf %248, %255 : vector<8x256xf32>
    %c14 = arith.constant 14 : index
    %c0_234 = arith.constant 0 : index
    %c0_235 = arith.constant 0 : index
    %257 = vector.load %arg12[%c14, %c0_234, %c0_235] : memref<16x8x32xbf16, #tpu.memory_space<vmem>>, vector<1x8x32xbf16>
    %258 = vector.shape_cast %257 : vector<1x8x32xbf16> to vector<8x32xbf16>
    %cst_236 = arith.constant dense<0.000000e+00> : vector<8x16xf32>
    %259 = tpu.matmul %258, %87, %cst_236 {dimension_numbers = #tpu.dot_dimension_numbers<[1], [0], [0], [1], [0, 0, 1, 1], [], []>} : vector<8x32xbf16>, vector<32x16xbf16>, vector<8x16xf32> -> vector<8x16xf32>
    %260 = arith.truncf %259 : vector<8x16xf32> to vector<8x16xbf16>
    %c14_237 = arith.constant 14 : index
    %c0_238 = arith.constant 0 : index
    %c0_239 = arith.constant 0 : index
    %261 = vector.load %arg14[%c14_237, %c0_238, %c0_239] : memref<24x16x256xbf16, #tpu.memory_space<vmem>>, vector<1x16x256xbf16>
    %262 = vector.shape_cast %261 : vector<1x16x256xbf16> to vector<16x256xbf16>
    %cst_240 = arith.constant dense<0.000000e+00> : vector<8x256xf32>
    %263 = tpu.matmul %260, %262, %cst_240 {dimension_numbers = #tpu.dot_dimension_numbers<[1], [0], [0], [1], [0, 0, 1, 1], [], []>} : vector<8x16xbf16>, vector<16x256xbf16>, vector<8x256xf32> -> vector<8x256xf32>
    %264 = arith.addf %256, %263 : vector<8x256xf32>
    %c15 = arith.constant 15 : index
    %c0_241 = arith.constant 0 : index
    %c0_242 = arith.constant 0 : index
    %265 = vector.load %arg12[%c15, %c0_241, %c0_242] : memref<16x8x32xbf16, #tpu.memory_space<vmem>>, vector<1x8x32xbf16>
    %266 = vector.shape_cast %265 : vector<1x8x32xbf16> to vector<8x32xbf16>
    %cst_243 = arith.constant dense<0.000000e+00> : vector<8x16xf32>
    %267 = tpu.matmul %266, %87, %cst_243 {dimension_numbers = #tpu.dot_dimension_numbers<[1], [0], [0], [1], [0, 0, 1, 1], [], []>} : vector<8x32xbf16>, vector<32x16xbf16>, vector<8x16xf32> -> vector<8x16xf32>
    %268 = arith.truncf %267 : vector<8x16xf32> to vector<8x16xbf16>
    %c15_244 = arith.constant 15 : index
    %c0_245 = arith.constant 0 : index
    %c0_246 = arith.constant 0 : index
    %269 = vector.load %arg14[%c15_244, %c0_245, %c0_246] : memref<24x16x256xbf16, #tpu.memory_space<vmem>>, vector<1x16x256xbf16>
    %270 = vector.shape_cast %269 : vector<1x16x256xbf16> to vector<16x256xbf16>
    %cst_247 = arith.constant dense<0.000000e+00> : vector<8x256xf32>
    %271 = tpu.matmul %268, %270, %cst_247 {dimension_numbers = #tpu.dot_dimension_numbers<[1], [0], [0], [1], [0, 0, 1, 1], [], []>} : vector<8x16xbf16>, vector<16x256xbf16>, vector<8x256xf32> -> vector<8x256xf32>
    %272 = arith.addf %264, %271 : vector<8x256xf32>
    %c0_248 = arith.constant 0 : index
    %c0_249 = arith.constant 0 : index
    %c0_250 = arith.constant 0 : index
    %273 = vector.load %arg13[%c0_248, %c0_249, %c0_250] : memref<8x8x16xbf16, #tpu.memory_space<vmem>>, vector<1x8x16xbf16>
    %274 = vector.shape_cast %273 : vector<1x8x16xbf16> to vector<8x16xbf16>
    %cst_251 = arith.constant dense<0.000000e+00> : vector<8x16xf32>
    %275 = tpu.matmul %274, %143, %cst_251 {dimension_numbers = #tpu.dot_dimension_numbers<[1], [0], [0], [1], [0, 0, 1, 1], [], []>} : vector<8x16xbf16>, vector<16x16xbf16>, vector<8x16xf32> -> vector<8x16xf32>
    %276 = arith.truncf %275 : vector<8x16xf32> to vector<8x16xbf16>
    %c16 = arith.constant 16 : index
    %c0_252 = arith.constant 0 : index
    %c0_253 = arith.constant 0 : index
    %277 = vector.load %arg14[%c16, %c0_252, %c0_253] : memref<24x16x256xbf16, #tpu.memory_space<vmem>>, vector<1x16x256xbf16>
    %278 = vector.shape_cast %277 : vector<1x16x256xbf16> to vector<16x256xbf16>
    %cst_254 = arith.constant dense<0.000000e+00> : vector<8x256xf32>
    %279 = tpu.matmul %276, %278, %cst_254 {dimension_numbers = #tpu.dot_dimension_numbers<[1], [0], [0], [1], [0, 0, 1, 1], [], []>} : vector<8x16xbf16>, vector<16x256xbf16>, vector<8x256xf32> -> vector<8x256xf32>
    %280 = arith.addf %272, %279 : vector<8x256xf32>
    %c1_255 = arith.constant 1 : index
    %c0_256 = arith.constant 0 : index
    %c0_257 = arith.constant 0 : index
    %281 = vector.load %arg13[%c1_255, %c0_256, %c0_257] : memref<8x8x16xbf16, #tpu.memory_space<vmem>>, vector<1x8x16xbf16>
    %282 = vector.shape_cast %281 : vector<1x8x16xbf16> to vector<8x16xbf16>
    %cst_258 = arith.constant dense<0.000000e+00> : vector<8x16xf32>
    %283 = tpu.matmul %282, %143, %cst_258 {dimension_numbers = #tpu.dot_dimension_numbers<[1], [0], [0], [1], [0, 0, 1, 1], [], []>} : vector<8x16xbf16>, vector<16x16xbf16>, vector<8x16xf32> -> vector<8x16xf32>
    %284 = arith.truncf %283 : vector<8x16xf32> to vector<8x16xbf16>
    %c17 = arith.constant 17 : index
    %c0_259 = arith.constant 0 : index
    %c0_260 = arith.constant 0 : index
    %285 = vector.load %arg14[%c17, %c0_259, %c0_260] : memref<24x16x256xbf16, #tpu.memory_space<vmem>>, vector<1x16x256xbf16>
    %286 = vector.shape_cast %285 : vector<1x16x256xbf16> to vector<16x256xbf16>
    %cst_261 = arith.constant dense<0.000000e+00> : vector<8x256xf32>
    %287 = tpu.matmul %284, %286, %cst_261 {dimension_numbers = #tpu.dot_dimension_numbers<[1], [0], [0], [1], [0, 0, 1, 1], [], []>} : vector<8x16xbf16>, vector<16x256xbf16>, vector<8x256xf32> -> vector<8x256xf32>
    %288 = arith.addf %280, %287 : vector<8x256xf32>
    %c2_262 = arith.constant 2 : index
    %c0_263 = arith.constant 0 : index
    %c0_264 = arith.constant 0 : index
    %289 = vector.load %arg13[%c2_262, %c0_263, %c0_264] : memref<8x8x16xbf16, #tpu.memory_space<vmem>>, vector<1x8x16xbf16>
    %290 = vector.shape_cast %289 : vector<1x8x16xbf16> to vector<8x16xbf16>
    %cst_265 = arith.constant dense<0.000000e+00> : vector<8x16xf32>
    %291 = tpu.matmul %290, %143, %cst_265 {dimension_numbers = #tpu.dot_dimension_numbers<[1], [0], [0], [1], [0, 0, 1, 1], [], []>} : vector<8x16xbf16>, vector<16x16xbf16>, vector<8x16xf32> -> vector<8x16xf32>
    %292 = arith.truncf %291 : vector<8x16xf32> to vector<8x16xbf16>
    %c18 = arith.constant 18 : index
    %c0_266 = arith.constant 0 : index
    %c0_267 = arith.constant 0 : index
    %293 = vector.load %arg14[%c18, %c0_266, %c0_267] : memref<24x16x256xbf16, #tpu.memory_space<vmem>>, vector<1x16x256xbf16>
    %294 = vector.shape_cast %293 : vector<1x16x256xbf16> to vector<16x256xbf16>
    %cst_268 = arith.constant dense<0.000000e+00> : vector<8x256xf32>
    %295 = tpu.matmul %292, %294, %cst_268 {dimension_numbers = #tpu.dot_dimension_numbers<[1], [0], [0], [1], [0, 0, 1, 1], [], []>} : vector<8x16xbf16>, vector<16x256xbf16>, vector<8x256xf32> -> vector<8x256xf32>
    %296 = arith.addf %288, %295 : vector<8x256xf32>
    %c3_269 = arith.constant 3 : index
    %c0_270 = arith.constant 0 : index
    %c0_271 = arith.constant 0 : index
    %297 = vector.load %arg13[%c3_269, %c0_270, %c0_271] : memref<8x8x16xbf16, #tpu.memory_space<vmem>>, vector<1x8x16xbf16>
    %298 = vector.shape_cast %297 : vector<1x8x16xbf16> to vector<8x16xbf16>
    %cst_272 = arith.constant dense<0.000000e+00> : vector<8x16xf32>
    %299 = tpu.matmul %298, %143, %cst_272 {dimension_numbers = #tpu.dot_dimension_numbers<[1], [0], [0], [1], [0, 0, 1, 1], [], []>} : vector<8x16xbf16>, vector<16x16xbf16>, vector<8x16xf32> -> vector<8x16xf32>
    %300 = arith.truncf %299 : vector<8x16xf32> to vector<8x16xbf16>
    %c19 = arith.constant 19 : index
    %c0_273 = arith.constant 0 : index
    %c0_274 = arith.constant 0 : index
    %301 = vector.load %arg14[%c19, %c0_273, %c0_274] : memref<24x16x256xbf16, #tpu.memory_space<vmem>>, vector<1x16x256xbf16>
    %302 = vector.shape_cast %301 : vector<1x16x256xbf16> to vector<16x256xbf16>
    %cst_275 = arith.constant dense<0.000000e+00> : vector<8x256xf32>
    %303 = tpu.matmul %300, %302, %cst_275 {dimension_numbers = #tpu.dot_dimension_numbers<[1], [0], [0], [1], [0, 0, 1, 1], [], []>} : vector<8x16xbf16>, vector<16x256xbf16>, vector<8x256xf32> -> vector<8x256xf32>
    %304 = arith.addf %296, %303 : vector<8x256xf32>
    %c4_276 = arith.constant 4 : index
    %c0_277 = arith.constant 0 : index
    %c0_278 = arith.constant 0 : index
    %305 = vector.load %arg13[%c4_276, %c0_277, %c0_278] : memref<8x8x16xbf16, #tpu.memory_space<vmem>>, vector<1x8x16xbf16>
    %306 = vector.shape_cast %305 : vector<1x8x16xbf16> to vector<8x16xbf16>
    %cst_279 = arith.constant dense<0.000000e+00> : vector<8x16xf32>
    %307 = tpu.matmul %306, %143, %cst_279 {dimension_numbers = #tpu.dot_dimension_numbers<[1], [0], [0], [1], [0, 0, 1, 1], [], []>} : vector<8x16xbf16>, vector<16x16xbf16>, vector<8x16xf32> -> vector<8x16xf32>
    %308 = arith.truncf %307 : vector<8x16xf32> to vector<8x16xbf16>
    %c20 = arith.constant 20 : index
    %c0_280 = arith.constant 0 : index
    %c0_281 = arith.constant 0 : index
    %309 = vector.load %arg14[%c20, %c0_280, %c0_281] : memref<24x16x256xbf16, #tpu.memory_space<vmem>>, vector<1x16x256xbf16>
    %310 = vector.shape_cast %309 : vector<1x16x256xbf16> to vector<16x256xbf16>
    %cst_282 = arith.constant dense<0.000000e+00> : vector<8x256xf32>
    %311 = tpu.matmul %308, %310, %cst_282 {dimension_numbers = #tpu.dot_dimension_numbers<[1], [0], [0], [1], [0, 0, 1, 1], [], []>} : vector<8x16xbf16>, vector<16x256xbf16>, vector<8x256xf32> -> vector<8x256xf32>
    %312 = arith.addf %304, %311 : vector<8x256xf32>
    %c5_283 = arith.constant 5 : index
    %c0_284 = arith.constant 0 : index
    %c0_285 = arith.constant 0 : index
    %313 = vector.load %arg13[%c5_283, %c0_284, %c0_285] : memref<8x8x16xbf16, #tpu.memory_space<vmem>>, vector<1x8x16xbf16>
    %314 = vector.shape_cast %313 : vector<1x8x16xbf16> to vector<8x16xbf16>
    %cst_286 = arith.constant dense<0.000000e+00> : vector<8x16xf32>
    %315 = tpu.matmul %314, %143, %cst_286 {dimension_numbers = #tpu.dot_dimension_numbers<[1], [0], [0], [1], [0, 0, 1, 1], [], []>} : vector<8x16xbf16>, vector<16x16xbf16>, vector<8x16xf32> -> vector<8x16xf32>
    %316 = arith.truncf %315 : vector<8x16xf32> to vector<8x16xbf16>
    %c21 = arith.constant 21 : index
    %c0_287 = arith.constant 0 : index
    %c0_288 = arith.constant 0 : index
    %317 = vector.load %arg14[%c21, %c0_287, %c0_288] : memref<24x16x256xbf16, #tpu.memory_space<vmem>>, vector<1x16x256xbf16>
    %318 = vector.shape_cast %317 : vector<1x16x256xbf16> to vector<16x256xbf16>
    %cst_289 = arith.constant dense<0.000000e+00> : vector<8x256xf32>
    %319 = tpu.matmul %316, %318, %cst_289 {dimension_numbers = #tpu.dot_dimension_numbers<[1], [0], [0], [1], [0, 0, 1, 1], [], []>} : vector<8x16xbf16>, vector<16x256xbf16>, vector<8x256xf32> -> vector<8x256xf32>
    %320 = arith.addf %312, %319 : vector<8x256xf32>
    %c6_290 = arith.constant 6 : index
    %c0_291 = arith.constant 0 : index
    %c0_292 = arith.constant 0 : index
    %321 = vector.load %arg13[%c6_290, %c0_291, %c0_292] : memref<8x8x16xbf16, #tpu.memory_space<vmem>>, vector<1x8x16xbf16>
    %322 = vector.shape_cast %321 : vector<1x8x16xbf16> to vector<8x16xbf16>
    %cst_293 = arith.constant dense<0.000000e+00> : vector<8x16xf32>
    %323 = tpu.matmul %322, %143, %cst_293 {dimension_numbers = #tpu.dot_dimension_numbers<[1], [0], [0], [1], [0, 0, 1, 1], [], []>} : vector<8x16xbf16>, vector<16x16xbf16>, vector<8x16xf32> -> vector<8x16xf32>
    %324 = arith.truncf %323 : vector<8x16xf32> to vector<8x16xbf16>
    %c22 = arith.constant 22 : index
    %c0_294 = arith.constant 0 : index
    %c0_295 = arith.constant 0 : index
    %325 = vector.load %arg14[%c22, %c0_294, %c0_295] : memref<24x16x256xbf16, #tpu.memory_space<vmem>>, vector<1x16x256xbf16>
    %326 = vector.shape_cast %325 : vector<1x16x256xbf16> to vector<16x256xbf16>
    %cst_296 = arith.constant dense<0.000000e+00> : vector<8x256xf32>
    %327 = tpu.matmul %324, %326, %cst_296 {dimension_numbers = #tpu.dot_dimension_numbers<[1], [0], [0], [1], [0, 0, 1, 1], [], []>} : vector<8x16xbf16>, vector<16x256xbf16>, vector<8x256xf32> -> vector<8x256xf32>
    %328 = arith.addf %320, %327 : vector<8x256xf32>
    %c7_297 = arith.constant 7 : index
    %c0_298 = arith.constant 0 : index
    %c0_299 = arith.constant 0 : index
    %329 = vector.load %arg13[%c7_297, %c0_298, %c0_299] : memref<8x8x16xbf16, #tpu.memory_space<vmem>>, vector<1x8x16xbf16>
    %330 = vector.shape_cast %329 : vector<1x8x16xbf16> to vector<8x16xbf16>
    %cst_300 = arith.constant dense<0.000000e+00> : vector<8x16xf32>
    %331 = tpu.matmul %330, %143, %cst_300 {dimension_numbers = #tpu.dot_dimension_numbers<[1], [0], [0], [1], [0, 0, 1, 1], [], []>} : vector<8x16xbf16>, vector<16x16xbf16>, vector<8x16xf32> -> vector<8x16xf32>
    %332 = arith.truncf %331 : vector<8x16xf32> to vector<8x16xbf16>
    %c23 = arith.constant 23 : index
    %c0_301 = arith.constant 0 : index
    %c0_302 = arith.constant 0 : index
    %333 = vector.load %arg14[%c23, %c0_301, %c0_302] : memref<24x16x256xbf16, #tpu.memory_space<vmem>>, vector<1x16x256xbf16>
    %334 = vector.shape_cast %333 : vector<1x16x256xbf16> to vector<16x256xbf16>
    %cst_303 = arith.constant dense<0.000000e+00> : vector<8x256xf32>
    %335 = tpu.matmul %332, %334, %cst_303 {dimension_numbers = #tpu.dot_dimension_numbers<[1], [0], [0], [1], [0, 0, 1, 1], [], []>} : vector<8x16xbf16>, vector<16x256xbf16>, vector<8x256xf32> -> vector<8x256xf32>
    %336 = arith.addf %328, %335 : vector<8x256xf32>
    %c0_304 = arith.constant 0 : index
    %c0_305 = arith.constant 0 : index
    %337 = vector.load %arg15[%c0_304, %c0_305] : memref<1x256xf32, #tpu.memory_space<vmem>>, vector<1x256xf32>
    %338 = vector.broadcast %337 : vector<1x256xf32> to vector<8x256xf32>
    %339 = arith.addf %336, %338 : vector<8x256xf32>
    %cst_306 = arith.constant 0.000000e+00 : f32
    %340 = vector.broadcast %cst_306 : f32 to vector<8x256xf32>
    %341 = arith.maximumf %339, %340 : vector<8x256xf32>
    %342 = arith.truncf %341 : vector<8x256xf32> to vector<8x256xbf16>
    %c0_307 = arith.constant 0 : index
    %c0_308 = arith.constant 0 : index
    %343 = vector.load %arg16[%c0_307, %c0_308] : memref<256x128xbf16, #tpu.memory_space<vmem>>, vector<256x128xbf16>
    %cst_309 = arith.constant dense<0.000000e+00> : vector<8x128xf32>
    %344 = tpu.matmul %342, %343, %cst_309 {dimension_numbers = #tpu.dot_dimension_numbers<[1], [0], [0], [1], [0, 0, 1, 1], [], []>} : vector<8x256xbf16>, vector<256x128xbf16>, vector<8x128xf32> -> vector<8x128xf32>
    %c0_310 = arith.constant 0 : index
    %c0_311 = arith.constant 0 : index
    %345 = vector.load %arg17[%c0_310, %c0_311] : memref<1x128xf32, #tpu.memory_space<vmem>>, vector<1x128xf32>
    %346 = vector.broadcast %345 : vector<1x128xf32> to vector<8x128xf32>
    %347 = arith.addf %344, %346 : vector<8x128xf32>
    %c0_312 = arith.constant 0 : index
    %c0_313 = arith.constant 0 : index
    %348 = vector.load %arg18[%c0_312, %c0_313] : memref<8x128xf32, #tpu.memory_space<vmem>>, vector<8x128xf32>
    tpu.vector_store %arg18[%c0_312, %c0_313], %347 {strides = array<i32>} : memref<8x128xf32, #tpu.memory_space<vmem>>, vector<8x128xf32>,
    return
  }
}

</mosaic_0001>

<llo_original>
// kernel: ppo_multimodal_forward.1
$region0: #{ppo_multimodal_forward.1}
  #allocation0 [shape = 'u32[]', space=smem, size = 0x4, offset = 0x4, fixed_abs, tag = 'smem constant byte address 0x4 - core index']
  #allocation1 [shape = 'u32[72,128]{1,0:T(1,128)}', space=vmem, size = 0x9000, scoped, tag = 'internal scratch']
  %s0 = inlined_call_operand.vmem [shape: bf16[128,36], index: 0, kind: input, shape index: {}]
  %s1 = inlined_call_operand.vmem [shape: bf16[32,10], index: 1, kind: input, shape index: {}]
  %s2 = inlined_call_operand.vmem [shape: bf16[36,8], index: 2, kind: input, shape index: {}]
  %s3 = inlined_call_operand.vmem [shape: f32[1,8], index: 3, kind: input, shape index: {}]
  %s4 = inlined_call_operand.vmem [shape: bf16[9,8,16], index: 4, kind: input, shape index: {}]
  %s5 = inlined_call_operand.vmem [shape: f32[1,16], index: 5, kind: input, shape index: {}]
  %s6 = inlined_call_operand.vmem [shape: bf16[10,8], index: 6, kind: input, shape index: {}]
  %s7 = inlined_call_operand.vmem [shape: f32[1,8], index: 7, kind: input, shape index: {}]
  %s8 = inlined_call_operand.vmem [shape: bf16[5,8,16], index: 8, kind: input, shape index: {}]
  %s9 = inlined_call_operand.vmem [shape: f32[1,16], index: 9, kind: input, shape index: {}]
  %s10 = inlined_call_operand.vmem [shape: bf16[9,32,128], index: 10, kind: input, shape index: {}]
  %s11 = inlined_call_operand.vmem [shape: bf16[5,16,32], index: 11, kind: input, shape index: {}]
  %s12 = inlined_call_operand.vmem [shape: bf16[16,8,32], index: 12, kind: input, shape index: {}]
  %s13 = inlined_call_operand.vmem [shape: bf16[8,8,16], index: 13, kind: input, shape index: {}]
  %s14 = inlined_call_operand.vmem [shape: bf16[24,16,256], index: 14, kind: input, shape index: {}]
  %s15 = inlined_call_operand.vmem [shape: f32[1,256], index: 15, kind: input, shape index: {}]
  %s16 = inlined_call_operand.vmem [shape: bf16[256,128], index: 16, kind: input, shape index: {}]
  %s17 = inlined_call_operand.vmem [shape: f32[1,128], index: 17, kind: input, shape index: {}]
  %s18 = inlined_call_operand.vmem [shape: f32[8,128], index: 18, kind: output, shape index: {}]
  %s19 = sld [smem:[#allocation0]]
  $region82: #{ppo_multimodal_forward.1} parent=0
    _
  %s21 = ssub.s32 1, %s19
  %s22 = scalar_select 0, %s21, %s19
  // Predicated region
  $region2: #{ppo_multimodal_forward.1} parent=0 // pred_check
    _
  $region3: #{ppo_multimodal_forward.1} parent=0 // pred_check_branch
    %24 = sbr.rel (0) target = $region5
  $region4: #{ppo_multimodal_forward.1} parent=0 // pred_region
    _
  $region5: #{ppo_multimodal_forward.1} parent=0 // pred_fallthru
    _
  // Predicated region
  $region6: #{ppo_multimodal_forward.1} parent=0 // pred_check
    _
  $region7: #{ppo_multimodal_forward.1} parent=0 // pred_check_branch
    %26 = sbr.rel (0) target = $region9
  $region8: #{ppo_multimodal_forward.1} parent=0 // pred_region
    _
  $region9: #{ppo_multimodal_forward.1} parent=0 // pred_fallthru
    _
  // Predicated region
  $region10: #{ppo_multimodal_forward.1} parent=0 // pred_check
    _
  $region11: #{ppo_multimodal_forward.1} parent=0 // pred_check_branch
    %28 = sbr.rel (0) target = $region13
  $region12: #{ppo_multimodal_forward.1} parent=0 // pred_region
    _
  $region13: #{ppo_multimodal_forward.1} parent=0 // pred_fallthru
    _
  // Predicated region
  $region14: #{ppo_multimodal_forward.1} parent=0 // pred_check
    _
  $region15: #{ppo_multimodal_forward.1} parent=0 // pred_check_branch
    %30 = sbr.rel (0) target = $region17
  $region16: #{ppo_multimodal_forward.1} parent=0 // pred_region
    _
  $region17: #{ppo_multimodal_forward.1} parent=0 // pred_fallthru
    _
  // Predicated region
  $region18: #{ppo_multimodal_forward.1} parent=0 // pred_check
    _
  $region19: #{ppo_multimodal_forward.1} parent=0 // pred_check_branch
    %32 = sbr.rel (0) target = $region21
  $region20: #{ppo_multimodal_forward.1} parent=0 // pred_region
    _
  $region21: #{ppo_multimodal_forward.1} parent=0 // pred_fallthru
    _
  // Predicated region
  $region22: #{ppo_multimodal_forward.1} parent=0 // pred_check
    _
  $region23: #{ppo_multimodal_forward.1} parent=0 // pred_check_branch
    %34 = sbr.rel (0) target = $region25
  $region24: #{ppo_multimodal_forward.1} parent=0 // pred_region
    _
  $region25: #{ppo_multimodal_forward.1} parent=0 // pred_fallthru
    _
  // Predicated region
  $region26: #{ppo_multimodal_forward.1} parent=0 // pred_check
    _
  $region27: #{ppo_multimodal_forward.1} parent=0 // pred_check_branch
    %36 = sbr.rel (0) target = $region29
  $region28: #{ppo_multimodal_forward.1} parent=0 // pred_region
    _
  $region29: #{ppo_multimodal_forward.1} parent=0 // pred_fallthru
    _
  // Predicated region
  $region30: #{ppo_multimodal_forward.1} parent=0 // pred_check
    _
  $region31: #{ppo_multimodal_forward.1} parent=0 // pred_check_branch
    %38 = sbr.rel (0) target = $region33
  $region32: #{ppo_multimodal_forward.1} parent=0 // pred_region
    _
  $region33: #{ppo_multimodal_forward.1} parent=0 // pred_fallthru
    _
  // Predicated region
  $region34: #{ppo_multimodal_forward.1} parent=0 // pred_check
    _
  $region35: #{ppo_multimodal_forward.1} parent=0 // pred_check_branch
    %40 = sbr.rel (0) target = $region37
  $region36: #{ppo_multimodal_forward.1} parent=0 // pred_region
    _
  $region37: #{ppo_multimodal_forward.1} parent=0 // pred_fallthru
    _
  // Predicated region
  $region38: #{ppo_multimodal_forward.1} parent=0 // pred_check
    _
  $region39: #{ppo_multimodal_forward.1} parent=0 // pred_check_branch
    %42 = sbr.rel (0) target = $region41
  $region40: #{ppo_multimodal_forward.1} parent=0 // pred_region
    _
  $region41: #{ppo_multimodal_forward.1} parent=0 // pred_fallthru
    _
  // Predicated region
  $region42: #{ppo_multimodal_forward.1} parent=0 // pred_check
    _
  $region43: #{ppo_multimodal_forward.1} parent=0 // pred_check_branch
    %44 = sbr.rel (0) target = $region45
  $region44: #{ppo_multimodal_forward.1} parent=0 // pred_region
    _
  $region45: #{ppo_multimodal_forward.1} parent=0 // pred_fallthru
    _
  // Predicated region
  $region46: #{ppo_multimodal_forward.1} parent=0 // pred_check
    _
  $region47: #{ppo_multimodal_forward.1} parent=0 // pred_check_branch
    %46 = sbr.rel (0) target = $region49
  $region48: #{ppo_multimodal_forward.1} parent=0 // pred_region
    _
  $region49: #{ppo_multimodal_forward.1} parent=0 // pred_fallthru
    _
  // Predicated region
  $region50: #{ppo_multimodal_forward.1} parent=0 // pred_check
    _
  $region51: #{ppo_multimodal_forward.1} parent=0 // pred_check_branch
    %48 = sbr.rel (0) target = $region53
  $region52: #{ppo_multimodal_forward.1} parent=0 // pred_region
    _
  $region53: #{ppo_multimodal_forward.1} parent=0 // pred_fallthru
    _
  // Predicated region
  $region54: #{ppo_multimodal_forward.1} parent=0 // pred_check
    _
  $region55: #{ppo_multimodal_forward.1} parent=0 // pred_check_branch
    %50 = sbr.rel (0) target = $region57
  $region56: #{ppo_multimodal_forward.1} parent=0 // pred_region
    _
  $region57: #{ppo_multimodal_forward.1} parent=0 // pred_fallthru
    _
  // Predicated region
  $region58: #{ppo_multimodal_forward.1} parent=0 // pred_check
    _
  $region59: #{ppo_multimodal_forward.1} parent=0 // pred_check_branch
    %52 = sbr.rel (0) target = $region61
  $region60: #{ppo_multimodal_forward.1} parent=0 // pred_region
    _
  $region61: #{ppo_multimodal_forward.1} parent=0 // pred_fallthru
    _
  // Predicated region
  $region62: #{ppo_multimodal_forward.1} parent=0 // pred_check
    _
  $region63: #{ppo_multimodal_forward.1} parent=0 // pred_check_branch
    %54 = sbr.rel (0) target = $region65
  $region64: #{ppo_multimodal_forward.1} parent=0 // pred_region
    _
  $region65: #{ppo_multimodal_forward.1} parent=0 // pred_fallthru
    _
  // Predicated region
  $region66: #{ppo_multimodal_forward.1} parent=0 // pred_check
    _
  $region67: #{ppo_multimodal_forward.1} parent=0 // pred_check_branch
    %56 = sbr.rel (0) target = $region69
  $region68: #{ppo_multimodal_forward.1} parent=0 // pred_region
    _
  $region69: #{ppo_multimodal_forward.1} parent=0 // pred_fallthru
    _
  // Predicated region
  $region70: #{ppo_multimodal_forward.1} parent=0 // pred_check
    _
  $region71: #{ppo_multimodal_forward.1} parent=0 // pred_check_branch
    %58 = sbr.rel (0) target = $region73
  $region72: #{ppo_multimodal_forward.1} parent=0 // pred_region
    _
  $region73: #{ppo_multimodal_forward.1} parent=0 // pred_fallthru
    _
  %v60 = vld [vmem:[%s0] sm:$0xf]
  %v61 = vld [vmem:[%s0 + $0x4] sm:$0xf]
  %v62 = vld [vmem:[%s0 + $0x8] sm:$0xf]
  %v63 = vld [vmem:[%s0 + $0xc] sm:$0xf]
  %v64 = vld [vmem:[%s0 + $0x10] sm:$0xf]
  %v65 = vld [vmem:[%s0 + $0x14] sm:$0xf]
  %v66 = vld [vmem:[%s0 + $0x18] sm:$0xf]
  %v67 = vld [vmem:[%s0 + $0x1c] sm:$0xf]
  %v68 = vld [vmem:[%s0 + $0x20] sm:$0xf]
  %v69 = vld [vmem:[%s0 + $0x24] sm:$0xf]
  %v70 = vld [vmem:[%s0 + $0x28] sm:$0xf]
  %v71 = vld [vmem:[%s0 + $0x2c] sm:$0xf]
  %v72 = vld [vmem:[%s0 + $0x30] sm:$0xf]
  %v73 = vld [vmem:[%s0 + $0x34] sm:$0xf]
  %v74 = vld [vmem:[%s0 + $0x38] sm:$0xf]
  %v75 = vld [vmem:[%s0 + $0x3c] sm:$0xf]
  %v76 = vld [vmem:[%s2] sm:$0xf]
  %v77 = vld [vmem:[%s2 + $0x4] sm:$0xf]
  %v78 = vld [vmem:[%s2 + $0x8] sm:$0xf]
  %v79 = vld [vmem:[%s2 + $0xc] sm:$0xf]
  %v80 = vld [vmem:[%s2 + $0x10] sm:$0x3]
  %v81 = vld [vmem:[%s3] sm:$0x1]
  %v83 = vperm.slane %v81, 0
  %v101 = vunpack.c.l.b16 %v60
  %v102 = vunpack.c.l.b16 %v61
  %v103 = vunpack.c.l.b16 %v62
  %v104 = vunpack.c.l.b16 %v63
  %v105 = vunpack.c.l.b16 %v64
  %v106 = vunpack.c.l.b16 %v65
  %v107 = vunpack.c.l.b16 %v66
  %v108 = vunpack.c.l.b16 %v67
  %v109 = vunpack.c.l.b16 %v68
  %v110 = vunpack.c.l.b16 %v69
  %v111 = vunpack.c.l.b16 %v70
  %v112 = vunpack.c.l.b16 %v71
  %v113 = vunpack.c.l.b16 %v72
  %v114 = vunpack.c.l.b16 %v73
  %v115 = vunpack.c.l.b16 %v74
  %v116 = vunpack.c.l.b16 %v75
  %v117 = vpack.c.b16 %v102, %v101
  %v118 = vpack.c.b16 %v104, %v103
  %v119 = vpack.c.b16 %v106, %v105
  %v120 = vpack.c.b16 %v108, %v107
  %v121 = vpack.c.b16 %v110, %v109
  %v122 = vpack.c.b16 %v112, %v111
  %v123 = vpack.c.b16 %v114, %v113
  %v124 = vpack.c.b16 %v116, %v115
  %v130 = vunpack.c.l.b16 %v76
  %v131 = vunpack.c.l.b16 %v77
  %v132 = vunpack.c.l.b16 %v78
  %v133 = vunpack.c.l.b16 %v79
  %v134 = vunpack.c.l.b16 %v80
  %v135 = vpack.c.b16 %v131, %v130
  %v136 = vpack.c.b16 %v133, %v132
  %v137 = vpack.c.b16 %v134, %v134
  %vm140 = vcmask 293888
  %v142 = vsel %vm140, %v117, 0
  %v145 = vsel %vm140, %v118, 0
  %v148 = vsel %vm140, %v119, 0
  %v151 = vsel %vm140, %v120, 0
  %v154 = vsel %vm140, %v121, 0
  %v157 = vsel %vm140, %v122, 0
  %v160 = vsel %vm140, %v123, 0
  %v163 = vsel %vm140, %v124, 0
  %vm165 = vcmask 1041408
  %v167 = vsel %vm165, %v137, 0
  %169 = vmatpush.bf16.msra.mxu0 0
  %170 = vmatpush.bf16.msra.mxu0 0
  %171 = vmatpush.bf16.msra.mxu0 0
  %172 = vmatpush.bf16.msra.mxu0 0
  %173 = vmatpush.bf16.msra.mxu0 0
  %174 = vmatpush.bf16.msra.mxu0 %v167
  %175 = vmatpush.bf16.msra.mxu0 %v136
  %176 = vmatpush.bf16.msra.mxu0 %v135
  %177 = vmatmul.bf16.gmra.mxu0 %v142
  %v178 = vpop.f32.mrf.mxu0
  %v179 = vadd.f32 %v83, %v178
  %v180 = vpop.f32.mrf.mxu0
  %v181 = vadd.f32 %v83, %v180
  %182 = vmatmul.bf16.gmra.mxu0 %v145
  %v183 = vpop.f32.mrf.mxu0
  %v184 = vadd.f32 %v83, %v183
  %v185 = vpop.f32.mrf.mxu0
  %v186 = vadd.f32 %v83, %v185
  %187 = vmatmul.bf16.gmra.mxu0 %v148
  %v188 = vpop.f32.mrf.mxu0
  %v189 = vadd.f32 %v83, %v188
  %v190 = vpop.f32.mrf.mxu0
  %v191 = vadd.f32 %v83, %v190
  %192 = vmatmul.bf16.gmra.mxu0 %v151
  %v193 = vpop.f32.mrf.mxu0
  %v194 = vadd.f32 %v83, %v193
  %v195 = vpop.f32.mrf.mxu0
  %v196 = vadd.f32 %v83, %v195
  %197 = vmatmul.bf16.gmra.mxu0 %v154
  %v198 = vpop.f32.mrf.mxu0
  %v199 = vadd.f32 %v83, %v198
  %v200 = vpop.f32.mrf.mxu0
  %v201 = vadd.f32 %v83, %v200
  %202 = vmatmul.bf16.gmra.mxu0 %v157
  %v203 = vpop.f32.mrf.mxu0
  %v204 = vadd.f32 %v83, %v203
  %v205 = vpop.f32.mrf.mxu0
  %v206 = vadd.f32 %v83, %v205
  %207 = vmatmul.bf16.gmra.mxu0 %v160
  %v208 = vpop.f32.mrf.mxu0
  %v209 = vadd.f32 %v83, %v208
  %v210 = vpop.f32.mrf.mxu0
  %v211 = vadd.f32 %v83, %v210
  %212 = vmatmul.bf16.gmra.mxu0 %v163
  %v213 = vpop.f32.mrf.mxu0
  %v214 = vadd.f32 %v83, %v213
  %v215 = vpop.f32.mrf.mxu0
  %v216 = vadd.f32 %v83, %v215
  %217 = vdwg.mxu0
  %v218 = vmax.f32 %v179, 0.0
  %v219 = vmax.f32 %v181, 0.0
  %v220 = vmax.f32 %v184, 0.0
  %v221 = vmax.f32 %v186, 0.0
  %v222 = vmax.f32 %v189, 0.0
  %v223 = vmax.f32 %v191, 0.0
  %v224 = vmax.f32 %v194, 0.0
  %v225 = vmax.f32 %v196, 0.0
  %v226 = vmax.f32 %v199, 0.0
  %v227 = vmax.f32 %v201, 0.0
  %v228 = vmax.f32 %v204, 0.0
  %v229 = vmax.f32 %v206, 0.0
  %v230 = vmax.f32 %v209, 0.0
  %v231 = vmax.f32 %v211, 0.0
  %v232 = vmax.f32 %v214, 0.0
  %v233 = vmax.f32 %v216, 0.0
  %v234 = vpack.c.bf16 %v219, %v218
  %v235 = vpack.c.bf16 %v221, %v220
  %v236 = vpack.c.bf16 %v223, %v222
  %v237 = vpack.c.bf16 %v225, %v224
  %v238 = vpack.c.bf16 %v227, %v226
  %v239 = vpack.c.bf16 %v229, %v228
  %v240 = vpack.c.bf16 %v231, %v230
  %v241 = vpack.c.bf16 %v233, %v232
  %v242 = vld [vmem:[%s10] sm:$0xf]
  %v243 = vld [vmem:[%s10 + $0x4] sm:$0xf]
  %v244 = vld [vmem:[%s10 + $0x8] sm:$0xf]
  %v245 = vld [vmem:[%s10 + $0xc] sm:$0xf]
  %v250 = vunpack.c.l.b16 %v242
  %v251 = vunpack.c.l.b16 %v243
  %v252 = vunpack.c.l.b16 %v244
  %v253 = vunpack.c.l.b16 %v245
  %v254 = vpack.c.b16 %v251, %v250
  %v255 = vpack.c.b16 %v253, %v252
  %258 = vmatpush.bf16.msra.mxu0 %v241
  %259 = vmatpush.bf16.msra.mxu0 %v240
  %260 = vmatpush.bf16.msra.mxu0 %v239
  %261 = vmatpush.bf16.msra.mxu0 %v238
  %262 = vmatpush.bf16.msra.mxu0 %v237
  %263 = vmatpush.bf16.msra.mxu0 %v236
  %264 = vmatpush.bf16.msra.mxu0 %v235
  %265 = vmatpush.bf16.msra.mxu0 %v234
  %266 = vmatmul.bf16.gmra.mxu0 %v254
  %v267 = vpop.f32.mrf.mxu0
  %v268 = vadd.f32 0.0, %v267
  %v269 = vpop.f32.mrf.mxu0
  %v270 = vadd.f32 0.0, %v269
  %271 = vmatmul.bf16.gmra.mxu0 %v255
  %v272 = vpop.f32.mrf.mxu0
  %v273 = vadd.f32 0.0, %v272
  %v274 = vpop.f32.mrf.mxu0
  %v275 = vadd.f32 0.0, %v274
  %276 = vdwg.mxu0
  %v277 = vpack.c.bf16 %v270, %v268
  %v278 = vpack.c.bf16 %v275, %v273
  %v279 = vld [vmem:[%s4] sm:$0xf]
  %s280 = scalar_lea.vmem %s10, 16
  %v281 = vld [vmem:[%s280] sm:$0xf]
  %v282 = vld [vmem:[%s280 + $0x4] sm:$0xf]
  %v283 = vld [vmem:[%s280 + $0x8] sm:$0xf]
  %v284 = vld [vmem:[%s280 + $0xc] sm:$0xf]
  %v289 = vunpack.c.l.b16 %v281
  %v290 = vunpack.c.l.b16 %v282
  %v291 = vunpack.c.l.b16 %v283
  %v292 = vunpack.c.l.b16 %v284
  %v293 = vpack.c.b16 %v290, %v289
  %v294 = vpack.c.b16 %v292, %v291
  %297 = vmatpush.bf16.msra.mxu0 %v241
  %298 = vmatpush.bf16.msra.mxu0 %v240
  %299 = vmatpush.bf16.msra.mxu0 %v239
  %300 = vmatpush.bf16.msra.mxu0 %v238
  %301 = vmatpush.bf16.msra.mxu0 %v237
  %302 = vmatpush.bf16.msra.mxu0 %v236
  %303 = vmatpush.bf16.msra.mxu0 %v235
  %304 = vmatpush.bf16.msra.mxu0 %v234
  %305 = vmatmul.bf16.gmra.mxu0 %v293
  %v306 = vpop.f32.mrf.mxu0
  %v307 = vadd.f32 0.0, %v306
  %v308 = vpop.f32.mrf.mxu0
  %v309 = vadd.f32 0.0, %v308
  %310 = vmatmul.bf16.gmra.mxu0 %v294
  %v311 = vpop.f32.mrf.mxu0
  %v312 = vadd.f32 0.0, %v311
  %v313 = vpop.f32.mrf.mxu0
  %v314 = vadd.f32 0.0, %v313
  %315 = vdwg.mxu0
  %v316 = vpack.c.bf16 %v309, %v307
  %v317 = vpack.c.bf16 %v314, %v312
  %s318 = scalar_lea.vmem %s4, 4
  %v319 = vld [vmem:[%s318] sm:$0xf]
  %vm320 = vcmask 64512
  %v322 = vsel %vm320, %v316, 0
  %v325 = vsel %vm320, %v317, 0
  %vm327 = vcmask 1043456
  %v329 = vsel %vm327, %v319, 0
  %331 = vmatpush.bf16.msra.mxu0 0
  %332 = vmatpush.bf16.msra.mxu0 0
  %333 = vmatpush.bf16.msra.mxu0 0
  %334 = vmatpush.bf16.msra.mxu0 0
  %335 = vmatpush.bf16.msra.mxu0 0
  %336 = vmatpush.bf16.msra.mxu0 0
  %337 = vmatpush.bf16.msra.mxu0 0
  %338 = vmatpush.bf16.msra.mxu0 %v329
  %339 = vmatmul.bf16.gmra.mxu0 %v322
  %v340 = vpop.f32.mrf.mxu0
  %v341 = vadd.f32 0.0, %v340
  %v342 = vpop.f32.mrf.mxu0
  %v343 = vadd.f32 0.0, %v342
  %344 = vmatmul.bf16.gmra.mxu0 %v325
  %v345 = vpop.f32.mrf.mxu0
  %v346 = vadd.f32 0.0, %v345
  %v347 = vpop.f32.mrf.mxu0
  %v348 = vadd.f32 0.0, %v347
  %349 = vdwg.mxu0
  %v351 = vsel %vm320, %v277, 0
  %v354 = vsel %vm320, %v278, 0
  %v357 = vsel %vm327, %v279, 0
  %359 = vmatpush.bf16.msra.mxu0 0
  %360 = vmatpush.bf16.msra.mxu0 0
  %361 = vmatpush.bf16.msra.mxu0 0
  %362 = vmatpush.bf16.msra.mxu0 0
  %363 = vmatpush.bf16.msra.mxu0 0
  %364 = vmatpush.bf16.msra.mxu0 0
  %365 = vmatpush.bf16.msra.mxu0 0
  %366 = vmatpush.bf16.msra.mxu0 %v357
  %367 = vmatmul.bf16.gmra.mxu0 %v351
  %v368 = vpop.f32.mrf.mxu0
  %v369 = vadd.f32 %v341, %v368
  %v370 = vpop.f32.mrf.mxu0
  %v371 = vadd.f32 %v343, %v370
  %372 = vmatmul.bf16.gmra.mxu0 %v354
  %v373 = vpop.f32.mrf.mxu0
  %v374 = vadd.f32 %v346, %v373
  %v375 = vpop.f32.mrf.mxu0
  %v376 = vadd.f32 %v348, %v375
  %377 = vdwg.mxu0
  %s378 = scalar_lea.vmem %s10, 32
  %v379 = vld [vmem:[%s378] sm:$0xf]
  %v380 = vld [vmem:[%s378 + $0x4] sm:$0xf]
  %v381 = vld [vmem:[%s378 + $0x8] sm:$0xf]
  %v382 = vld [vmem:[%s378 + $0xc] sm:$0xf]
  %v387 = vunpack.c.l.b16 %v379
  %v388 = vunpack.c.l.b16 %v380
  %v389 = vunpack.c.l.b16 %v381
  %v390 = vunpack.c.l.b16 %v382
  %v391 = vpack.c.b16 %v388, %v387
  %v392 = vpack.c.b16 %v390, %v389
  %395 = vmatpush.bf16.msra.mxu0 %v241
  %396 = vmatpush.bf16.msra.mxu0 %v240
  %397 = vmatpush.bf16.msra.mxu0 %v239
  %398 = vmatpush.bf16.msra.mxu0 %v238
  %399 = vmatpush.bf16.msra.mxu0 %v237
  %400 = vmatpush.bf16.msra.mxu0 %v236
  %401 = vmatpush.bf16.msra.mxu0 %v235
  %402 = vmatpush.bf16.msra.mxu0 %v234
  %403 = vmatmul.bf16.gmra.mxu0 %v391
  %v404 = vpop.f32.mrf.mxu0
  %v405 = vadd.f32 0.0, %v404
  %v406 = vpop.f32.mrf.mxu0
  %v407 = vadd.f32 0.0, %v406
  %408 = vmatmul.bf16.gmra.mxu0 %v392
  %v409 = vpop.f32.mrf.mxu0
  %v410 = vadd.f32 0.0, %v409
  %v411 = vpop.f32.mrf.mxu0
  %v412 = vadd.f32 0.0, %v411
  %413 = vdwg.mxu0
  %v414 = vpack.c.bf16 %v407, %v405
  %v415 = vpack.c.bf16 %v412, %v410
  %s416 = scalar_lea.vmem %s4, 8
  %v417 = vld [vmem:[%s416] sm:$0xf]
  %v419 = vsel %vm320, %v414, 0
  %v422 = vsel %vm320, %v415, 0
  %v425 = vsel %vm327, %v417, 0
  %427 = vmatpush.bf16.msra.mxu0 0
  %428 = vmatpush.bf16.msra.mxu0 0
  %429 = vmatpush.bf16.msra.mxu0 0
  %430 = vmatpush.bf16.msra.mxu0 0
  %431 = vmatpush.bf16.msra.mxu0 0
  %432 = vmatpush.bf16.msra.mxu0 0
  %433 = vmatpush.bf16.msra.mxu0 0
  %434 = vmatpush.bf16.msra.mxu0 %v425
  %435 = vmatmul.bf16.gmra.mxu0 %v419
  %v436 = vpop.f32.mrf.mxu0
  %v437 = vadd.f32 0.0, %v436
  %v438 = vpop.f32.mrf.mxu0
  %v439 = vadd.f32 0.0, %v438
  %440 = vmatmul.bf16.gmra.mxu0 %v422
  %v441 = vpop.f32.mrf.mxu0
  %v442 = vadd.f32 0.0, %v441
  %v443 = vpop.f32.mrf.mxu0
  %v444 = vadd.f32 0.0, %v443
  %445 = vdwg.mxu0
  %v446 = vadd.f32 %v369, %v437
  %v447 = vadd.f32 %v371, %v439
  %v448 = vadd.f32 %v374, %v442
  %v449 = vadd.f32 %v376, %v444
  %s450 = scalar_lea.vmem %s10, 48
  %v451 = vld [vmem:[%s450] sm:$0xf]
  %v452 = vld [vmem:[%s450 + $0x4] sm:$0xf]
  %v453 = vld [vmem:[%s450 + $0x8] sm:$0xf]
  %v454 = vld [vmem:[%s450 + $0xc] sm:$0xf]
  %v459 = vunpack.c.l.b16 %v451
  %v460 = vunpack.c.l.b16 %v452
  %v461 = vunpack.c.l.b16 %v453
  %v462 = vunpack.c.l.b16 %v454
  %v463 = vpack.c.b16 %v460, %v459
  %v464 = vpack.c.b16 %v462, %v461
  %467 = vmatpush.bf16.msra.mxu0 %v241
  %468 = vmatpush.bf16.msra.mxu0 %v240
  %469 = vmatpush.bf16.msra.mxu0 %v239
  %470 = vmatpush.bf16.msra.mxu0 %v238
  %471 = vmatpush.bf16.msra.mxu0 %v237
  %472 = vmatpush.bf16.msra.mxu0 %v236
  %473 = vmatpush.bf16.msra.mxu0 %v235
  %474 = vmatpush.bf16.msra.mxu0 %v234
  %475 = vmatmul.bf16.gmra.mxu0 %v463
  %v476 = vpop.f32.mrf.mxu0
  %v477 = vadd.f32 0.0, %v476
  %v478 = vpop.f32.mrf.mxu0
  %v479 = vadd.f32 0.0, %v478
  %480 = vmatmul.bf16.gmra.mxu0 %v464
  %v481 = vpop.f32.mrf.mxu0
  %v482 = vadd.f32 0.0, %v481
  %v483 = vpop.f32.mrf.mxu0
  %v484 = vadd.f32 0.0, %v483
  %485 = vdwg.mxu0
  %v486 = vpack.c.bf16 %v479, %v477
  %v487 = vpack.c.bf16 %v484, %v482
  %s488 = scalar_lea.vmem %s4, 12
  %v489 = vld [vmem:[%s488] sm:$0xf]
  %v491 = vsel %vm320, %v486, 0
  %v494 = vsel %vm320, %v487, 0
  %v497 = vsel %vm327, %v489, 0
  %499 = vmatpush.bf16.msra.mxu0 0
  %500 = vmatpush.bf16.msra.mxu0 0
  %501 = vmatpush.bf16.msra.mxu0 0
  %502 = vmatpush.bf16.msra.mxu0 0
  %503 = vmatpush.bf16.msra.mxu0 0
  %504 = vmatpush.bf16.msra.mxu0 0
  %505 = vmatpush.bf16.msra.mxu0 0
  %506 = vmatpush.bf16.msra.mxu0 %v497
  %507 = vmatmul.bf16.gmra.mxu0 %v491
  %v508 = vpop.f32.mrf.mxu0
  %v509 = vadd.f32 0.0, %v508
  %v510 = vpop.f32.mrf.mxu0
  %v511 = vadd.f32 0.0, %v510
  %512 = vmatmul.bf16.gmra.mxu0 %v494
  %v513 = vpop.f32.mrf.mxu0
  %v514 = vadd.f32 0.0, %v513
  %v515 = vpop.f32.mrf.mxu0
  %v516 = vadd.f32 0.0, %v515
  %517 = vdwg.mxu0
  %v518 = vadd.f32 %v446, %v509
  %v519 = vadd.f32 %v447, %v511
  %v520 = vadd.f32 %v448, %v514
  %v521 = vadd.f32 %v449, %v516
  %s522 = scalar_lea.vmem %s10, 64
  %v523 = vld [vmem:[%s522] sm:$0xf]
  %v524 = vld [vmem:[%s522 + $0x4] sm:$0xf]
  %v525 = vld [vmem:[%s522 + $0x8] sm:$0xf]
  %v526 = vld [vmem:[%s522 + $0xc] sm:$0xf]
  %v531 = vunpack.c.l.b16 %v523
  %v532 = vunpack.c.l.b16 %v524
  %v533 = vunpack.c.l.b16 %v525
  %v534 = vunpack.c.l.b16 %v526
  %v535 = vpack.c.b16 %v532, %v531
  %v536 = vpack.c.b16 %v534, %v533
  %539 = vmatpush.bf16.msra.mxu0 %v241
  %540 = vmatpush.bf16.msra.mxu0 %v240
  %541 = vmatpush.bf16.msra.mxu0 %v239
  %542 = vmatpush.bf16.msra.mxu0 %v238
  %543 = vmatpush.bf16.msra.mxu0 %v237
  %544 = vmatpush.bf16.msra.mxu0 %v236
  %545 = vmatpush.bf16.msra.mxu0 %v235
  %546 = vmatpush.bf16.msra.mxu0 %v234
  %547 = vmatmul.bf16.gmra.mxu0 %v535
  %v548 = vpop.f32.mrf.mxu0
  %v549 = vadd.f32 0.0, %v548
  %v550 = vpop.f32.mrf.mxu0
  %v551 = vadd.f32 0.0, %v550
  %552 = vmatmul.bf16.gmra.mxu0 %v536
  %v553 = vpop.f32.mrf.mxu0
  %v554 = vadd.f32 0.0, %v553
  %v555 = vpop.f32.mrf.mxu0
  %v556 = vadd.f32 0.0, %v555
  %557 = vdwg.mxu0
  %v558 = vpack.c.bf16 %v551, %v549
  %v559 = vpack.c.bf16 %v556, %v554
  %s560 = scalar_lea.vmem %s4, 16
  %v561 = vld [vmem:[%s560] sm:$0xf]
  %v563 = vsel %vm320, %v558, 0
  %v566 = vsel %vm320, %v559, 0
  %v569 = vsel %vm327, %v561, 0
  %571 = vmatpush.bf16.msra.mxu0 0
  %572 = vmatpush.bf16.msra.mxu0 0
  %573 = vmatpush.bf16.msra.mxu0 0
  %574 = vmatpush.bf16.msra.mxu0 0
  %575 = vmatpush.bf16.msra.mxu0 0
  %576 = vmatpush.bf16.msra.mxu0 0
  %577 = vmatpush.bf16.msra.mxu0 0
  %578 = vmatpush.bf16.msra.mxu0 %v569
  %579 = vmatmul.bf16.gmra.mxu0 %v563
  %v580 = vpop.f32.mrf.mxu0
  %v581 = vadd.f32 0.0, %v580
  %v582 = vpop.f32.mrf.mxu0
  %v583 = vadd.f32 0.0, %v582
  %584 = vmatmul.bf16.gmra.mxu0 %v566
  %v585 = vpop.f32.mrf.mxu0
  %v586 = vadd.f32 0.0, %v585
  %v587 = vpop.f32.mrf.mxu0
  %v588 = vadd.f32 0.0, %v587
  %589 = vdwg.mxu0
  %v590 = vadd.f32 %v518, %v581
  %v591 = vadd.f32 %v519, %v583
  %v592 = vadd.f32 %v520, %v586
  %v593 = vadd.f32 %v521, %v588
  %s594 = scalar_lea.vmem %s10, 80
  %v595 = vld [vmem:[%s594] sm:$0xf]
  %v596 = vld [vmem:[%s594 + $0x4] sm:$0xf]
  %v597 = vld [vmem:[%s594 + $0x8] sm:$0xf]
  %v598 = vld [vmem:[%s594 + $0xc] sm:$0xf]
  %v603 = vunpack.c.l.b16 %v595
  %v604 = vunpack.c.l.b16 %v596
  %v605 = vunpack.c.l.b16 %v597
  %v606 = vunpack.c.l.b16 %v598
  %v607 = vpack.c.b16 %v604, %v603
  %v608 = vpack.c.b16 %v606, %v605
  %611 = vmatpush.bf16.msra.mxu0 %v241
  %612 = vmatpush.bf16.msra.mxu0 %v240
  %613 = vmatpush.bf16.msra.mxu0 %v239
  %614 = vmatpush.bf16.msra.mxu0 %v238
  %615 = vmatpush.bf16.msra.mxu0 %v237
  %616 = vmatpush.bf16.msra.mxu0 %v236
  %617 = vmatpush.bf16.msra.mxu0 %v235
  %618 = vmatpush.bf16.msra.mxu0 %v234
  %619 = vmatmul.bf16.gmra.mxu0 %v607
  %v620 = vpop.f32.mrf.mxu0
  %v621 = vadd.f32 0.0, %v620
  %v622 = vpop.f32.mrf.mxu0
  %v623 = vadd.f32 0.0, %v622
  %624 = vmatmul.bf16.gmra.mxu0 %v608
  %v625 = vpop.f32.mrf.mxu0
  %v626 = vadd.f32 0.0, %v625
  %v627 = vpop.f32.mrf.mxu0
  %v628 = vadd.f32 0.0, %v627
  %629 = vdwg.mxu0
  %v630 = vpack.c.bf16 %v623, %v621
  %v631 = vpack.c.bf16 %v628, %v626
  %s632 = scalar_lea.vmem %s4, 20
  %v633 = vld [vmem:[%s632] sm:$0xf]
  %v635 = vsel %vm320, %v630, 0
  %v638 = vsel %vm320, %v631, 0
  %v641 = vsel %vm327, %v633, 0
  %643 = vmatpush.bf16.msra.mxu0 0
  %644 = vmatpush.bf16.msra.mxu0 0
  %645 = vmatpush.bf16.msra.mxu0 0
  %646 = vmatpush.bf16.msra.mxu0 0
  %647 = vmatpush.bf16.msra.mxu0 0
  %648 = vmatpush.bf16.msra.mxu0 0
  %649 = vmatpush.bf16.msra.mxu0 0
  %650 = vmatpush.bf16.msra.mxu0 %v641
  %651 = vmatmul.bf16.gmra.mxu0 %v635
  %v652 = vpop.f32.mrf.mxu0
  %v653 = vadd.f32 0.0, %v652
  %v654 = vpop.f32.mrf.mxu0
  %v655 = vadd.f32 0.0, %v654
  %656 = vmatmul.bf16.gmra.mxu0 %v638
  %v657 = vpop.f32.mrf.mxu0
  %v658 = vadd.f32 0.0, %v657
  %v659 = vpop.f32.mrf.mxu0
  %v660 = vadd.f32 0.0, %v659
  %661 = vdwg.mxu0
  %v662 = vadd.f32 %v590, %v653
  %v663 = vadd.f32 %v591, %v655
  %v664 = vadd.f32 %v592, %v658
  %v665 = vadd.f32 %v593, %v660
  %s666 = scalar_lea.vmem %s10, 96
  %v667 = vld [vmem:[%s666] sm:$0xf]
  %v668 = vld [vmem:[%s666 + $0x4] sm:$0xf]
  %v669 = vld [vmem:[%s666 + $0x8] sm:$0xf]
  %v670 = vld [vmem:[%s666 + $0xc] sm:$0xf]
  %v675 = vunpack.c.l.b16 %v667
  %v676 = vunpack.c.l.b16 %v668
  %v677 = vunpack.c.l.b16 %v669
  %v678 = vunpack.c.l.b16 %v670
  %v679 = vpack.c.b16 %v676, %v675
  %v680 = vpack.c.b16 %v678, %v677
  %683 = vmatpush.bf16.msra.mxu0 %v241
  %684 = vmatpush.bf16.msra.mxu0 %v240
  %685 = vmatpush.bf16.msra.mxu0 %v239
  %686 = vmatpush.bf16.msra.mxu0 %v238
  %687 = vmatpush.bf16.msra.mxu0 %v237
  %688 = vmatpush.bf16.msra.mxu0 %v236
  %689 = vmatpush.bf16.msra.mxu0 %v235
  %690 = vmatpush.bf16.msra.mxu0 %v234
  %691 = vmatmul.bf16.gmra.mxu0 %v679
  %v692 = vpop.f32.mrf.mxu0
  %v693 = vadd.f32 0.0, %v692
  %v694 = vpop.f32.mrf.mxu0
  %v695 = vadd.f32 0.0, %v694
  %696 = vmatmul.bf16.gmra.mxu0 %v680
  %v697 = vpop.f32.mrf.mxu0
  %v698 = vadd.f32 0.0, %v697
  %v699 = vpop.f32.mrf.mxu0
  %v700 = vadd.f32 0.0, %v699
  %701 = vdwg.mxu0
  %v702 = vpack.c.bf16 %v695, %v693
  %v703 = vpack.c.bf16 %v700, %v698
  %s704 = scalar_lea.vmem %s4, 24
  %v705 = vld [vmem:[%s704] sm:$0xf]
  %v707 = vsel %vm320, %v702, 0
  %v710 = vsel %vm320, %v703, 0
  %v713 = vsel %vm327, %v705, 0
  %715 = vmatpush.bf16.msra.mxu0 0
  %716 = vmatpush.bf16.msra.mxu0 0
  %717 = vmatpush.bf16.msra.mxu0 0
  %718 = vmatpush.bf16.msra.mxu0 0
  %719 = vmatpush.bf16.msra.mxu0 0
  %720 = vmatpush.bf16.msra.mxu0 0
  %721 = vmatpush.bf16.msra.mxu0 0
  %722 = vmatpush.bf16.msra.mxu0 %v713
  %723 = vmatmul.bf16.gmra.mxu0 %v707
  %v724 = vpop.f32.mrf.mxu0
  %v725 = vadd.f32 0.0, %v724
  %v726 = vpop.f32.mrf.mxu0
  %v727 = vadd.f32 0.0, %v726
  %728 = vmatmul.bf16.gmra.mxu0 %v710
  %v729 = vpop.f32.mrf.mxu0
  %v730 = vadd.f32 0.0, %v729
  %v731 = vpop.f32.mrf.mxu0
  %v732 = vadd.f32 0.0, %v731
  %733 = vdwg.mxu0
  %v734 = vadd.f32 %v662, %v725
  %v735 = vadd.f32 %v663, %v727
  %v736 = vadd.f32 %v664, %v730
  %v737 = vadd.f32 %v665, %v732
  %s738 = scalar_lea.vmem %s10, 112
  %v739 = vld [vmem:[%s738] sm:$0xf]
  %v740 = vld [vmem:[%s738 + $0x4] sm:$0xf]
  %v741 = vld [vmem:[%s738 + $0x8] sm:$0xf]
  %v742 = vld [vmem:[%s738 + $0xc] sm:$0xf]
  %v747 = vunpack.c.l.b16 %v739
  %v748 = vunpack.c.l.b16 %v740
  %v749 = vunpack.c.l.b16 %v741
  %v750 = vunpack.c.l.b16 %v742
  %v751 = vpack.c.b16 %v748, %v747
  %v752 = vpack.c.b16 %v750, %v749
  %755 = vmatpush.bf16.msra.mxu0 %v241
  %756 = vmatpush.bf16.msra.mxu0 %v240
  %757 = vmatpush.bf16.msra.mxu0 %v239
  %758 = vmatpush.bf16.msra.mxu0 %v238
  %759 = vmatpush.bf16.msra.mxu0 %v237
  %760 = vmatpush.bf16.msra.mxu0 %v236
  %761 = vmatpush.bf16.msra.mxu0 %v235
  %762 = vmatpush.bf16.msra.mxu0 %v234
  %763 = vmatmul.bf16.gmra.mxu0 %v751
  %v764 = vpop.f32.mrf.mxu0
  %v765 = vadd.f32 0.0, %v764
  %v766 = vpop.f32.mrf.mxu0
  %v767 = vadd.f32 0.0, %v766
  %768 = vmatmul.bf16.gmra.mxu0 %v752
  %v769 = vpop.f32.mrf.mxu0
  %v770 = vadd.f32 0.0, %v769
  %v771 = vpop.f32.mrf.mxu0
  %v772 = vadd.f32 0.0, %v771
  %773 = vdwg.mxu0
  %v774 = vpack.c.bf16 %v767, %v765
  %v775 = vpack.c.bf16 %v772, %v770
  %s776 = scalar_lea.vmem %s4, 28
  %v777 = vld [vmem:[%s776] sm:$0xf]
  %v779 = vsel %vm320, %v774, 0
  %v782 = vsel %vm320, %v775, 0
  %v785 = vsel %vm327, %v777, 0
  %787 = vmatpush.bf16.msra.mxu0 0
  %788 = vmatpush.bf16.msra.mxu0 0
  %789 = vmatpush.bf16.msra.mxu0 0
  %790 = vmatpush.bf16.msra.mxu0 0
  %791 = vmatpush.bf16.msra.mxu0 0
  %792 = vmatpush.bf16.msra.mxu0 0
  %793 = vmatpush.bf16.msra.mxu0 0
  %794 = vmatpush.bf16.msra.mxu0 %v785
  %795 = vmatmul.bf16.gmra.mxu0 %v779
  %v796 = vpop.f32.mrf.mxu0
  %v797 = vadd.f32 0.0, %v796
  %v798 = vpop.f32.mrf.mxu0
  %v799 = vadd.f32 0.0, %v798
  %800 = vmatmul.bf16.gmra.mxu0 %v782
  %v801 = vpop.f32.mrf.mxu0
  %v802 = vadd.f32 0.0, %v801
  %v803 = vpop.f32.mrf.mxu0
  %v804 = vadd.f32 0.0, %v803
  %805 = vdwg.mxu0
  %v806 = vadd.f32 %v734, %v797
  %v807 = vadd.f32 %v735, %v799
  %v808 = vadd.f32 %v736, %v802
  %v809 = vadd.f32 %v737, %v804
  %s810 = scalar_lea.vmem %s10, 128
  %v811 = vld [vmem:[%s810] sm:$0xf]
  %v812 = vld [vmem:[%s810 + $0x4] sm:$0xf]
  %v813 = vld [vmem:[%s810 + $0x8] sm:$0xf]
  %v814 = vld [vmem:[%s810 + $0xc] sm:$0xf]
  %v819 = vunpack.c.l.b16 %v811
  %v820 = vunpack.c.l.b16 %v812
  %v821 = vunpack.c.l.b16 %v813
  %v822 = vunpack.c.l.b16 %v814
  %v823 = vpack.c.b16 %v820, %v819
  %v824 = vpack.c.b16 %v822, %v821
  %827 = vmatpush.bf16.msra.mxu0 %v241
  %828 = vmatpush.bf16.msra.mxu0 %v240
  %829 = vmatpush.bf16.msra.mxu0 %v239
  %830 = vmatpush.bf16.msra.mxu0 %v238
  %831 = vmatpush.bf16.msra.mxu0 %v237
  %832 = vmatpush.bf16.msra.mxu0 %v236
  %833 = vmatpush.bf16.msra.mxu0 %v235
  %834 = vmatpush.bf16.msra.mxu0 %v234
  %835 = vmatmul.bf16.gmra.mxu0 %v823
  %v836 = vpop.f32.mrf.mxu0
  %v837 = vadd.f32 0.0, %v836
  %v838 = vpop.f32.mrf.mxu0
  %v839 = vadd.f32 0.0, %v838
  %840 = vmatmul.bf16.gmra.mxu0 %v824
  %v841 = vpop.f32.mrf.mxu0
  %v842 = vadd.f32 0.0, %v841
  %v843 = vpop.f32.mrf.mxu0
  %v844 = vadd.f32 0.0, %v843
  %845 = vdwg.mxu0
  %v846 = vpack.c.bf16 %v839, %v837
  %v847 = vpack.c.bf16 %v844, %v842
  %s848 = scalar_lea.vmem %s4, 32
  %v849 = vld [vmem:[%s848] sm:$0xf]
  %v851 = vsel %vm320, %v846, 0
  %v854 = vsel %vm320, %v847, 0
  %v857 = vsel %vm327, %v849, 0
  %859 = vmatpush.bf16.msra.mxu0 0
  %860 = vmatpush.bf16.msra.mxu0 0
  %861 = vmatpush.bf16.msra.mxu0 0
  %862 = vmatpush.bf16.msra.mxu0 0
  %863 = vmatpush.bf16.msra.mxu0 0
  %864 = vmatpush.bf16.msra.mxu0 0
  %865 = vmatpush.bf16.msra.mxu0 0
  %866 = vmatpush.bf16.msra.mxu0 %v857
  %867 = vmatmul.bf16.gmra.mxu0 %v851
  %v868 = vpop.f32.mrf.mxu0
  %v869 = vadd.f32 0.0, %v868
  %v870 = vpop.f32.mrf.mxu0
  %v871 = vadd.f32 0.0, %v870
  %872 = vmatmul.bf16.gmra.mxu0 %v854
  %v873 = vpop.f32.mrf.mxu0
  %v874 = vadd.f32 0.0, %v873
  %v875 = vpop.f32.mrf.mxu0
  %v876 = vadd.f32 0.0, %v875
  %877 = vdwg.mxu0
  %v878 = vadd.f32 %v806, %v869
  %v879 = vadd.f32 %v807, %v871
  %v880 = vadd.f32 %v808, %v874
  %v881 = vadd.f32 %v809, %v876
  %v882 = vld [vmem:[%s5] sm:$0x1]
  %v884 = vperm.slane %v882, 0
  %v886 = vadd.f32 %v878, %v884
  %v887 = vadd.f32 %v879, %v884
  %v888 = vadd.f32 %v880, %v884
  %v889 = vadd.f32 %v881, %v884
  %v890 = vmax.f32 %v886, 0.0
  %v891 = vmax.f32 %v887, 0.0
  %v892 = vmax.f32 %v888, 0.0
  %v893 = vmax.f32 %v889, 0.0
  %v894 = vpack.c.bf16 %v891, %v890
  %v895 = vpack.c.bf16 %v893, %v892
  %v896 = vld [vmem:[%s1] sm:$0xf]
  %v897 = vld [vmem:[%s1 + $0x4] sm:$0xf]
  %v898 = vld [vmem:[%s1 + $0x8] sm:$0xf]
  %v899 = vld [vmem:[%s1 + $0xc] sm:$0xf]
  %v900 = vld [vmem:[%s6] sm:$0xf]
  %v901 = vld [vmem:[%s6 + $0x4] sm:$0x1]
  %v902 = vld [vmem:[%s7] sm:$0x1]
  %v904 = vperm.slane %v902, 0
  %v910 = vunpack.c.l.b16 %v896
  %v911 = vunpack.c.l.b16 %v897
  %v912 = vunpack.c.l.b16 %v898
  %v913 = vunpack.c.l.b16 %v899
  %v914 = vpack.c.b16 %v911, %v910
  %v915 = vpack.c.b16 %v913, %v912
  %v918 = vunpack.c.l.b16 %v900
  %v919 = vunpack.c.l.b16 %v901
  %v920 = vpack.c.b16 %v919, %v918
  %vm921 = vcmask 80896
  %v923 = vsel %vm921, %v914, 0
  %v926 = vsel %vm921, %v915, 0
  %vm928 = vcmask 1044480
  %v930 = vsel %vm928, %v920, 0
  %932 = vmatpush.bf16.msra.mxu0 0
  %933 = vmatpush.bf16.msra.mxu0 0
  %934 = vmatpush.bf16.msra.mxu0 0
  %935 = vmatpush.bf16.msra.mxu0 0
  %936 = vmatpush.bf16.msra.mxu0 0
  %937 = vmatpush.bf16.msra.mxu0 0
  %938 = vmatpush.bf16.msra.mxu0 0
  %939 = vmatpush.bf16.msra.mxu0 %v930
  %940 = vmatmul.bf16.gmra.mxu0 %v923
  %v941 = vpop.f32.mrf.mxu0
  %v942 = vadd.f32 %v904, %v941
  %v943 = vpop.f32.mrf.mxu0
  %v944 = vadd.f32 %v904, %v943
  %945 = vmatmul.bf16.gmra.mxu0 %v926
  %v946 = vpop.f32.mrf.mxu0
  %v947 = vadd.f32 %v904, %v946
  %v948 = vpop.f32.mrf.mxu0
  %v949 = vadd.f32 %v904, %v948
  %950 = vdwg.mxu0
  %v951 = vmax.f32 %v942, 0.0
  %v952 = vmax.f32 %v944, 0.0
  %v953 = vmax.f32 %v947, 0.0
  %v954 = vmax.f32 %v949, 0.0
  %v955 = vpack.c.bf16 %v952, %v951
  %v956 = vpack.c.bf16 %v954, %v953
  %v957 = vld [vmem:[%s11] sm:$0xf]
  %v958 = vld [vmem:[%s11 + $0x4] sm:$0xf]
  %v961 = vunpack.c.l.b16 %v957
  %v962 = vunpack.c.l.b16 %v958
  %v963 = vpack.c.b16 %v962, %v961
  %vm964 = vcmask 261120
  %v966 = vsel %vm964, %v963, 0
  %968 = vmatpush.bf16.msra.mxu0 0
  %969 = vmatpush.bf16.msra.mxu0 0
  %970 = vmatpush.bf16.msra.mxu0 0
  %971 = vmatpush.bf16.msra.mxu0 0
  %972 = vmatpush.bf16.msra.mxu0 0
  %973 = vmatpush.bf16.msra.mxu0 0
  %974 = vmatpush.bf16.msra.mxu0 %v956
  %975 = vmatpush.bf16.msra.mxu0 %v955
  %976 = vmatmul.bf16.gmra.mxu0 %v966
  %v977 = vpop.f32.mrf.mxu0
  %v978 = vadd.f32 0.0, %v977
  %v979 = vpop.f32.mrf.mxu0
  %v980 = vadd.f32 0.0, %v979
  %981 = vdwg.mxu0
  %v982 = vpack.c.bf16 %v980, %v978
  %v983 = vld [vmem:[%s8] sm:$0xf]
  %s984 = scalar_lea.vmem %s11, 8
  %v985 = vld [vmem:[%s984] sm:$0xf]
  %v986 = vld [vmem:[%s984 + $0x4] sm:$0xf]
  %v989 = vunpack.c.l.b16 %v985
  %v990 = vunpack.c.l.b16 %v986
  %v991 = vpack.c.b16 %v990, %v989
  %v993 = vsel %vm964, %v991, 0
  %995 = vmatpush.bf16.msra.mxu0 0
  %996 = vmatpush.bf16.msra.mxu0 0
  %997 = vmatpush.bf16.msra.mxu0 0
  %998 = vmatpush.bf16.msra.mxu0 0
  %999 = vmatpush.bf16.msra.mxu0 0
  %1000 = vmatpush.bf16.msra.mxu0 0
  %1001 = vmatpush.bf16.msra.mxu0 %v956
  %1002 = vmatpush.bf16.msra.mxu0 %v955
  %1003 = vmatmul.bf16.gmra.mxu0 %v993
  %v1004 = vpop.f32.mrf.mxu0
  %v1005 = vadd.f32 0.0, %v1004
  %v1006 = vpop.f32.mrf.mxu0
  %v1007 = vadd.f32 0.0, %v1006
  %1008 = vdwg.mxu0
  %v1009 = vpack.c.bf16 %v1007, %v1005
  %s1010 = scalar_lea.vmem %s8, 4
  %v1011 = vld [vmem:[%s1010] sm:$0xf]
  %v1013 = vsel %vm320, %v1009, 0
  %v1016 = vsel %vm327, %v1011, 0
  %1018 = vmatpush.bf16.msra.mxu0 0
  %1019 = vmatpush.bf16.msra.mxu0 0
  %1020 = vmatpush.bf16.msra.mxu0 0
  %1021 = vmatpush.bf16.msra.mxu0 0
  %1022 = vmatpush.bf16.msra.mxu0 0
  %1023 = vmatpush.bf16.msra.mxu0 0
  %1024 = vmatpush.bf16.msra.mxu0 0
  %1025 = vmatpush.bf16.msra.mxu0 %v1016
  %1026 = vmatmul.bf16.gmra.mxu0 %v1013
  %v1027 = vpop.f32.mrf.mxu0
  %v1028 = vadd.f32 0.0, %v1027
  %v1029 = vpop.f32.mrf.mxu0
  %v1030 = vadd.f32 0.0, %v1029
  %1031 = vdwg.mxu0
  %v1033 = vsel %vm320, %v982, 0
  %v1036 = vsel %vm327, %v983, 0
  %1038 = vmatpush.bf16.msra.mxu0 0
  %1039 = vmatpush.bf16.msra.mxu0 0
  %1040 = vmatpush.bf16.msra.mxu0 0
  %1041 = vmatpush.bf16.msra.mxu0 0
  %1042 = vmatpush.bf16.msra.mxu0 0
  %1043 = vmatpush.bf16.msra.mxu0 0
  %1044 = vmatpush.bf16.msra.mxu0 0
  %1045 = vmatpush.bf16.msra.mxu0 %v1036
  %1046 = vmatmul.bf16.gmra.mxu0 %v1033
  %v1047 = vpop.f32.mrf.mxu0
  %v1048 = vadd.f32 %v1028, %v1047
  %v1049 = vpop.f32.mrf.mxu0
  %v1050 = vadd.f32 %v1030, %v1049
  %1051 = vdwg.mxu0
  %s1052 = scalar_lea.vmem %s11, 16
  %v1053 = vld [vmem:[%s1052] sm:$0xf]
  %v1054 = vld [vmem:[%s1052 + $0x4] sm:$0xf]
  %v1057 = vunpack.c.l.b16 %v1053
  %v1058 = vunpack.c.l.b16 %v1054
  %v1059 = vpack.c.b16 %v1058, %v1057
  %v1061 = vsel %vm964, %v1059, 0
  %1063 = vmatpush.bf16.msra.mxu0 0
  %1064 = vmatpush.bf16.msra.mxu0 0
  %1065 = vmatpush.bf16.msra.mxu0 0
  %1066 = vmatpush.bf16.msra.mxu0 0
  %1067 = vmatpush.bf16.msra.mxu0 0
  %1068 = vmatpush.bf16.msra.mxu0 0
  %1069 = vmatpush.bf16.msra.mxu0 %v956
  %1070 = vmatpush.bf16.msra.mxu0 %v955
  %1071 = vmatmul.bf16.gmra.mxu0 %v1061
  %v1072 = vpop.f32.mrf.mxu0
  %v1073 = vadd.f32 0.0, %v1072
  %v1074 = vpop.f32.mrf.mxu0
  %v1075 = vadd.f32 0.0, %v1074
  %1076 = vdwg.mxu0
  %v1077 = vpack.c.bf16 %v1075, %v1073
  %s1078 = scalar_lea.vmem %s8, 8
  %v1079 = vld [vmem:[%s1078] sm:$0xf]
  %v1081 = vsel %vm320, %v1077, 0
  %v1084 = vsel %vm327, %v1079, 0
  %1086 = vmatpush.bf16.msra.mxu0 0
  %1087 = vmatpush.bf16.msra.mxu0 0
  %1088 = vmatpush.bf16.msra.mxu0 0
  %1089 = vmatpush.bf16.msra.mxu0 0
  %1090 = vmatpush.bf16.msra.mxu0 0
  %1091 = vmatpush.bf16.msra.mxu0 0
  %1092 = vmatpush.bf16.msra.mxu0 0
  %1093 = vmatpush.bf16.msra.mxu0 %v1084
  %1094 = vmatmul.bf16.gmra.mxu0 %v1081
  %v1095 = vpop.f32.mrf.mxu0
  %v1096 = vadd.f32 0.0, %v1095
  %v1097 = vpop.f32.mrf.mxu0
  %v1098 = vadd.f32 0.0, %v1097
  %1099 = vdwg.mxu0
  %v1100 = vadd.f32 %v1048, %v1096
  %v1101 = vadd.f32 %v1050, %v1098
  %s1102 = scalar_lea.vmem %s11, 24
  %v1103 = vld [vmem:[%s1102] sm:$0xf]
  %v1104 = vld [vmem:[%s1102 + $0x4] sm:$0xf]
  %v1107 = vunpack.c.l.b16 %v1103
  %v1108 = vunpack.c.l.b16 %v1104
  %v1109 = vpack.c.b16 %v1108, %v1107
  %v1111 = vsel %vm964, %v1109, 0
  %1113 = vmatpush.bf16.msra.mxu0 0
  %1114 = vmatpush.bf16.msra.mxu0 0
  %1115 = vmatpush.bf16.msra.mxu0 0
  %1116 = vmatpush.bf16.msra.mxu0 0
  %1117 = vmatpush.bf16.msra.mxu0 0
  %1118 = vmatpush.bf16.msra.mxu0 0
  %1119 = vmatpush.bf16.msra.mxu0 %v956
  %1120 = vmatpush.bf16.msra.mxu0 %v955
  %1121 = vmatmul.bf16.gmra.mxu0 %v1111
  %v1122 = vpop.f32.mrf.mxu0
  %v1123 = vadd.f32 0.0, %v1122
  %v1124 = vpop.f32.mrf.mxu0
  %v1125 = vadd.f32 0.0, %v1124
  %1126 = vdwg.mxu0
  %v1127 = vpack.c.bf16 %v1125, %v1123
  %s1128 = scalar_lea.vmem %s8, 12
  %v1129 = vld [vmem:[%s1128] sm:$0xf]
  %v1131 = vsel %vm320, %v1127, 0
  %v1134 = vsel %vm327, %v1129, 0
  %1136 = vmatpush.bf16.msra.mxu0 0
  %1137 = vmatpush.bf16.msra.mxu0 0
  %1138 = vmatpush.bf16.msra.mxu0 0
  %1139 = vmatpush.bf16.msra.mxu0 0
  %1140 = vmatpush.bf16.msra.mxu0 0
  %1141 = vmatpush.bf16.msra.mxu0 0
  %1142 = vmatpush.bf16.msra.mxu0 0
  %1143 = vmatpush.bf16.msra.mxu0 %v1134
  %1144 = vmatmul.bf16.gmra.mxu0 %v1131
  %v1145 = vpop.f32.mrf.mxu0
  %v1146 = vadd.f32 0.0, %v1145
  %v1147 = vpop.f32.mrf.mxu0
  %v1148 = vadd.f32 0.0, %v1147
  %1149 = vdwg.mxu0
  %v1150 = vadd.f32 %v1100, %v1146
  %v1151 = vadd.f32 %v1101, %v1148
  %s1152 = scalar_lea.vmem %s11, 32
  %v1153 = vld [vmem:[%s1152] sm:$0xf]
  %v1154 = vld [vmem:[%s1152 + $0x4] sm:$0xf]
  %v1157 = vunpack.c.l.b16 %v1153
  %v1158 = vunpack.c.l.b16 %v1154
  %v1159 = vpack.c.b16 %v1158, %v1157
  %v1161 = vsel %vm964, %v1159, 0
  %1163 = vmatpush.bf16.msra.mxu0 0
  %1164 = vmatpush.bf16.msra.mxu0 0
  %1165 = vmatpush.bf16.msra.mxu0 0
  %1166 = vmatpush.bf16.msra.mxu0 0
  %1167 = vmatpush.bf16.msra.mxu0 0
  %1168 = vmatpush.bf16.msra.mxu0 0
  %1169 = vmatpush.bf16.msra.mxu0 %v956
  %1170 = vmatpush.bf16.msra.mxu0 %v955
  %1171 = vmatmul.bf16.gmra.mxu0 %v1161
  %v1172 = vpop.f32.mrf.mxu0
  %v1173 = vadd.f32 0.0, %v1172
  %v1174 = vpop.f32.mrf.mxu0
  %v1175 = vadd.f32 0.0, %v1174
  %1176 = vdwg.mxu0
  %v1177 = vpack.c.bf16 %v1175, %v1173
  %s1178 = scalar_lea.vmem %s8, 16
  %v1179 = vld [vmem:[%s1178] sm:$0xf]
  %v1181 = vsel %vm320, %v1177, 0
  %v1184 = vsel %vm327, %v1179, 0
  %1186 = vmatpush.bf16.msra.mxu0 0
  %1187 = vmatpush.bf16.msra.mxu0 0
  %1188 = vmatpush.bf16.msra.mxu0 0
  %1189 = vmatpush.bf16.msra.mxu0 0
  %1190 = vmatpush.bf16.msra.mxu0 0
  %1191 = vmatpush.bf16.msra.mxu0 0
  %1192 = vmatpush.bf16.msra.mxu0 0
  %1193 = vmatpush.bf16.msra.mxu0 %v1184
  %1194 = vmatmul.bf16.gmra.mxu0 %v1181
  %v1195 = vpop.f32.mrf.mxu0
  %v1196 = vadd.f32 0.0, %v1195
  %v1197 = vpop.f32.mrf.mxu0
  %v1198 = vadd.f32 0.0, %v1197
  %1199 = vdwg.mxu0
  %v1200 = vadd.f32 %v1150, %v1196
  %v1201 = vadd.f32 %v1151, %v1198
  %v1202 = vld [vmem:[%s9] sm:$0x1]
  %v1204 = vperm.slane %v1202, 0
  %v1206 = vadd.f32 %v1200, %v1204
  %v1207 = vadd.f32 %v1201, %v1204
  %v1208 = vmax.f32 %v1206, 0.0
  %v1209 = vmax.f32 %v1207, 0.0
  %v1210 = vpack.c.bf16 %v1209, %v1208
  %v1211 = vld [vmem:[%s12] sm:$0xf]
  %v1213 = vsel %vm964, %v1211, 0
  %1215 = vmatpush.bf16.msra.mxu0 0
  %1216 = vmatpush.bf16.msra.mxu0 0
  %1217 = vmatpush.bf16.msra.mxu0 0
  %1218 = vmatpush.bf16.msra.mxu0 0
  %1219 = vmatpush.bf16.msra.mxu0 0
  %1220 = vmatpush.bf16.msra.mxu0 0
  %1221 = vmatpush.bf16.msra.mxu0 %v895
  %1222 = vmatpush.bf16.msra.mxu0 %v894
  %1223 = vmatmul.bf16.gmra.mxu0 %v1213
  %v1224 = vpop.f32.mrf.mxu0
  %v1225 = vadd.f32 0.0, %v1224
  %v1226 = vpop.f32.mrf.mxu0
  %1227 = vdwg.mxu0
  %v1228 = vpack.c.bf16 %v1225, %v1225
  %v1229 = vld [vmem:[%s14] sm:$0xff]
  %v1230 = vld [vmem:[%s14 + $0x8] sm:$0xff]
  %s1231 = scalar_lea.vmem %s12, 4
  %v1232 = vld [vmem:[%s1231] sm:$0xf]
  %v1234 = vsel %vm964, %v1232, 0
  %1236 = vmatpush.bf16.msra.mxu0 0
  %1237 = vmatpush.bf16.msra.mxu0 0
  %1238 = vmatpush.bf16.msra.mxu0 0
  %1239 = vmatpush.bf16.msra.mxu0 0
  %1240 = vmatpush.bf16.msra.mxu0 0
  %1241 = vmatpush.bf16.msra.mxu0 0
  %1242 = vmatpush.bf16.msra.mxu0 %v895
  %1243 = vmatpush.bf16.msra.mxu0 %v894
  %1244 = vmatmul.bf16.gmra.mxu0 %v1234
  %v1245 = vpop.f32.mrf.mxu0
  %v1246 = vadd.f32 0.0, %v1245
  %v1247 = vpop.f32.mrf.mxu0
  %1248 = vdwg.mxu0
  %v1249 = vpack.c.bf16 %v1246, %v1246
  %s1250 = scalar_lea.vmem %s14, 16
  %v1251 = vld [vmem:[%s1250] sm:$0xff]
  %v1252 = vld [vmem:[%s1250 + $0x8] sm:$0xff]
  %v1255 = vunpack.c.l.b16 %v1251
  %v1256 = vunpack.c.h.b16 %v1251
  %v1257 = vunpack.c.l.b16 %v1252
  %v1258 = vunpack.c.h.b16 %v1252
  %v1259 = vpack.c.b16 %v1257, %v1255
  %v1260 = vpack.c.b16 %v1258, %v1256
  %vm1263 = vcmask 130048
  %v1265 = vsel %vm1263, %v1249, 0
  %1267 = vmatpush.bf16.msra.mxu0 0
  %1268 = vmatpush.bf16.msra.mxu0 0
  %1269 = vmatpush.bf16.msra.mxu0 0
  %1270 = vmatpush.bf16.msra.mxu0 0
  %1271 = vmatpush.bf16.msra.mxu0 0
  %1272 = vmatpush.bf16.msra.mxu0 0
  %1273 = vmatpush.bf16.msra.mxu0 0
  %1274 = vmatpush.bf16.msra.mxu0 %v1259
  %1275 = vmatmul.bf16.gmra.mxu0 %v1265
  %v1276 = vpop.f32.mrf.mxu0
  %v1277 = vadd.f32 0.0, %v1276
  %v1278 = vpop.f32.mrf.mxu0
  %1279 = vdwg.mxu0
  %1280 = vmatpush.bf16.msra.mxu0 0
  %1281 = vmatpush.bf16.msra.mxu0 0
  %1282 = vmatpush.bf16.msra.mxu0 0
  %1283 = vmatpush.bf16.msra.mxu0 0
  %1284 = vmatpush.bf16.msra.mxu0 0
  %1285 = vmatpush.bf16.msra.mxu0 0
  %1286 = vmatpush.bf16.msra.mxu0 0
  %1287 = vmatpush.bf16.msra.mxu0 %v1260
  %1288 = vmatmul.bf16.gmra.mxu0 %v1265
  %v1289 = vpop.f32.mrf.mxu0
  %v1290 = vadd.f32 0.0, %v1289
  %v1291 = vpop.f32.mrf.mxu0
  %1292 = vdwg.mxu0
  %v1295 = vunpack.c.l.b16 %v1229
  %v1296 = vunpack.c.h.b16 %v1229
  %v1297 = vunpack.c.l.b16 %v1230
  %v1298 = vunpack.c.h.b16 %v1230
  %v1299 = vpack.c.b16 %v1297, %v1295
  %v1300 = vpack.c.b16 %v1298, %v1296
  %v1304 = vsel %vm1263, %v1228, 0
  %1306 = vmatpush.bf16.msra.mxu0 0
  %1307 = vmatpush.bf16.msra.mxu0 0
  %1308 = vmatpush.bf16.msra.mxu0 0
  %1309 = vmatpush.bf16.msra.mxu0 0
  %1310 = vmatpush.bf16.msra.mxu0 0
  %1311 = vmatpush.bf16.msra.mxu0 0
  %1312 = vmatpush.bf16.msra.mxu0 0
  %1313 = vmatpush.bf16.msra.mxu0 %v1299
  %1314 = vmatmul.bf16.gmra.mxu0 %v1304
  %v1315 = vpop.f32.mrf.mxu0
  %v1316 = vadd.f32 %v1277, %v1315
  %v1317 = vpop.f32.mrf.mxu0
  %1318 = vdwg.mxu0
  %1319 = vmatpush.bf16.msra.mxu0 0
  %1320 = vmatpush.bf16.msra.mxu0 0
  %1321 = vmatpush.bf16.msra.mxu0 0
  %1322 = vmatpush.bf16.msra.mxu0 0
  %1323 = vmatpush.bf16.msra.mxu0 0
  %1324 = vmatpush.bf16.msra.mxu0 0
  %1325 = vmatpush.bf16.msra.mxu0 0
  %1326 = vmatpush.bf16.msra.mxu0 %v1300
  %1327 = vmatmul.bf16.gmra.mxu0 %v1304
  %v1328 = vpop.f32.mrf.mxu0
  %v1329 = vadd.f32 %v1290, %v1328
  %v1330 = vpop.f32.mrf.mxu0
  %1331 = vdwg.mxu0
  %s1332 = scalar_lea.vmem %s12, 8
  %v1333 = vld [vmem:[%s1332] sm:$0xf]
  %v1335 = vsel %vm964, %v1333, 0
  %1337 = vmatpush.bf16.msra.mxu0 0
  %1338 = vmatpush.bf16.msra.mxu0 0
  %1339 = vmatpush.bf16.msra.mxu0 0
  %1340 = vmatpush.bf16.msra.mxu0 0
  %1341 = vmatpush.bf16.msra.mxu0 0
  %1342 = vmatpush.bf16.msra.mxu0 0
  %1343 = vmatpush.bf16.msra.mxu0 %v895
  %1344 = vmatpush.bf16.msra.mxu0 %v894
  %1345 = vmatmul.bf16.gmra.mxu0 %v1335
  %v1346 = vpop.f32.mrf.mxu0
  %v1347 = vadd.f32 0.0, %v1346
  %v1348 = vpop.f32.mrf.mxu0
  %1349 = vdwg.mxu0
  %v1350 = vpack.c.bf16 %v1347, %v1347
  %s1351 = scalar_lea.vmem %s14, 32
  %v1352 = vld [vmem:[%s1351] sm:$0xff]
  %v1353 = vld [vmem:[%s1351 + $0x8] sm:$0xff]
  %v1356 = vunpack.c.l.b16 %v1352
  %v1357 = vunpack.c.h.b16 %v1352
  %v1358 = vunpack.c.l.b16 %v1353
  %v1359 = vunpack.c.h.b16 %v1353
  %v1360 = vpack.c.b16 %v1358, %v1356
  %v1361 = vpack.c.b16 %v1359, %v1357
  %v1365 = vsel %vm1263, %v1350, 0
  %1367 = vmatpush.bf16.msra.mxu0 0
  %1368 = vmatpush.bf16.msra.mxu0 0
  %1369 = vmatpush.bf16.msra.mxu0 0
  %1370 = vmatpush.bf16.msra.mxu0 0
  %1371 = vmatpush.bf16.msra.mxu0 0
  %1372 = vmatpush.bf16.msra.mxu0 0
  %1373 = vmatpush.bf16.msra.mxu0 0
  %1374 = vmatpush.bf16.msra.mxu0 %v1360
  %1375 = vmatmul.bf16.gmra.mxu0 %v1365
  %v1376 = vpop.f32.mrf.mxu0
  %v1377 = vadd.f32 0.0, %v1376
  %v1378 = vpop.f32.mrf.mxu0
  %1379 = vdwg.mxu0
  %1380 = vmatpush.bf16.msra.mxu0 0
  %1381 = vmatpush.bf16.msra.mxu0 0
  %1382 = vmatpush.bf16.msra.mxu0 0
  %1383 = vmatpush.bf16.msra.mxu0 0
  %1384 = vmatpush.bf16.msra.mxu0 0
  %1385 = vmatpush.bf16.msra.mxu0 0
  %1386 = vmatpush.bf16.msra.mxu0 0
  %1387 = vmatpush.bf16.msra.mxu0 %v1361
  %1388 = vmatmul.bf16.gmra.mxu0 %v1365
  %v1389 = vpop.f32.mrf.mxu0
  %v1390 = vadd.f32 0.0, %v1389
  %v1391 = vpop.f32.mrf.mxu0
  %1392 = vdwg.mxu0
  %v1393 = vadd.f32 %v1316, %v1377
  %v1394 = vadd.f32 %v1329, %v1390
  %s1395 = scalar_lea.vmem %s12, 12
  %v1396 = vld [vmem:[%s1395] sm:$0xf]
  %v1398 = vsel %vm964, %v1396, 0
  %1400 = vmatpush.bf16.msra.mxu0 0
  %1401 = vmatpush.bf16.msra.mxu0 0
  %1402 = vmatpush.bf16.msra.mxu0 0
  %1403 = vmatpush.bf16.msra.mxu0 0
  %1404 = vmatpush.bf16.msra.mxu0 0
  %1405 = vmatpush.bf16.msra.mxu0 0
  %1406 = vmatpush.bf16.msra.mxu0 %v895
  %1407 = vmatpush.bf16.msra.mxu0 %v894
  %1408 = vmatmul.bf16.gmra.mxu0 %v1398
  %v1409 = vpop.f32.mrf.mxu0
  %v1410 = vadd.f32 0.0, %v1409
  %v1411 = vpop.f32.mrf.mxu0
  %1412 = vdwg.mxu0
  %v1413 = vpack.c.bf16 %v1410, %v1410
  %s1414 = scalar_lea.vmem %s14, 48
  %v1415 = vld [vmem:[%s1414] sm:$0xff]
  %v1416 = vld [vmem:[%s1414 + $0x8] sm:$0xff]
  %v1419 = vunpack.c.l.b16 %v1415
  %v1420 = vunpack.c.h.b16 %v1415
  %v1421 = vunpack.c.l.b16 %v1416
  %v1422 = vunpack.c.h.b16 %v1416
  %v1423 = vpack.c.b16 %v1421, %v1419
  %v1424 = vpack.c.b16 %v1422, %v1420
  %v1428 = vsel %vm1263, %v1413, 0
  %1430 = vmatpush.bf16.msra.mxu0 0
  %1431 = vmatpush.bf16.msra.mxu0 0
  %1432 = vmatpush.bf16.msra.mxu0 0
  %1433 = vmatpush.bf16.msra.mxu0 0
  %1434 = vmatpush.bf16.msra.mxu0 0
  %1435 = vmatpush.bf16.msra.mxu0 0
  %1436 = vmatpush.bf16.msra.mxu0 0
  %1437 = vmatpush.bf16.msra.mxu0 %v1423
  %1438 = vmatmul.bf16.gmra.mxu0 %v1428
  %v1439 = vpop.f32.mrf.mxu0
  %v1440 = vadd.f32 0.0, %v1439
  %v1441 = vpop.f32.mrf.mxu0
  %1442 = vdwg.mxu0
  %1443 = vmatpush.bf16.msra.mxu0 0
  %1444 = vmatpush.bf16.msra.mxu0 0
  %1445 = vmatpush.bf16.msra.mxu0 0
  %1446 = vmatpush.bf16.msra.mxu0 0
  %1447 = vmatpush.bf16.msra.mxu0 0
  %1448 = vmatpush.bf16.msra.mxu0 0
  %1449 = vmatpush.bf16.msra.mxu0 0
  %1450 = vmatpush.bf16.msra.mxu0 %v1424
  %1451 = vmatmul.bf16.gmra.mxu0 %v1428
  %v1452 = vpop.f32.mrf.mxu0
  %v1453 = vadd.f32 0.0, %v1452
  %v1454 = vpop.f32.mrf.mxu0
  %1455 = vdwg.mxu0
  %v1456 = vadd.f32 %v1393, %v1440
  %v1457 = vadd.f32 %v1394, %v1453
  %s1458 = scalar_lea.vmem %s12, 16
  %v1459 = vld [vmem:[%s1458] sm:$0xf]
  %v1461 = vsel %vm964, %v1459, 0
  %1463 = vmatpush.bf16.msra.mxu0 0
  %1464 = vmatpush.bf16.msra.mxu0 0
  %1465 = vmatpush.bf16.msra.mxu0 0
  %1466 = vmatpush.bf16.msra.mxu0 0
  %1467 = vmatpush.bf16.msra.mxu0 0
  %1468 = vmatpush.bf16.msra.mxu0 0
  %1469 = vmatpush.bf16.msra.mxu0 %v895
  %1470 = vmatpush.bf16.msra.mxu0 %v894
  %1471 = vmatmul.bf16.gmra.mxu0 %v1461
  %v1472 = vpop.f32.mrf.mxu0
  %v1473 = vadd.f32 0.0, %v1472
  %v1474 = vpop.f32.mrf.mxu0
  %1475 = vdwg.mxu0
  %v1476 = vpack.c.bf16 %v1473, %v1473
  %s1477 = scalar_lea.vmem %s14, 64
  %v1478 = vld [vmem:[%s1477] sm:$0xff]
  %v1479 = vld [vmem:[%s1477 + $0x8] sm:$0xff]
  %v1482 = vunpack.c.l.b16 %v1478
  %v1483 = vunpack.c.h.b16 %v1478
  %v1484 = vunpack.c.l.b16 %v1479
  %v1485 = vunpack.c.h.b16 %v1479
  %v1486 = vpack.c.b16 %v1484, %v1482
  %v1487 = vpack.c.b16 %v1485, %v1483
  %v1491 = vsel %vm1263, %v1476, 0
  %1493 = vmatpush.bf16.msra.mxu0 0
  %1494 = vmatpush.bf16.msra.mxu0 0
  %1495 = vmatpush.bf16.msra.mxu0 0
  %1496 = vmatpush.bf16.msra.mxu0 0
  %1497 = vmatpush.bf16.msra.mxu0 0
  %1498 = vmatpush.bf16.msra.mxu0 0
  %1499 = vmatpush.bf16.msra.mxu0 0
  %1500 = vmatpush.bf16.msra.mxu0 %v1486
  %1501 = vmatmul.bf16.gmra.mxu0 %v1491
  %v1502 = vpop.f32.mrf.mxu0
  %v1503 = vadd.f32 0.0, %v1502
  %v1504 = vpop.f32.mrf.mxu0
  %1505 = vdwg.mxu0
  %1506 = vmatpush.bf16.msra.mxu0 0
  %1507 = vmatpush.bf16.msra.mxu0 0
  %1508 = vmatpush.bf16.msra.mxu0 0
  %1509 = vmatpush.bf16.msra.mxu0 0
  %1510 = vmatpush.bf16.msra.mxu0 0
  %1511 = vmatpush.bf16.msra.mxu0 0
  %1512 = vmatpush.bf16.msra.mxu0 0
  %1513 = vmatpush.bf16.msra.mxu0 %v1487
  %1514 = vmatmul.bf16.gmra.mxu0 %v1491
  %v1515 = vpop.f32.mrf.mxu0
  %v1516 = vadd.f32 0.0, %v1515
  %v1517 = vpop.f32.mrf.mxu0
  %1518 = vdwg.mxu0
  %v1519 = vadd.f32 %v1456, %v1503
  %v1520 = vadd.f32 %v1457, %v1516
  %s1521 = scalar_lea.vmem %s12, 20
  %v1522 = vld [vmem:[%s1521] sm:$0xf]
  %v1524 = vsel %vm964, %v1522, 0
  %1526 = vmatpush.bf16.msra.mxu0 0
  %1527 = vmatpush.bf16.msra.mxu0 0
  %1528 = vmatpush.bf16.msra.mxu0 0
  %1529 = vmatpush.bf16.msra.mxu0 0
  %1530 = vmatpush.bf16.msra.mxu0 0
  %1531 = vmatpush.bf16.msra.mxu0 0
  %1532 = vmatpush.bf16.msra.mxu0 %v895
  %1533 = vmatpush.bf16.msra.mxu0 %v894
  %1534 = vmatmul.bf16.gmra.mxu0 %v1524
  %v1535 = vpop.f32.mrf.mxu0
  %v1536 = vadd.f32 0.0, %v1535
  %v1537 = vpop.f32.mrf.mxu0
  %1538 = vdwg.mxu0
  %v1539 = vpack.c.bf16 %v1536, %v1536
  %s1540 = scalar_lea.vmem %s14, 80
  %v1541 = vld [vmem:[%s1540] sm:$0xff]
  %v1542 = vld [vmem:[%s1540 + $0x8] sm:$0xff]
  %v1545 = vunpack.c.l.b16 %v1541
  %v1546 = vunpack.c.h.b16 %v1541
  %v1547 = vunpack.c.l.b16 %v1542
  %v1548 = vunpack.c.h.b16 %v1542
  %v1549 = vpack.c.b16 %v1547, %v1545
  %v1550 = vpack.c.b16 %v1548, %v1546
  %v1554 = vsel %vm1263, %v1539, 0
  %1556 = vmatpush.bf16.msra.mxu0 0
  %1557 = vmatpush.bf16.msra.mxu0 0
  %1558 = vmatpush.bf16.msra.mxu0 0
  %1559 = vmatpush.bf16.msra.mxu0 0
  %1560 = vmatpush.bf16.msra.mxu0 0
  %1561 = vmatpush.bf16.msra.mxu0 0
  %1562 = vmatpush.bf16.msra.mxu0 0
  %1563 = vmatpush.bf16.msra.mxu0 %v1549
  %1564 = vmatmul.bf16.gmra.mxu0 %v1554
  %v1565 = vpop.f32.mrf.mxu0
  %v1566 = vadd.f32 0.0, %v1565
  %v1567 = vpop.f32.mrf.mxu0
  %1568 = vdwg.mxu0
  %1569 = vmatpush.bf16.msra.mxu0 0
  %1570 = vmatpush.bf16.msra.mxu0 0
  %1571 = vmatpush.bf16.msra.mxu0 0
  %1572 = vmatpush.bf16.msra.mxu0 0
  %1573 = vmatpush.bf16.msra.mxu0 0
  %1574 = vmatpush.bf16.msra.mxu0 0
  %1575 = vmatpush.bf16.msra.mxu0 0
  %1576 = vmatpush.bf16.msra.mxu0 %v1550
  %1577 = vmatmul.bf16.gmra.mxu0 %v1554
  %v1578 = vpop.f32.mrf.mxu0
  %v1579 = vadd.f32 0.0, %v1578
  %v1580 = vpop.f32.mrf.mxu0
  %1581 = vdwg.mxu0
  %v1582 = vadd.f32 %v1519, %v1566
  %v1583 = vadd.f32 %v1520, %v1579
  %s1584 = scalar_lea.vmem %s12, 24
  %v1585 = vld [vmem:[%s1584] sm:$0xf]
  %v1587 = vsel %vm964, %v1585, 0
  %1589 = vmatpush.bf16.msra.mxu0 0
  %1590 = vmatpush.bf16.msra.mxu0 0
  %1591 = vmatpush.bf16.msra.mxu0 0
  %1592 = vmatpush.bf16.msra.mxu0 0
  %1593 = vmatpush.bf16.msra.mxu0 0
  %1594 = vmatpush.bf16.msra.mxu0 0
  %1595 = vmatpush.bf16.msra.mxu0 %v895
  %1596 = vmatpush.bf16.msra.mxu0 %v894
  %1597 = vmatmul.bf16.gmra.mxu0 %v1587
  %v1598 = vpop.f32.mrf.mxu0
  %v1599 = vadd.f32 0.0, %v1598
  %v1600 = vpop.f32.mrf.mxu0
  %1601 = vdwg.mxu0
  %v1602 = vpack.c.bf16 %v1599, %v1599
  %s1603 = scalar_lea.vmem %s14, 96
  %v1604 = vld [vmem:[%s1603] sm:$0xff]
  %v1605 = vld [vmem:[%s1603 + $0x8] sm:$0xff]
  %v1608 = vunpack.c.l.b16 %v1604
  %v1609 = vunpack.c.h.b16 %v1604
  %v1610 = vunpack.c.l.b16 %v1605
  %v1611 = vunpack.c.h.b16 %v1605
  %v1612 = vpack.c.b16 %v1610, %v1608
  %v1613 = vpack.c.b16 %v1611, %v1609
  %v1617 = vsel %vm1263, %v1602, 0
  %1619 = vmatpush.bf16.msra.mxu0 0
  %1620 = vmatpush.bf16.msra.mxu0 0
  %1621 = vmatpush.bf16.msra.mxu0 0
  %1622 = vmatpush.bf16.msra.mxu0 0
  %1623 = vmatpush.bf16.msra.mxu0 0
  %1624 = vmatpush.bf16.msra.mxu0 0
  %1625 = vmatpush.bf16.msra.mxu0 0
  %1626 = vmatpush.bf16.msra.mxu0 %v1612
  %1627 = vmatmul.bf16.gmra.mxu0 %v1617
  %v1628 = vpop.f32.mrf.mxu0
  %v1629 = vadd.f32 0.0, %v1628
  %v1630 = vpop.f32.mrf.mxu0
  %1631 = vdwg.mxu0
  %1632 = vmatpush.bf16.msra.mxu0 0
  %1633 = vmatpush.bf16.msra.mxu0 0
  %1634 = vmatpush.bf16.msra.mxu0 0
  %1635 = vmatpush.bf16.msra.mxu0 0
  %1636 = vmatpush.bf16.msra.mxu0 0
  %1637 = vmatpush.bf16.msra.mxu0 0
  %1638 = vmatpush.bf16.msra.mxu0 0
  %1639 = vmatpush.bf16.msra.mxu0 %v1613
  %1640 = vmatmul.bf16.gmra.mxu0 %v1617
  %v1641 = vpop.f32.mrf.mxu0
  %v1642 = vadd.f32 0.0, %v1641
  %v1643 = vpop.f32.mrf.mxu0
  %1644 = vdwg.mxu0
  %v1645 = vadd.f32 %v1582, %v1629
  %v1646 = vadd.f32 %v1583, %v1642
  %s1647 = scalar_lea.vmem %s12, 28
  %v1648 = vld [vmem:[%s1647] sm:$0xf]
  %v1650 = vsel %vm964, %v1648, 0
  %1652 = vmatpush.bf16.msra.mxu0 0
  %1653 = vmatpush.bf16.msra.mxu0 0
  %1654 = vmatpush.bf16.msra.mxu0 0
  %1655 = vmatpush.bf16.msra.mxu0 0
  %1656 = vmatpush.bf16.msra.mxu0 0
  %1657 = vmatpush.bf16.msra.mxu0 0
  %1658 = vmatpush.bf16.msra.mxu0 %v895
  %1659 = vmatpush.bf16.msra.mxu0 %v894
  %1660 = vmatmul.bf16.gmra.mxu0 %v1650
  %v1661 = vpop.f32.mrf.mxu0
  %v1662 = vadd.f32 0.0, %v1661
  %v1663 = vpop.f32.mrf.mxu0
  %1664 = vdwg.mxu0
  %v1665 = vpack.c.bf16 %v1662, %v1662
  %s1666 = scalar_lea.vmem %s14, 112
  %v1667 = vld [vmem:[%s1666] sm:$0xff]
  %v1668 = vld [vmem:[%s1666 + $0x8] sm:$0xff]
  %v1671 = vunpack.c.l.b16 %v1667
  %v1672 = vunpack.c.h.b16 %v1667
  %v1673 = vunpack.c.l.b16 %v1668
  %v1674 = vunpack.c.h.b16 %v1668
  %v1675 = vpack.c.b16 %v1673, %v1671
  %v1676 = vpack.c.b16 %v1674, %v1672
  %v1680 = vsel %vm1263, %v1665, 0
  %1682 = vmatpush.bf16.msra.mxu0 0
  %1683 = vmatpush.bf16.msra.mxu0 0
  %1684 = vmatpush.bf16.msra.mxu0 0
  %1685 = vmatpush.bf16.msra.mxu0 0
  %1686 = vmatpush.bf16.msra.mxu0 0
  %1687 = vmatpush.bf16.msra.mxu0 0
  %1688 = vmatpush.bf16.msra.mxu0 0
  %1689 = vmatpush.bf16.msra.mxu0 %v1675
  %1690 = vmatmul.bf16.gmra.mxu0 %v1680
  %v1691 = vpop.f32.mrf.mxu0
  %v1692 = vadd.f32 0.0, %v1691
  %v1693 = vpop.f32.mrf.mxu0
  %1694 = vdwg.mxu0
  %1695 = vmatpush.bf16.msra.mxu0 0
  %1696 = vmatpush.bf16.msra.mxu0 0
  %1697 = vmatpush.bf16.msra.mxu0 0
  %1698 = vmatpush.bf16.msra.mxu0 0
  %1699 = vmatpush.bf16.msra.mxu0 0
  %1700 = vmatpush.bf16.msra.mxu0 0
  %1701 = vmatpush.bf16.msra.mxu0 0
  %1702 = vmatpush.bf16.msra.mxu0 %v1676
  %1703 = vmatmul.bf16.gmra.mxu0 %v1680
  %v1704 = vpop.f32.mrf.mxu0
  %v1705 = vadd.f32 0.0, %v1704
  %v1706 = vpop.f32.mrf.mxu0
  %1707 = vdwg.mxu0
  %v1708 = vadd.f32 %v1645, %v1692
  %v1709 = vadd.f32 %v1646, %v1705
  %s1710 = scalar_lea.vmem %s12, 32
  %v1711 = vld [vmem:[%s1710] sm:$0xf]
  %v1713 = vsel %vm964, %v1711, 0
  %1715 = vmatpush.bf16.msra.mxu0 0
  %1716 = vmatpush.bf16.msra.mxu0 0
  %1717 = vmatpush.bf16.msra.mxu0 0
  %1718 = vmatpush.bf16.msra.mxu0 0
  %1719 = vmatpush.bf16.msra.mxu0 0
  %1720 = vmatpush.bf16.msra.mxu0 0
  %1721 = vmatpush.bf16.msra.mxu0 %v895
  %1722 = vmatpush.bf16.msra.mxu0 %v894
  %1723 = vmatmul.bf16.gmra.mxu0 %v1713
  %v1724 = vpop.f32.mrf.mxu0
  %v1725 = vadd.f32 0.0, %v1724
  %v1726 = vpop.f32.mrf.mxu0
  %1727 = vdwg.mxu0
  %v1728 = vpack.c.bf16 %v1725, %v1725
  %s1729 = scalar_lea.vmem %s14, 128
  %v1730 = vld [vmem:[%s1729] sm:$0xff]
  %v1731 = vld [vmem:[%s1729 + $0x8] sm:$0xff]
  %v1734 = vunpack.c.l.b16 %v1730
  %v1735 = vunpack.c.h.b16 %v1730
  %v1736 = vunpack.c.l.b16 %v1731
  %v1737 = vunpack.c.h.b16 %v1731
  %v1738 = vpack.c.b16 %v1736, %v1734
  %v1739 = vpack.c.b16 %v1737, %v1735
  %v1743 = vsel %vm1263, %v1728, 0
  %1745 = vmatpush.bf16.msra.mxu0 0
  %1746 = vmatpush.bf16.msra.mxu0 0
  %1747 = vmatpush.bf16.msra.mxu0 0
  %1748 = vmatpush.bf16.msra.mxu0 0
  %1749 = vmatpush.bf16.msra.mxu0 0
  %1750 = vmatpush.bf16.msra.mxu0 0
  %1751 = vmatpush.bf16.msra.mxu0 0
  %1752 = vmatpush.bf16.msra.mxu0 %v1738
  %1753 = vmatmul.bf16.gmra.mxu0 %v1743
  %v1754 = vpop.f32.mrf.mxu0
  %v1755 = vadd.f32 0.0, %v1754
  %v1756 = vpop.f32.mrf.mxu0
  %1757 = vdwg.mxu0
  %1758 = vmatpush.bf16.msra.mxu0 0
  %1759 = vmatpush.bf16.msra.mxu0 0
  %1760 = vmatpush.bf16.msra.mxu0 0
  %1761 = vmatpush.bf16.msra.mxu0 0
  %1762 = vmatpush.bf16.msra.mxu0 0
  %1763 = vmatpush.bf16.msra.mxu0 0
  %1764 = vmatpush.bf16.msra.mxu0 0
  %1765 = vmatpush.bf16.msra.mxu0 %v1739
  %1766 = vmatmul.bf16.gmra.mxu0 %v1743
  %v1767 = vpop.f32.mrf.mxu0
  %v1768 = vadd.f32 0.0, %v1767
  %v1769 = vpop.f32.mrf.mxu0
  %1770 = vdwg.mxu0
  %v1771 = vadd.f32 %v1708, %v1755
  %v1772 = vadd.f32 %v1709, %v1768
  %s1773 = scalar_lea.vmem %s12, 36
  %v1774 = vld [vmem:[%s1773] sm:$0xf]
  %v1776 = vsel %vm964, %v1774, 0
  %1778 = vmatpush.bf16.msra.mxu0 0
  %1779 = vmatpush.bf16.msra.mxu0 0
  %1780 = vmatpush.bf16.msra.mxu0 0
  %1781 = vmatpush.bf16.msra.mxu0 0
  %1782 = vmatpush.bf16.msra.mxu0 0
  %1783 = vmatpush.bf16.msra.mxu0 0
  %1784 = vmatpush.bf16.msra.mxu0 %v895
  %1785 = vmatpush.bf16.msra.mxu0 %v894
  %1786 = vmatmul.bf16.gmra.mxu0 %v1776
  %v1787 = vpop.f32.mrf.mxu0
  %v1788 = vadd.f32 0.0, %v1787
  %v1789 = vpop.f32.mrf.mxu0
  %1790 = vdwg.mxu0
  %v1791 = vpack.c.bf16 %v1788, %v1788
  %s1792 = scalar_lea.vmem %s14, 144
  %v1793 = vld [vmem:[%s1792] sm:$0xff]
  %v1794 = vld [vmem:[%s1792 + $0x8] sm:$0xff]
  %v1797 = vunpack.c.l.b16 %v1793
  %v1798 = vunpack.c.h.b16 %v1793
  %v1799 = vunpack.c.l.b16 %v1794
  %v1800 = vunpack.c.h.b16 %v1794
  %v1801 = vpack.c.b16 %v1799, %v1797
  %v1802 = vpack.c.b16 %v1800, %v1798
  %v1806 = vsel %vm1263, %v1791, 0
  %1808 = vmatpush.bf16.msra.mxu0 0
  %1809 = vmatpush.bf16.msra.mxu0 0
  %1810 = vmatpush.bf16.msra.mxu0 0
  %1811 = vmatpush.bf16.msra.mxu0 0
  %1812 = vmatpush.bf16.msra.mxu0 0
  %1813 = vmatpush.bf16.msra.mxu0 0
  %1814 = vmatpush.bf16.msra.mxu0 0
  %1815 = vmatpush.bf16.msra.mxu0 %v1801
  %1816 = vmatmul.bf16.gmra.mxu0 %v1806
  %v1817 = vpop.f32.mrf.mxu0
  %v1818 = vadd.f32 0.0, %v1817
  %v1819 = vpop.f32.mrf.mxu0
  %1820 = vdwg.mxu0
  %1821 = vmatpush.bf16.msra.mxu0 0
  %1822 = vmatpush.bf16.msra.mxu0 0
  %1823 = vmatpush.bf16.msra.mxu0 0
  %1824 = vmatpush.bf16.msra.mxu0 0
  %1825 = vmatpush.bf16.msra.mxu0 0
  %1826 = vmatpush.bf16.msra.mxu0 0
  %1827 = vmatpush.bf16.msra.mxu0 0
  %1828 = vmatpush.bf16.msra.mxu0 %v1802
  %1829 = vmatmul.bf16.gmra.mxu0 %v1806
  %v1830 = vpop.f32.mrf.mxu0
  %v1831 = vadd.f32 0.0, %v1830
  %v1832 = vpop.f32.mrf.mxu0
  %1833 = vdwg.mxu0
  %v1834 = vadd.f32 %v1771, %v1818
  %v1835 = vadd.f32 %v1772, %v1831
  %s1836 = scalar_lea.vmem %s12, 40
  %v1837 = vld [vmem:[%s1836] sm:$0xf]
  %v1839 = vsel %vm964, %v1837, 0
  %1841 = vmatpush.bf16.msra.mxu0 0
  %1842 = vmatpush.bf16.msra.mxu0 0
  %1843 = vmatpush.bf16.msra.mxu0 0
  %1844 = vmatpush.bf16.msra.mxu0 0
  %1845 = vmatpush.bf16.msra.mxu0 0
  %1846 = vmatpush.bf16.msra.mxu0 0
  %1847 = vmatpush.bf16.msra.mxu0 %v895
  %1848 = vmatpush.bf16.msra.mxu0 %v894
  %1849 = vmatmul.bf16.gmra.mxu0 %v1839
  %v1850 = vpop.f32.mrf.mxu0
  %v1851 = vadd.f32 0.0, %v1850
  %v1852 = vpop.f32.mrf.mxu0
  %1853 = vdwg.mxu0
  %v1854 = vpack.c.bf16 %v1851, %v1851
  %s1855 = scalar_lea.vmem %s14, 160
  %v1856 = vld [vmem:[%s1855] sm:$0xff]
  %v1857 = vld [vmem:[%s1855 + $0x8] sm:$0xff]
  %v1860 = vunpack.c.l.b16 %v1856
  %v1861 = vunpack.c.h.b16 %v1856
  %v1862 = vunpack.c.l.b16 %v1857
  %v1863 = vunpack.c.h.b16 %v1857
  %v1864 = vpack.c.b16 %v1862, %v1860
  %v1865 = vpack.c.b16 %v1863, %v1861
  %v1869 = vsel %vm1263, %v1854, 0
  %1871 = vmatpush.bf16.msra.mxu0 0
  %1872 = vmatpush.bf16.msra.mxu0 0
  %1873 = vmatpush.bf16.msra.mxu0 0
  %1874 = vmatpush.bf16.msra.mxu0 0
  %1875 = vmatpush.bf16.msra.mxu0 0
  %1876 = vmatpush.bf16.msra.mxu0 0
  %1877 = vmatpush.bf16.msra.mxu0 0
  %1878 = vmatpush.bf16.msra.mxu0 %v1864
  %1879 = vmatmul.bf16.gmra.mxu0 %v1869
  %v1880 = vpop.f32.mrf.mxu0
  %v1881 = vadd.f32 0.0, %v1880
  %v1882 = vpop.f32.mrf.mxu0
  %1883 = vdwg.mxu0
  %1884 = vmatpush.bf16.msra.mxu0 0
  %1885 = vmatpush.bf16.msra.mxu0 0
  %1886 = vmatpush.bf16.msra.mxu0 0
  %1887 = vmatpush.bf16.msra.mxu0 0
  %1888 = vmatpush.bf16.msra.mxu0 0
  %1889 = vmatpush.bf16.msra.mxu0 0
  %1890 = vmatpush.bf16.msra.mxu0 0
  %1891 = vmatpush.bf16.msra.mxu0 %v1865
  %1892 = vmatmul.bf16.gmra.mxu0 %v1869
  %v1893 = vpop.f32.mrf.mxu0
  %v1894 = vadd.f32 0.0, %v1893
  %v1895 = vpop.f32.mrf.mxu0
  %1896 = vdwg.mxu0
  %v1897 = vadd.f32 %v1834, %v1881
  %v1898 = vadd.f32 %v1835, %v1894
  %s1899 = scalar_lea.vmem %s12, 44
  %v1900 = vld [vmem:[%s1899] sm:$0xf]
  %v1902 = vsel %vm964, %v1900, 0
  %1904 = vmatpush.bf16.msra.mxu0 0
  %1905 = vmatpush.bf16.msra.mxu0 0
  %1906 = vmatpush.bf16.msra.mxu0 0
  %1907 = vmatpush.bf16.msra.mxu0 0
  %1908 = vmatpush.bf16.msra.mxu0 0
  %1909 = vmatpush.bf16.msra.mxu0 0
  %1910 = vmatpush.bf16.msra.mxu0 %v895
  %1911 = vmatpush.bf16.msra.mxu0 %v894
  %1912 = vmatmul.bf16.gmra.mxu0 %v1902
  %v1913 = vpop.f32.mrf.mxu0
  %v1914 = vadd.f32 0.0, %v1913
  %v1915 = vpop.f32.mrf.mxu0
  %1916 = vdwg.mxu0
  %v1917 = vpack.c.bf16 %v1914, %v1914
  %s1918 = scalar_lea.vmem %s14, 176
  %v1919 = vld [vmem:[%s1918] sm:$0xff]
  %v1920 = vld [vmem:[%s1918 + $0x8] sm:$0xff]
  %v1923 = vunpack.c.l.b16 %v1919
  %v1924 = vunpack.c.h.b16 %v1919
  %v1925 = vunpack.c.l.b16 %v1920
  %v1926 = vunpack.c.h.b16 %v1920
  %v1927 = vpack.c.b16 %v1925, %v1923
  %v1928 = vpack.c.b16 %v1926, %v1924
  %v1932 = vsel %vm1263, %v1917, 0
  %1934 = vmatpush.bf16.msra.mxu0 0
  %1935 = vmatpush.bf16.msra.mxu0 0
  %1936 = vmatpush.bf16.msra.mxu0 0
  %1937 = vmatpush.bf16.msra.mxu0 0
  %1938 = vmatpush.bf16.msra.mxu0 0
  %1939 = vmatpush.bf16.msra.mxu0 0
  %1940 = vmatpush.bf16.msra.mxu0 0
  %1941 = vmatpush.bf16.msra.mxu0 %v1927
  %1942 = vmatmul.bf16.gmra.mxu0 %v1932
  %v1943 = vpop.f32.mrf.mxu0
  %v1944 = vadd.f32 0.0, %v1943
  %v1945 = vpop.f32.mrf.mxu0
  %1946 = vdwg.mxu0
  %1947 = vmatpush.bf16.msra.mxu0 0
  %1948 = vmatpush.bf16.msra.mxu0 0
  %1949 = vmatpush.bf16.msra.mxu0 0
  %1950 = vmatpush.bf16.msra.mxu0 0
  %1951 = vmatpush.bf16.msra.mxu0 0
  %1952 = vmatpush.bf16.msra.mxu0 0
  %1953 = vmatpush.bf16.msra.mxu0 0
  %1954 = vmatpush.bf16.msra.mxu0 %v1928
  %1955 = vmatmul.bf16.gmra.mxu0 %v1932
  %v1956 = vpop.f32.mrf.mxu0
  %v1957 = vadd.f32 0.0, %v1956
  %v1958 = vpop.f32.mrf.mxu0
  %1959 = vdwg.mxu0
  %v1960 = vadd.f32 %v1897, %v1944
  %v1961 = vadd.f32 %v1898, %v1957
  %s1962 = scalar_lea.vmem %s12, 48
  %v1963 = vld [vmem:[%s1962] sm:$0xf]
  %v1965 = vsel %vm964, %v1963, 0
  %1967 = vmatpush.bf16.msra.mxu0 0
  %1968 = vmatpush.bf16.msra.mxu0 0
  %1969 = vmatpush.bf16.msra.mxu0 0
  %1970 = vmatpush.bf16.msra.mxu0 0
  %1971 = vmatpush.bf16.msra.mxu0 0
  %1972 = vmatpush.bf16.msra.mxu0 0
  %1973 = vmatpush.bf16.msra.mxu0 %v895
  %1974 = vmatpush.bf16.msra.mxu0 %v894
  %1975 = vmatmul.bf16.gmra.mxu0 %v1965
  %v1976 = vpop.f32.mrf.mxu0
  %v1977 = vadd.f32 0.0, %v1976
  %v1978 = vpop.f32.mrf.mxu0
  %1979 = vdwg.mxu0
  %v1980 = vpack.c.bf16 %v1977, %v1977
  %s1981 = scalar_lea.vmem %s14, 192
  %v1982 = vld [vmem:[%s1981] sm:$0xff]
  %v1983 = vld [vmem:[%s1981 + $0x8] sm:$0xff]
  %v1986 = vunpack.c.l.b16 %v1982
  %v1987 = vunpack.c.h.b16 %v1982
  %v1988 = vunpack.c.l.b16 %v1983
  %v1989 = vunpack.c.h.b16 %v1983
  %v1990 = vpack.c.b16 %v1988, %v1986
  %v1991 = vpack.c.b16 %v1989, %v1987
  %v1995 = vsel %vm1263, %v1980, 0
  %1997 = vmatpush.bf16.msra.mxu0 0
  %1998 = vmatpush.bf16.msra.mxu0 0
  %1999 = vmatpush.bf16.msra.mxu0 0
  %2000 = vmatpush.bf16.msra.mxu0 0
  %2001 = vmatpush.bf16.msra.mxu0 0
  %2002 = vmatpush.bf16.msra.mxu0 0
  %2003 = vmatpush.bf16.msra.mxu0 0
  %2004 = vmatpush.bf16.msra.mxu0 %v1990
  %2005 = vmatmul.bf16.gmra.mxu0 %v1995
  %v2006 = vpop.f32.mrf.mxu0
  %v2007 = vadd.f32 0.0, %v2006
  %v2008 = vpop.f32.mrf.mxu0
  %2009 = vdwg.mxu0
  %2010 = vmatpush.bf16.msra.mxu0 0
  %2011 = vmatpush.bf16.msra.mxu0 0
  %2012 = vmatpush.bf16.msra.mxu0 0
  %2013 = vmatpush.bf16.msra.mxu0 0
  %2014 = vmatpush.bf16.msra.mxu0 0
  %2015 = vmatpush.bf16.msra.mxu0 0
  %2016 = vmatpush.bf16.msra.mxu0 0
  %2017 = vmatpush.bf16.msra.mxu0 %v1991
  %2018 = vmatmul.bf16.gmra.mxu0 %v1995
  %v2019 = vpop.f32.mrf.mxu0
  %v2020 = vadd.f32 0.0, %v2019
  %v2021 = vpop.f32.mrf.mxu0
  %2022 = vdwg.mxu0
  %v2023 = vadd.f32 %v1960, %v2007
  %v2024 = vadd.f32 %v1961, %v2020
  %s2025 = scalar_lea.vmem %s12, 52
  %v2026 = vld [vmem:[%s2025] sm:$0xf]
  %v2028 = vsel %vm964, %v2026, 0
  %2030 = vmatpush.bf16.msra.mxu0 0
  %2031 = vmatpush.bf16.msra.mxu0 0
  %2032 = vmatpush.bf16.msra.mxu0 0
  %2033 = vmatpush.bf16.msra.mxu0 0
  %2034 = vmatpush.bf16.msra.mxu0 0
  %2035 = vmatpush.bf16.msra.mxu0 0
  %2036 = vmatpush.bf16.msra.mxu0 %v895
  %2037 = vmatpush.bf16.msra.mxu0 %v894
  %2038 = vmatmul.bf16.gmra.mxu0 %v2028
  %v2039 = vpop.f32.mrf.mxu0
  %v2040 = vadd.f32 0.0, %v2039
  %v2041 = vpop.f32.mrf.mxu0
  %2042 = vdwg.mxu0
  %v2043 = vpack.c.bf16 %v2040, %v2040
  %s2044 = scalar_lea.vmem %s14, 208
  %v2045 = vld [vmem:[%s2044] sm:$0xff]
  %v2046 = vld [vmem:[%s2044 + $0x8] sm:$0xff]
  %v2049 = vunpack.c.l.b16 %v2045
  %v2050 = vunpack.c.h.b16 %v2045
  %v2051 = vunpack.c.l.b16 %v2046
  %v2052 = vunpack.c.h.b16 %v2046
  %v2053 = vpack.c.b16 %v2051, %v2049
  %v2054 = vpack.c.b16 %v2052, %v2050
  %v2058 = vsel %vm1263, %v2043, 0
  %2060 = vmatpush.bf16.msra.mxu0 0
  %2061 = vmatpush.bf16.msra.mxu0 0
  %2062 = vmatpush.bf16.msra.mxu0 0
  %2063 = vmatpush.bf16.msra.mxu0 0
  %2064 = vmatpush.bf16.msra.mxu0 0
  %2065 = vmatpush.bf16.msra.mxu0 0
  %2066 = vmatpush.bf16.msra.mxu0 0
  %2067 = vmatpush.bf16.msra.mxu0 %v2053
  %2068 = vmatmul.bf16.gmra.mxu0 %v2058
  %v2069 = vpop.f32.mrf.mxu0
  %v2070 = vadd.f32 0.0, %v2069
  %v2071 = vpop.f32.mrf.mxu0
  %2072 = vdwg.mxu0
  %2073 = vmatpush.bf16.msra.mxu0 0
  %2074 = vmatpush.bf16.msra.mxu0 0
  %2075 = vmatpush.bf16.msra.mxu0 0
  %2076 = vmatpush.bf16.msra.mxu0 0
  %2077 = vmatpush.bf16.msra.mxu0 0
  %2078 = vmatpush.bf16.msra.mxu0 0
  %2079 = vmatpush.bf16.msra.mxu0 0
  %2080 = vmatpush.bf16.msra.mxu0 %v2054
  %2081 = vmatmul.bf16.gmra.mxu0 %v2058
  %v2082 = vpop.f32.mrf.mxu0
  %v2083 = vadd.f32 0.0, %v2082
  %v2084 = vpop.f32.mrf.mxu0
  %2085 = vdwg.mxu0
  %v2086 = vadd.f32 %v2023, %v2070
  %v2087 = vadd.f32 %v2024, %v2083
  %s2088 = scalar_lea.vmem %s12, 56
  %v2089 = vld [vmem:[%s2088] sm:$0xf]
  %v2091 = vsel %vm964, %v2089, 0
  %2093 = vmatpush.bf16.msra.mxu0 0
  %2094 = vmatpush.bf16.msra.mxu0 0
  %2095 = vmatpush.bf16.msra.mxu0 0
  %2096 = vmatpush.bf16.msra.mxu0 0
  %2097 = vmatpush.bf16.msra.mxu0 0
  %2098 = vmatpush.bf16.msra.mxu0 0
  %2099 = vmatpush.bf16.msra.mxu0 %v895
  %2100 = vmatpush.bf16.msra.mxu0 %v894
  %2101 = vmatmul.bf16.gmra.mxu0 %v2091
  %v2102 = vpop.f32.mrf.mxu0
  %v2103 = vadd.f32 0.0, %v2102
  %v2104 = vpop.f32.mrf.mxu0
  %2105 = vdwg.mxu0
  %v2106 = vpack.c.bf16 %v2103, %v2103
  %s2107 = scalar_lea.vmem %s14, 224
  %v2108 = vld [vmem:[%s2107] sm:$0xff]
  %v2109 = vld [vmem:[%s2107 + $0x8] sm:$0xff]
  %v2112 = vunpack.c.l.b16 %v2108
  %v2113 = vunpack.c.h.b16 %v2108
  %v2114 = vunpack.c.l.b16 %v2109
  %v2115 = vunpack.c.h.b16 %v2109
  %v2116 = vpack.c.b16 %v2114, %v2112
  %v2117 = vpack.c.b16 %v2115, %v2113
  %v2121 = vsel %vm1263, %v2106, 0
  %2123 = vmatpush.bf16.msra.mxu0 0
  %2124 = vmatpush.bf16.msra.mxu0 0
  %2125 = vmatpush.bf16.msra.mxu0 0
  %2126 = vmatpush.bf16.msra.mxu0 0
  %2127 = vmatpush.bf16.msra.mxu0 0
  %2128 = vmatpush.bf16.msra.mxu0 0
  %2129 = vmatpush.bf16.msra.mxu0 0
  %2130 = vmatpush.bf16.msra.mxu0 %v2116
  %2131 = vmatmul.bf16.gmra.mxu0 %v2121
  %v2132 = vpop.f32.mrf.mxu0
  %v2133 = vadd.f32 0.0, %v2132
  %v2134 = vpop.f32.mrf.mxu0
  %2135 = vdwg.mxu0
  %2136 = vmatpush.bf16.msra.mxu0 0
  %2137 = vmatpush.bf16.msra.mxu0 0
  %2138 = vmatpush.bf16.msra.mxu0 0
  %2139 = vmatpush.bf16.msra.mxu0 0
  %2140 = vmatpush.bf16.msra.mxu0 0
  %2141 = vmatpush.bf16.msra.mxu0 0
  %2142 = vmatpush.bf16.msra.mxu0 0
  %2143 = vmatpush.bf16.msra.mxu0 %v2117
  %2144 = vmatmul.bf16.gmra.mxu0 %v2121
  %v2145 = vpop.f32.mrf.mxu0
  %v2146 = vadd.f32 0.0, %v2145
  %v2147 = vpop.f32.mrf.mxu0
  %2148 = vdwg.mxu0
  %v2149 = vadd.f32 %v2086, %v2133
  %v2150 = vadd.f32 %v2087, %v2146
  %s2151 = scalar_lea.vmem %s12, 60
  %v2152 = vld [vmem:[%s2151] sm:$0xf]
  %v2154 = vsel %vm964, %v2152, 0
  %2156 = vmatpush.bf16.msra.mxu0 0
  %2157 = vmatpush.bf16.msra.mxu0 0
  %2158 = vmatpush.bf16.msra.mxu0 0
  %2159 = vmatpush.bf16.msra.mxu0 0
  %2160 = vmatpush.bf16.msra.mxu0 0
  %2161 = vmatpush.bf16.msra.mxu0 0
  %2162 = vmatpush.bf16.msra.mxu0 %v895
  %2163 = vmatpush.bf16.msra.mxu0 %v894
  %2164 = vmatmul.bf16.gmra.mxu0 %v2154
  %v2165 = vpop.f32.mrf.mxu0
  %v2166 = vadd.f32 0.0, %v2165
  %v2167 = vpop.f32.mrf.mxu0
  %2168 = vdwg.mxu0
  %v2169 = vpack.c.bf16 %v2166, %v2166
  %s2170 = scalar_lea.vmem %s14, 240
  %v2171 = vld [vmem:[%s2170] sm:$0xff]
  %v2172 = vld [vmem:[%s2170 + $0x8] sm:$0xff]
  %v2175 = vunpack.c.l.b16 %v2171
  %v2176 = vunpack.c.h.b16 %v2171
  %v2177 = vunpack.c.l.b16 %v2172
  %v2178 = vunpack.c.h.b16 %v2172
  %v2179 = vpack.c.b16 %v2177, %v2175
  %v2180 = vpack.c.b16 %v2178, %v2176
  %v2184 = vsel %vm1263, %v2169, 0
  %2186 = vmatpush.bf16.msra.mxu0 0
  %2187 = vmatpush.bf16.msra.mxu0 0
  %2188 = vmatpush.bf16.msra.mxu0 0
  %2189 = vmatpush.bf16.msra.mxu0 0
  %2190 = vmatpush.bf16.msra.mxu0 0
  %2191 = vmatpush.bf16.msra.mxu0 0
  %2192 = vmatpush.bf16.msra.mxu0 0
  %2193 = vmatpush.bf16.msra.mxu0 %v2179
  %2194 = vmatmul.bf16.gmra.mxu0 %v2184
  %v2195 = vpop.f32.mrf.mxu0
  %v2196 = vadd.f32 0.0, %v2195
  %v2197 = vpop.f32.mrf.mxu0
  %2198 = vdwg.mxu0
  %2199 = vmatpush.bf16.msra.mxu0 0
  %2200 = vmatpush.bf16.msra.mxu0 0
  %2201 = vmatpush.bf16.msra.mxu0 0
  %2202 = vmatpush.bf16.msra.mxu0 0
  %2203 = vmatpush.bf16.msra.mxu0 0
  %2204 = vmatpush.bf16.msra.mxu0 0
  %2205 = vmatpush.bf16.msra.mxu0 0
  %2206 = vmatpush.bf16.msra.mxu0 %v2180
  %2207 = vmatmul.bf16.gmra.mxu0 %v2184
  %v2208 = vpop.f32.mrf.mxu0
  %v2209 = vadd.f32 0.0, %v2208
  %v2210 = vpop.f32.mrf.mxu0
  %2211 = vdwg.mxu0
  %v2212 = vadd.f32 %v2149, %v2196
  %v2213 = vadd.f32 %v2150, %v2209
  %v2214 = vld [vmem:[%s13] sm:$0xf]
  %v2216 = vsel %vm1263, %v2214, 0
  %2218 = vmatpush.bf16.msra.mxu0 0
  %2219 = vmatpush.bf16.msra.mxu0 0
  %2220 = vmatpush.bf16.msra.mxu0 0
  %2221 = vmatpush.bf16.msra.mxu0 0
  %2222 = vmatpush.bf16.msra.mxu0 0
  %2223 = vmatpush.bf16.msra.mxu0 0
  %2224 = vmatpush.bf16.msra.mxu0 0
  %2225 = vmatpush.bf16.msra.mxu0 %v1210
  %2226 = vmatmul.bf16.gmra.mxu0 %v2216
  %v2227 = vpop.f32.mrf.mxu0
  %v2228 = vadd.f32 0.0, %v2227
  %v2229 = vpop.f32.mrf.mxu0
  %2230 = vdwg.mxu0
  %v2231 = vpack.c.bf16 %v2228, %v2228
  %s2232 = scalar_lea.vmem %s14, 256
  %v2233 = vld [vmem:[%s2232] sm:$0xff]
  %v2234 = vld [vmem:[%s2232 + $0x8] sm:$0xff]
  %v2237 = vunpack.c.l.b16 %v2233
  %v2238 = vunpack.c.h.b16 %v2233
  %v2239 = vunpack.c.l.b16 %v2234
  %v2240 = vunpack.c.h.b16 %v2234
  %v2241 = vpack.c.b16 %v2239, %v2237
  %v2242 = vpack.c.b16 %v2240, %v2238
  %v2246 = vsel %vm1263, %v2231, 0
  %2248 = vmatpush.bf16.msra.mxu0 0
  %2249 = vmatpush.bf16.msra.mxu0 0
  %2250 = vmatpush.bf16.msra.mxu0 0
  %2251 = vmatpush.bf16.msra.mxu0 0
  %2252 = vmatpush.bf16.msra.mxu0 0
  %2253 = vmatpush.bf16.msra.mxu0 0
  %2254 = vmatpush.bf16.msra.mxu0 0
  %2255 = vmatpush.bf16.msra.mxu0 %v2241
  %2256 = vmatmul.bf16.gmra.mxu0 %v2246
  %v2257 = vpop.f32.mrf.mxu0
  %v2258 = vadd.f32 0.0, %v2257
  %v2259 = vpop.f32.mrf.mxu0
  %2260 = vdwg.mxu0
  %2261 = vmatpush.bf16.msra.mxu0 0
  %2262 = vmatpush.bf16.msra.mxu0 0
  %2263 = vmatpush.bf16.msra.mxu0 0
  %2264 = vmatpush.bf16.msra.mxu0 0
  %2265 = vmatpush.bf16.msra.mxu0 0
  %2266 = vmatpush.bf16.msra.mxu0 0
  %2267 = vmatpush.bf16.msra.mxu0 0
  %2268 = vmatpush.bf16.msra.mxu0 %v2242
  %2269 = vmatmul.bf16.gmra.mxu0 %v2246
  %v2270 = vpop.f32.mrf.mxu0
  %v2271 = vadd.f32 0.0, %v2270
  %v2272 = vpop.f32.mrf.mxu0
  %2273 = vdwg.mxu0
  %v2274 = vadd.f32 %v2212, %v2258
  %v2275 = vadd.f32 %v2213, %v2271
  %s2276 = scalar_lea.vmem %s13, 4
  %v2277 = vld [vmem:[%s2276] sm:$0xf]
  %v2279 = vsel %vm1263, %v2277, 0
  %2281 = vmatpush.bf16.msra.mxu0 0
  %2282 = vmatpush.bf16.msra.mxu0 0
  %2283 = vmatpush.bf16.msra.mxu0 0
  %2284 = vmatpush.bf16.msra.mxu0 0
  %2285 = vmatpush.bf16.msra.mxu0 0
  %2286 = vmatpush.bf16.msra.mxu0 0
  %2287 = vmatpush.bf16.msra.mxu0 0
  %2288 = vmatpush.bf16.msra.mxu0 %v1210
  %2289 = vmatmul.bf16.gmra.mxu0 %v2279
  %v2290 = vpop.f32.mrf.mxu0
  %v2291 = vadd.f32 0.0, %v2290
  %v2292 = vpop.f32.mrf.mxu0
  %2293 = vdwg.mxu0
  %v2294 = vpack.c.bf16 %v2291, %v2291
  %s2295 = scalar_lea.vmem %s14, 272
  %v2296 = vld [vmem:[%s2295] sm:$0xff]
  %v2297 = vld [vmem:[%s2295 + $0x8] sm:$0xff]
  %v2300 = vunpack.c.l.b16 %v2296
  %v2301 = vunpack.c.h.b16 %v2296
  %v2302 = vunpack.c.l.b16 %v2297
  %v2303 = vunpack.c.h.b16 %v2297
  %v2304 = vpack.c.b16 %v2302, %v2300
  %v2305 = vpack.c.b16 %v2303, %v2301
  %v2309 = vsel %vm1263, %v2294, 0
  %2311 = vmatpush.bf16.msra.mxu0 0
  %2312 = vmatpush.bf16.msra.mxu0 0
  %2313 = vmatpush.bf16.msra.mxu0 0
  %2314 = vmatpush.bf16.msra.mxu0 0
  %2315 = vmatpush.bf16.msra.mxu0 0
  %2316 = vmatpush.bf16.msra.mxu0 0
  %2317 = vmatpush.bf16.msra.mxu0 0
  %2318 = vmatpush.bf16.msra.mxu0 %v2304
  %2319 = vmatmul.bf16.gmra.mxu0 %v2309
  %v2320 = vpop.f32.mrf.mxu0
  %v2321 = vadd.f32 0.0, %v2320
  %v2322 = vpop.f32.mrf.mxu0
  %2323 = vdwg.mxu0
  %2324 = vmatpush.bf16.msra.mxu0 0
  %2325 = vmatpush.bf16.msra.mxu0 0
  %2326 = vmatpush.bf16.msra.mxu0 0
  %2327 = vmatpush.bf16.msra.mxu0 0
  %2328 = vmatpush.bf16.msra.mxu0 0
  %2329 = vmatpush.bf16.msra.mxu0 0
  %2330 = vmatpush.bf16.msra.mxu0 0
  %2331 = vmatpush.bf16.msra.mxu0 %v2305
  %2332 = vmatmul.bf16.gmra.mxu0 %v2309
  %v2333 = vpop.f32.mrf.mxu0
  %v2334 = vadd.f32 0.0, %v2333
  %v2335 = vpop.f32.mrf.mxu0
  %2336 = vdwg.mxu0
  %v2337 = vadd.f32 %v2274, %v2321
  %v2338 = vadd.f32 %v2275, %v2334
  %s2339 = scalar_lea.vmem %s13, 8
  %v2340 = vld [vmem:[%s2339] sm:$0xf]
  %v2342 = vsel %vm1263, %v2340, 0
  %2344 = vmatpush.bf16.msra.mxu0 0
  %2345 = vmatpush.bf16.msra.mxu0 0
  %2346 = vmatpush.bf16.msra.mxu0 0
  %2347 = vmatpush.bf16.msra.mxu0 0
  %2348 = vmatpush.bf16.msra.mxu0 0
  %2349 = vmatpush.bf16.msra.mxu0 0
  %2350 = vmatpush.bf16.msra.mxu0 0
  %2351 = vmatpush.bf16.msra.mxu0 %v1210
  %2352 = vmatmul.bf16.gmra.mxu0 %v2342
  %v2353 = vpop.f32.mrf.mxu0
  %v2354 = vadd.f32 0.0, %v2353
  %v2355 = vpop.f32.mrf.mxu0
  %2356 = vdwg.mxu0
  %v2357 = vpack.c.bf16 %v2354, %v2354
  %s2358 = scalar_lea.vmem %s14, 288
  %v2359 = vld [vmem:[%s2358] sm:$0xff]
  %v2360 = vld [vmem:[%s2358 + $0x8] sm:$0xff]
  %v2363 = vunpack.c.l.b16 %v2359
  %v2364 = vunpack.c.h.b16 %v2359
  %v2365 = vunpack.c.l.b16 %v2360
  %v2366 = vunpack.c.h.b16 %v2360
  %v2367 = vpack.c.b16 %v2365, %v2363
  %v2368 = vpack.c.b16 %v2366, %v2364
  %v2372 = vsel %vm1263, %v2357, 0
  %2374 = vmatpush.bf16.msra.mxu0 0
  %2375 = vmatpush.bf16.msra.mxu0 0
  %2376 = vmatpush.bf16.msra.mxu0 0
  %2377 = vmatpush.bf16.msra.mxu0 0
  %2378 = vmatpush.bf16.msra.mxu0 0
  %2379 = vmatpush.bf16.msra.mxu0 0
  %2380 = vmatpush.bf16.msra.mxu0 0
  %2381 = vmatpush.bf16.msra.mxu0 %v2367
  %2382 = vmatmul.bf16.gmra.mxu0 %v2372
  %v2383 = vpop.f32.mrf.mxu0
  %v2384 = vadd.f32 0.0, %v2383
  %v2385 = vpop.f32.mrf.mxu0
  %2386 = vdwg.mxu0
  %2387 = vmatpush.bf16.msra.mxu0 0
  %2388 = vmatpush.bf16.msra.mxu0 0
  %2389 = vmatpush.bf16.msra.mxu0 0
  %2390 = vmatpush.bf16.msra.mxu0 0
  %2391 = vmatpush.bf16.msra.mxu0 0
  %2392 = vmatpush.bf16.msra.mxu0 0
  %2393 = vmatpush.bf16.msra.mxu0 0
  %2394 = vmatpush.bf16.msra.mxu0 %v2368
  %2395 = vmatmul.bf16.gmra.mxu0 %v2372
  %v2396 = vpop.f32.mrf.mxu0
  %v2397 = vadd.f32 0.0, %v2396
  %v2398 = vpop.f32.mrf.mxu0
  %2399 = vdwg.mxu0
  %v2400 = vadd.f32 %v2337, %v2384
  %v2401 = vadd.f32 %v2338, %v2397
  %s2402 = scalar_lea.vmem %s13, 12
  %v2403 = vld [vmem:[%s2402] sm:$0xf]
  %v2405 = vsel %vm1263, %v2403, 0
  %2407 = vmatpush.bf16.msra.mxu0 0
  %2408 = vmatpush.bf16.msra.mxu0 0
  %2409 = vmatpush.bf16.msra.mxu0 0
  %2410 = vmatpush.bf16.msra.mxu0 0
  %2411 = vmatpush.bf16.msra.mxu0 0
  %2412 = vmatpush.bf16.msra.mxu0 0
  %2413 = vmatpush.bf16.msra.mxu0 0
  %2414 = vmatpush.bf16.msra.mxu0 %v1210
  %2415 = vmatmul.bf16.gmra.mxu0 %v2405
  %v2416 = vpop.f32.mrf.mxu0
  %v2417 = vadd.f32 0.0, %v2416
  %v2418 = vpop.f32.mrf.mxu0
  %2419 = vdwg.mxu0
  %v2420 = vpack.c.bf16 %v2417, %v2417
  %s2421 = scalar_lea.vmem %s14, 304
  %v2422 = vld [vmem:[%s2421] sm:$0xff]
  %v2423 = vld [vmem:[%s2421 + $0x8] sm:$0xff]
  %v2426 = vunpack.c.l.b16 %v2422
  %v2427 = vunpack.c.h.b16 %v2422
  %v2428 = vunpack.c.l.b16 %v2423
  %v2429 = vunpack.c.h.b16 %v2423
  %v2430 = vpack.c.b16 %v2428, %v2426
  %v2431 = vpack.c.b16 %v2429, %v2427
  %v2435 = vsel %vm1263, %v2420, 0
  %2437 = vmatpush.bf16.msra.mxu0 0
  %2438 = vmatpush.bf16.msra.mxu0 0
  %2439 = vmatpush.bf16.msra.mxu0 0
  %2440 = vmatpush.bf16.msra.mxu0 0
  %2441 = vmatpush.bf16.msra.mxu0 0
  %2442 = vmatpush.bf16.msra.mxu0 0
  %2443 = vmatpush.bf16.msra.mxu0 0
  %2444 = vmatpush.bf16.msra.mxu0 %v2430
  %2445 = vmatmul.bf16.gmra.mxu0 %v2435
  %v2446 = vpop.f32.mrf.mxu0
  %v2447 = vadd.f32 0.0, %v2446
  %v2448 = vpop.f32.mrf.mxu0
  %2449 = vdwg.mxu0
  %2450 = vmatpush.bf16.msra.mxu0 0
  %2451 = vmatpush.bf16.msra.mxu0 0
  %2452 = vmatpush.bf16.msra.mxu0 0
  %2453 = vmatpush.bf16.msra.mxu0 0
  %2454 = vmatpush.bf16.msra.mxu0 0
  %2455 = vmatpush.bf16.msra.mxu0 0
  %2456 = vmatpush.bf16.msra.mxu0 0
  %2457 = vmatpush.bf16.msra.mxu0 %v2431
  %2458 = vmatmul.bf16.gmra.mxu0 %v2435
  %v2459 = vpop.f32.mrf.mxu0
  %v2460 = vadd.f32 0.0, %v2459
  %v2461 = vpop.f32.mrf.mxu0
  %2462 = vdwg.mxu0
  %v2463 = vadd.f32 %v2400, %v2447
  %v2464 = vadd.f32 %v2401, %v2460
  %s2465 = scalar_lea.vmem %s13, 16
  %v2466 = vld [vmem:[%s2465] sm:$0xf]
  %v2468 = vsel %vm1263, %v2466, 0
  %2470 = vmatpush.bf16.msra.mxu0 0
  %2471 = vmatpush.bf16.msra.mxu0 0
  %2472 = vmatpush.bf16.msra.mxu0 0
  %2473 = vmatpush.bf16.msra.mxu0 0
  %2474 = vmatpush.bf16.msra.mxu0 0
  %2475 = vmatpush.bf16.msra.mxu0 0
  %2476 = vmatpush.bf16.msra.mxu0 0
  %2477 = vmatpush.bf16.msra.mxu0 %v1210
  %2478 = vmatmul.bf16.gmra.mxu0 %v2468
  %v2479 = vpop.f32.mrf.mxu0
  %v2480 = vadd.f32 0.0, %v2479
  %v2481 = vpop.f32.mrf.mxu0
  %2482 = vdwg.mxu0
  %v2483 = vpack.c.bf16 %v2480, %v2480
  %s2484 = scalar_lea.vmem %s14, 320
  %v2485 = vld [vmem:[%s2484] sm:$0xff]
  %v2486 = vld [vmem:[%s2484 + $0x8] sm:$0xff]
  %v2489 = vunpack.c.l.b16 %v2485
  %v2490 = vunpack.c.h.b16 %v2485
  %v2491 = vunpack.c.l.b16 %v2486
  %v2492 = vunpack.c.h.b16 %v2486
  %v2493 = vpack.c.b16 %v2491, %v2489
  %v2494 = vpack.c.b16 %v2492, %v2490
  %v2498 = vsel %vm1263, %v2483, 0
  %2500 = vmatpush.bf16.msra.mxu0 0
  %2501 = vmatpush.bf16.msra.mxu0 0
  %2502 = vmatpush.bf16.msra.mxu0 0
  %2503 = vmatpush.bf16.msra.mxu0 0
  %2504 = vmatpush.bf16.msra.mxu0 0
  %2505 = vmatpush.bf16.msra.mxu0 0
  %2506 = vmatpush.bf16.msra.mxu0 0
  %2507 = vmatpush.bf16.msra.mxu0 %v2493
  %2508 = vmatmul.bf16.gmra.mxu0 %v2498
  %v2509 = vpop.f32.mrf.mxu0
  %v2510 = vadd.f32 0.0, %v2509
  %v2511 = vpop.f32.mrf.mxu0
  %2512 = vdwg.mxu0
  %2513 = vmatpush.bf16.msra.mxu0 0
  %2514 = vmatpush.bf16.msra.mxu0 0
  %2515 = vmatpush.bf16.msra.mxu0 0
  %2516 = vmatpush.bf16.msra.mxu0 0
  %2517 = vmatpush.bf16.msra.mxu0 0
  %2518 = vmatpush.bf16.msra.mxu0 0
  %2519 = vmatpush.bf16.msra.mxu0 0
  %2520 = vmatpush.bf16.msra.mxu0 %v2494
  %2521 = vmatmul.bf16.gmra.mxu0 %v2498
  %v2522 = vpop.f32.mrf.mxu0
  %v2523 = vadd.f32 0.0, %v2522
  %v2524 = vpop.f32.mrf.mxu0
  %2525 = vdwg.mxu0
  %v2526 = vadd.f32 %v2463, %v2510
  %v2527 = vadd.f32 %v2464, %v2523
  %s2528 = scalar_lea.vmem %s13, 20
  %v2529 = vld [vmem:[%s2528] sm:$0xf]
  %v2531 = vsel %vm1263, %v2529, 0
  %2533 = vmatpush.bf16.msra.mxu0 0
  %2534 = vmatpush.bf16.msra.mxu0 0
  %2535 = vmatpush.bf16.msra.mxu0 0
  %2536 = vmatpush.bf16.msra.mxu0 0
  %2537 = vmatpush.bf16.msra.mxu0 0
  %2538 = vmatpush.bf16.msra.mxu0 0
  %2539 = vmatpush.bf16.msra.mxu0 0
  %2540 = vmatpush.bf16.msra.mxu0 %v1210
  %2541 = vmatmul.bf16.gmra.mxu0 %v2531
  %v2542 = vpop.f32.mrf.mxu0
  %v2543 = vadd.f32 0.0, %v2542
  %v2544 = vpop.f32.mrf.mxu0
  %2545 = vdwg.mxu0
  %v2546 = vpack.c.bf16 %v2543, %v2543
  %s2547 = scalar_lea.vmem %s14, 336
  %v2548 = vld [vmem:[%s2547] sm:$0xff]
  %v2549 = vld [vmem:[%s2547 + $0x8] sm:$0xff]
  %v2552 = vunpack.c.l.b16 %v2548
  %v2553 = vunpack.c.h.b16 %v2548
  %v2554 = vunpack.c.l.b16 %v2549
  %v2555 = vunpack.c.h.b16 %v2549
  %v2556 = vpack.c.b16 %v2554, %v2552
  %v2557 = vpack.c.b16 %v2555, %v2553
  %v2561 = vsel %vm1263, %v2546, 0
  %2563 = vmatpush.bf16.msra.mxu0 0
  %2564 = vmatpush.bf16.msra.mxu0 0
  %2565 = vmatpush.bf16.msra.mxu0 0
  %2566 = vmatpush.bf16.msra.mxu0 0
  %2567 = vmatpush.bf16.msra.mxu0 0
  %2568 = vmatpush.bf16.msra.mxu0 0
  %2569 = vmatpush.bf16.msra.mxu0 0
  %2570 = vmatpush.bf16.msra.mxu0 %v2556
  %2571 = vmatmul.bf16.gmra.mxu0 %v2561
  %v2572 = vpop.f32.mrf.mxu0
  %v2573 = vadd.f32 0.0, %v2572
  %v2574 = vpop.f32.mrf.mxu0
  %2575 = vdwg.mxu0
  %2576 = vmatpush.bf16.msra.mxu0 0
  %2577 = vmatpush.bf16.msra.mxu0 0
  %2578 = vmatpush.bf16.msra.mxu0 0
  %2579 = vmatpush.bf16.msra.mxu0 0
  %2580 = vmatpush.bf16.msra.mxu0 0
  %2581 = vmatpush.bf16.msra.mxu0 0
  %2582 = vmatpush.bf16.msra.mxu0 0
  %2583 = vmatpush.bf16.msra.mxu0 %v2557
  %2584 = vmatmul.bf16.gmra.mxu0 %v2561
  %v2585 = vpop.f32.mrf.mxu0
  %v2586 = vadd.f32 0.0, %v2585
  %v2587 = vpop.f32.mrf.mxu0
  %2588 = vdwg.mxu0
  %v2589 = vadd.f32 %v2526, %v2573
  %v2590 = vadd.f32 %v2527, %v2586
  %s2591 = scalar_lea.vmem %s13, 24
  %v2592 = vld [vmem:[%s2591] sm:$0xf]
  %v2594 = vsel %vm1263, %v2592, 0
  %2596 = vmatpush.bf16.msra.mxu0 0
  %2597 = vmatpush.bf16.msra.mxu0 0
  %2598 = vmatpush.bf16.msra.mxu0 0
  %2599 = vmatpush.bf16.msra.mxu0 0
  %2600 = vmatpush.bf16.msra.mxu0 0
  %2601 = vmatpush.bf16.msra.mxu0 0
  %2602 = vmatpush.bf16.msra.mxu0 0
  %2603 = vmatpush.bf16.msra.mxu0 %v1210
  %2604 = vmatmul.bf16.gmra.mxu0 %v2594
  %v2605 = vpop.f32.mrf.mxu0
  %v2606 = vadd.f32 0.0, %v2605
  %v2607 = vpop.f32.mrf.mxu0
  %2608 = vdwg.mxu0
  %v2609 = vpack.c.bf16 %v2606, %v2606
  %s2610 = scalar_lea.vmem %s14, 352
  %v2611 = vld [vmem:[%s2610] sm:$0xff]
  %v2612 = vld [vmem:[%s2610 + $0x8] sm:$0xff]
  %v2615 = vunpack.c.l.b16 %v2611
  %v2616 = vunpack.c.h.b16 %v2611
  %v2617 = vunpack.c.l.b16 %v2612
  %v2618 = vunpack.c.h.b16 %v2612
  %v2619 = vpack.c.b16 %v2617, %v2615
  %v2620 = vpack.c.b16 %v2618, %v2616
  %v2624 = vsel %vm1263, %v2609, 0
  %2626 = vmatpush.bf16.msra.mxu0 0
  %2627 = vmatpush.bf16.msra.mxu0 0
  %2628 = vmatpush.bf16.msra.mxu0 0
  %2629 = vmatpush.bf16.msra.mxu0 0
  %2630 = vmatpush.bf16.msra.mxu0 0
  %2631 = vmatpush.bf16.msra.mxu0 0
  %2632 = vmatpush.bf16.msra.mxu0 0
  %2633 = vmatpush.bf16.msra.mxu0 %v2619
  %2634 = vmatmul.bf16.gmra.mxu0 %v2624
  %v2635 = vpop.f32.mrf.mxu0
  %v2636 = vadd.f32 0.0, %v2635
  %v2637 = vpop.f32.mrf.mxu0
  %2638 = vdwg.mxu0
  %2639 = vmatpush.bf16.msra.mxu0 0
  %2640 = vmatpush.bf16.msra.mxu0 0
  %2641 = vmatpush.bf16.msra.mxu0 0
  %2642 = vmatpush.bf16.msra.mxu0 0
  %2643 = vmatpush.bf16.msra.mxu0 0
  %2644 = vmatpush.bf16.msra.mxu0 0
  %2645 = vmatpush.bf16.msra.mxu0 0
  %2646 = vmatpush.bf16.msra.mxu0 %v2620
  %2647 = vmatmul.bf16.gmra.mxu0 %v2624
  %v2648 = vpop.f32.mrf.mxu0
  %v2649 = vadd.f32 0.0, %v2648
  %v2650 = vpop.f32.mrf.mxu0
  %2651 = vdwg.mxu0
  %v2652 = vadd.f32 %v2589, %v2636
  %v2653 = vadd.f32 %v2590, %v2649
  %s2654 = scalar_lea.vmem %s13, 28
  %v2655 = vld [vmem:[%s2654] sm:$0xf]
  %v2657 = vsel %vm1263, %v2655, 0
  %2659 = vmatpush.bf16.msra.mxu0 0
  %2660 = vmatpush.bf16.msra.mxu0 0
  %2661 = vmatpush.bf16.msra.mxu0 0
  %2662 = vmatpush.bf16.msra.mxu0 0
  %2663 = vmatpush.bf16.msra.mxu0 0
  %2664 = vmatpush.bf16.msra.mxu0 0
  %2665 = vmatpush.bf16.msra.mxu0 0
  %2666 = vmatpush.bf16.msra.mxu0 %v1210
  %2667 = vmatmul.bf16.gmra.mxu0 %v2657
  %v2668 = vpop.f32.mrf.mxu0
  %v2669 = vadd.f32 0.0, %v2668
  %v2670 = vpop.f32.mrf.mxu0
  %2671 = vdwg.mxu0
  %v2672 = vpack.c.bf16 %v2669, %v2669
  %s2673 = scalar_lea.vmem %s14, 368
  %v2674 = vld [vmem:[%s2673] sm:$0xff]
  %v2675 = vld [vmem:[%s2673 + $0x8] sm:$0xff]
  %v2678 = vunpack.c.l.b16 %v2674
  %v2679 = vunpack.c.h.b16 %v2674
  %v2680 = vunpack.c.l.b16 %v2675
  %v2681 = vunpack.c.h.b16 %v2675
  %v2682 = vpack.c.b16 %v2680, %v2678
  %v2683 = vpack.c.b16 %v2681, %v2679
  %v2687 = vsel %vm1263, %v2672, 0
  %2689 = vmatpush.bf16.msra.mxu0 0
  %2690 = vmatpush.bf16.msra.mxu0 0
  %2691 = vmatpush.bf16.msra.mxu0 0
  %2692 = vmatpush.bf16.msra.mxu0 0
  %2693 = vmatpush.bf16.msra.mxu0 0
  %2694 = vmatpush.bf16.msra.mxu0 0
  %2695 = vmatpush.bf16.msra.mxu0 0
  %2696 = vmatpush.bf16.msra.mxu0 %v2682
  %2697 = vmatmul.bf16.gmra.mxu0 %v2687
  %v2698 = vpop.f32.mrf.mxu0
  %v2699 = vadd.f32 0.0, %v2698
  %v2700 = vpop.f32.mrf.mxu0
  %2701 = vdwg.mxu0
  %2702 = vmatpush.bf16.msra.mxu0 0
  %2703 = vmatpush.bf16.msra.mxu0 0
  %2704 = vmatpush.bf16.msra.mxu0 0
  %2705 = vmatpush.bf16.msra.mxu0 0
  %2706 = vmatpush.bf16.msra.mxu0 0
  %2707 = vmatpush.bf16.msra.mxu0 0
  %2708 = vmatpush.bf16.msra.mxu0 0
  %2709 = vmatpush.bf16.msra.mxu0 %v2683
  %2710 = vmatmul.bf16.gmra.mxu0 %v2687
  %v2711 = vpop.f32.mrf.mxu0
  %v2712 = vadd.f32 0.0, %v2711
  %v2713 = vpop.f32.mrf.mxu0
  %2714 = vdwg.mxu0
  %v2715 = vadd.f32 %v2652, %v2699
  %v2716 = vadd.f32 %v2653, %v2712
  %v2717 = vld [vmem:[%s15] sm:$0x3]
  %v2719 = vperm.slane %v2717, 0
  %v2720 = vperm.slane %v2717, 1
  %v2723 = vadd.f32 %v2715, %v2719
  %v2724 = vadd.f32 %v2716, %v2720
  %v2725 = vmax.f32 %v2723, 0.0
  %v2726 = vmax.f32 %v2724, 0.0
  %v2727 = vpack.c.bf16 %v2725, %v2725
  %v2728 = vpack.c.bf16 %v2726, %v2726
  %v2729 = vld [vmem:[%s16] sm:$0xf]
  %v2730 = vld [vmem:[%s16 + $0x4] sm:$0xf]
  %v2731 = vld [vmem:[%s16 + $0x8] sm:$0xf]
  %v2732 = vld [vmem:[%s16 + $0xc] sm:$0xf]
  %v2733 = vld [vmem:[%s16 + $0x10] sm:$0xf]
  %v2734 = vld [vmem:[%s16 + $0x14] sm:$0xf]
  %v2735 = vld [vmem:[%s16 + $0x18] sm:$0xf]
  %v2736 = vld [vmem:[%s16 + $0x1c] sm:$0xf]
  %v2737 = vld [vmem:[%s16 + $0x20] sm:$0xf]
  %v2738 = vld [vmem:[%s16 + $0x24] sm:$0xf]
  %v2739 = vld [vmem:[%s16 + $0x28] sm:$0xf]
  %v2740 = vld [vmem:[%s16 + $0x2c] sm:$0xf]
  %v2741 = vld [vmem:[%s16 + $0x30] sm:$0xf]
  %v2742 = vld [vmem:[%s16 + $0x34] sm:$0xf]
  %v2743 = vld [vmem:[%s16 + $0x38] sm:$0xf]
  %v2744 = vld [vmem:[%s16 + $0x3c] sm:$0xf]
  %v2745 = vld [vmem:[%s16 + $0x40] sm:$0xf]
  %v2746 = vld [vmem:[%s16 + $0x44] sm:$0xf]
  %v2747 = vld [vmem:[%s16 + $0x48] sm:$0xf]
  %v2748 = vld [vmem:[%s16 + $0x4c] sm:$0xf]
  %v2749 = vld [vmem:[%s16 + $0x50] sm:$0xf]
  %v2750 = vld [vmem:[%s16 + $0x54] sm:$0xf]
  %v2751 = vld [vmem:[%s16 + $0x58] sm:$0xf]
  %v2752 = vld [vmem:[%s16 + $0x5c] sm:$0xf]
  %v2753 = vld [vmem:[%s16 + $0x60] sm:$0xf]
  %v2754 = vld [vmem:[%s16 + $0x64] sm:$0xf]
  %v2755 = vld [vmem:[%s16 + $0x68] sm:$0xf]
  %v2756 = vld [vmem:[%s16 + $0x6c] sm:$0xf]
  %v2757 = vld [vmem:[%s16 + $0x70] sm:$0xf]
  %v2758 = vld [vmem:[%s16 + $0x74] sm:$0xf]
  %v2759 = vld [vmem:[%s16 + $0x78] sm:$0xf]
  %v2760 = vld [vmem:[%s16 + $0x7c] sm:$0xf]
  %v2761 = vld [vmem:[%s17] sm:$0x1]
  %v2763 = vperm.slane %v2761, 0
  %v2797 = vunpack.c.l.b16 %v2729
  %v2798 = vunpack.c.l.b16 %v2730
  %v2799 = vunpack.c.l.b16 %v2731
  %v2800 = vunpack.c.l.b16 %v2732
  %v2801 = vunpack.c.l.b16 %v2733
  %v2802 = vunpack.c.l.b16 %v2734
  %v2803 = vunpack.c.l.b16 %v2735
  %v2804 = vunpack.c.l.b16 %v2736
  %v2805 = vunpack.c.l.b16 %v2737
  %v2806 = vunpack.c.l.b16 %v2738
  %v2807 = vunpack.c.l.b16 %v2739
  %v2808 = vunpack.c.l.b16 %v2740
  %v2809 = vunpack.c.l.b16 %v2741
  %v2810 = vunpack.c.l.b16 %v2742
  %v2811 = vunpack.c.l.b16 %v2743
  %v2812 = vunpack.c.l.b16 %v2744
  %v2813 = vunpack.c.l.b16 %v2745
  %v2814 = vunpack.c.l.b16 %v2746
  %v2815 = vunpack.c.l.b16 %v2747
  %v2816 = vunpack.c.l.b16 %v2748
  %v2817 = vunpack.c.l.b16 %v2749
  %v2818 = vunpack.c.l.b16 %v2750
  %v2819 = vunpack.c.l.b16 %v2751
  %v2820 = vunpack.c.l.b16 %v2752
  %v2821 = vunpack.c.l.b16 %v2753
  %v2822 = vunpack.c.l.b16 %v2754
  %v2823 = vunpack.c.l.b16 %v2755
  %v2824 = vunpack.c.l.b16 %v2756
  %v2825 = vunpack.c.l.b16 %v2757
  %v2826 = vunpack.c.l.b16 %v2758
  %v2827 = vunpack.c.l.b16 %v2759
  %v2828 = vunpack.c.l.b16 %v2760
  %v2829 = vpack.c.b16 %v2798, %v2797
  %v2830 = vpack.c.b16 %v2800, %v2799
  %v2831 = vpack.c.b16 %v2802, %v2801
  %v2832 = vpack.c.b16 %v2804, %v2803
  %v2833 = vpack.c.b16 %v2806, %v2805
  %v2834 = vpack.c.b16 %v2808, %v2807
  %v2835 = vpack.c.b16 %v2810, %v2809
  %v2836 = vpack.c.b16 %v2812, %v2811
  %v2837 = vpack.c.b16 %v2814, %v2813
  %v2838 = vpack.c.b16 %v2816, %v2815
  %v2839 = vpack.c.b16 %v2818, %v2817
  %v2840 = vpack.c.b16 %v2820, %v2819
  %v2841 = vpack.c.b16 %v2822, %v2821
  %v2842 = vpack.c.b16 %v2824, %v2823
  %v2843 = vpack.c.b16 %v2826, %v2825
  %v2844 = vpack.c.b16 %v2828, %v2827
  %2861 = vmatpush.bf16.msra.mxu0 %v2836
  %2862 = vmatpush.bf16.msra.mxu0 %v2835
  %2863 = vmatpush.bf16.msra.mxu0 %v2834
  %2864 = vmatpush.bf16.msra.mxu0 %v2833
  %2865 = vmatpush.bf16.msra.mxu0 %v2832
  %2866 = vmatpush.bf16.msra.mxu0 %v2831
  %2867 = vmatpush.bf16.msra.mxu0 %v2830
  %2868 = vmatpush.bf16.msra.mxu0 %v2829
  %2869 = vmatmul.bf16.gmra.mxu0 %v2727
  %v2870 = vpop.f32.mrf.mxu0
  %v2871 = vadd.f32 %v2763, %v2870
  %v2872 = vpop.f32.mrf.mxu0
  %2873 = vdwg.mxu0
  %2874 = vmatpush.bf16.msra.mxu0 %v2844
  %2875 = vmatpush.bf16.msra.mxu0 %v2843
  %2876 = vmatpush.bf16.msra.mxu0 %v2842
  %2877 = vmatpush.bf16.msra.mxu0 %v2841
  %2878 = vmatpush.bf16.msra.mxu0 %v2840
  %2879 = vmatpush.bf16.msra.mxu0 %v2839
  %2880 = vmatpush.bf16.msra.mxu0 %v2838
  %2881 = vmatpush.bf16.msra.mxu0 %v2837
  %2882 = vmatmul.bf16.gmra.mxu0 %v2728
  %v2883 = vpop.f32.mrf.mxu0
  %v2884 = vadd.f32 %v2871, %v2883
  %v2885 = vpop.f32.mrf.mxu0
  %2886 = vdwg.mxu0
  %2887 = vst [vmem:[%s18] sm:$0xff] %v2884
  // Predicated region
  $region74: #{ppo_multimodal_forward.1} parent=0 // pred_check
    _
  $region75: #{ppo_multimodal_forward.1} parent=0 // pred_check_branch
    %2889 = sbr.rel (0) target = $region77
  $region76: #{ppo_multimodal_forward.1} parent=0 // pred_region
    _
  $region77: #{ppo_multimodal_forward.1} parent=0 // pred_fallthru
    _
  // Predicated region
  $region78: #{ppo_multimodal_forward.1} parent=0 // pred_check
    _
  $region79: #{ppo_multimodal_forward.1} parent=0 // pred_check_branch
    %2891 = sbr.rel (0) target = $region81
  $region80: #{ppo_multimodal_forward.1} parent=0 // pred_region
    _
  $region81: #{ppo_multimodal_forward.1} parent=0 // pred_fallthru
    _

</llo_original>
